<compile_context>
chip_gen: v6e
topology: v6e:2x2x1
jax: 0.10.0
libtpu: 0.0.40
codegen_flags: <defaults>
</compile_context>

<pallas_src>
from functools import partial

import jax
import jax.numpy as jnp
from jax.experimental import pallas as pl
from jax.experimental.pallas import tpu as pltpu

_EPS = 1e-5
_LANES = 128                       # pad channel axes to multiples of 128
_COMPUTE_DTYPE = jnp.bfloat16      # activation/weight dtype at kernel boundary
_ROW_TILE = 1024                   # rows per step for the 1x1 / fused matmuls
_SPATIAL_ROWS = 1024               # target flattened rows per 3x3-conv step
_PADW = 8                          # aligned left/right pad inside conv2 scratch
_VMEM_LIMIT = 32 * 1024 * 1024     # explicit scoped-VMEM budget (v7x-safe)


def _round_up(x, m):
    return (x + m - 1) // m * m


def _pick_spatial_tile(ho, wo, target=_SPATIAL_ROWS):
    """Largest divisor of ho whose flattened tile (d*wo rows) stays <= target."""
    best = 1
    for d in range(1, ho + 1):
        if ho % d == 0 and d * wo <= target:
            best = d
    return best


# ---------------------------------------------------------------------------
# Pallas kernels
# ---------------------------------------------------------------------------
def _conv1x1_kernel(x_ref, w_ref, b_ref, o_ref, *, relu):
    """y = act(x @ w + b); BN scale already folded into w."""
    y = jnp.dot(x_ref[...], w_ref[...], preferred_element_type=jnp.float32)
    y = y + b_ref[...]
    if relu:
        y = jnp.maximum(y, 0.0)
    o_ref[...] = y.astype(o_ref.dtype)


def _conv1x1_res_proj_kernel(h_ref, x_ref, w3_ref, b3_ref, wr_ref, br_ref, o_ref):
    """Fused conv3(1x1)+BN  +  residual projection conv(1x1)  +  ReLU."""
    y = jnp.dot(h_ref[...], w3_ref[...], preferred_element_type=jnp.float32) + b3_ref[...]
    r = jnp.dot(x_ref[...], wr_ref[...], preferred_element_type=jnp.float32) + br_ref[...]
    o_ref[...] = jnp.maximum(y + r, 0.0).astype(o_ref.dtype)


def _conv1x1_res_ident_kernel(h_ref, r_ref, w3_ref, b3_ref, o_ref):
    """Fused conv3(1x1)+BN  +  identity residual add  +  ReLU."""
    y = jnp.dot(h_ref[...], w3_ref[...], preferred_element_type=jnp.float32) + b3_ref[...]
    o_ref[...] = jnp.maximum(y + r_ref[...].astype(jnp.float32), 0.0).astype(o_ref.dtype)


def _conv3x3_kernel(c_ref, up_ref, dn_ref, w_ref, b_ref, o_ref, xpad_ref, *,
                    W, C, tho, Wo, stride, n_row_tiles):
    """3x3 conv (pad=1, optional output stride) + BN(folded) + ReLU.

    Per grid step: one row tile of `tho` output rows of one image.
      c_ref : (1, stride*tho, W, C)   interior input rows of this tile
      up_ref: (1, 1, W, C)            row above the tile (garbage at top edge)
      dn_ref: (1, 1, W, C)            row below the tile (only used, stride==1)
      w_ref : (3, 3*C, Co)            ki-major, (kj, c)-ordered weights (BN folded)
      xpad  : (stride*tho+2, W+2*_PADW, C) f32 VMEM scratch with zero halos
    """
    rows_in = stride * tho
    r = pl.program_id(1)
    f32 = jnp.float32

    # Zero the aligned left/right pad column blocks (read by the kj=0/2 shifts).
    zpad = jnp.zeros((rows_in + 2, _PADW, C), f32)
    xpad_ref[:, pl.ds(0, _PADW), :] = zpad
    xpad_ref[:, pl.ds(W + _PADW, _PADW), :] = zpad

    # Interior rows of this tile (aligned store at sublane offset _PADW).
    xpad_ref[pl.ds(1, rows_in), pl.ds(_PADW, W), :] = c_ref[0].astype(f32)

    # Top halo row: zero at the image top edge.
    up = up_ref[0].astype(f32)
    xpad_ref[pl.ds(0, 1), pl.ds(_PADW, W), :] = jnp.where(r == 0, 0.0, up)

    if stride == 1:
        # Bottom halo row (only needed for stride-1 tiles; zero at bottom edge).
        dn = dn_ref[0].astype(f32)
        xpad_ref[pl.ds(rows_in + 1, 1), pl.ds(_PADW, W), :] = jnp.where(
            r == n_row_tiles - 1, 0.0, dn)

    def win(ki, kj):
        col = _PADW - 1 + kj
        if stride == 1:
            return xpad_ref[pl.ds(ki, tho), pl.ds(col, Wo), :]
        return xpad_ref[pl.ds(ki, tho, stride=stride),
                        pl.ds(col, Wo, stride=stride), :]

    co = o_ref.shape[-1]
    acc = jnp.zeros((tho * Wo, co), f32)
    for ki in range(3):                               # 3 grouped matmuls, K = 3*C
        a = jnp.concatenate([win(ki, kj) for kj in range(3)], axis=-1)
        a = a.reshape(tho * Wo, 3 * C).astype(_COMPUTE_DTYPE)
        acc = acc + jnp.dot(a, w_ref[ki], preferred_element_type=f32)

    y = jnp.maximum(acc + b_ref[...], 0.0)
    o_ref[...] = y.reshape(1, tho, Wo, co).astype(o_ref.dtype)


# ---------------------------------------------------------------------------
# pallas_call wrappers
# ---------------------------------------------------------------------------
def _fused_row_matmul(kernel_fn, row_args, bcast_args, n_out, out_dtype,
                      flops_per_row):
    """Row-tiled fused matmul: row_args tiled along M, bcast_args resident."""
    M = row_args[0].shape[0]
    tm = min(_ROW_TILE, _round_up(M, 8))
    grid = (pl.cdiv(M, tm),)

    in_specs = ([pl.BlockSpec((tm, a.shape[1]), lambda i: (i, 0)) for a in row_args]
                + [pl.BlockSpec(a.shape, lambda i: (0, 0)) for a in bcast_args])
    bytes_acc = int(sum(a.size * a.dtype.itemsize for a in row_args)
                    + sum(a.size * a.dtype.itemsize for a in bcast_args)
                    + M * n_out * jnp.dtype(out_dtype).itemsize)

    return pl.pallas_call(
        kernel_fn,
        out_shape=jax.ShapeDtypeStruct((M, n_out), out_dtype),
        grid=grid,
        in_specs=in_specs,
        out_specs=pl.BlockSpec((tm, n_out), lambda i: (i, 0)),
        compiler_params=pltpu.CompilerParams(
            dimension_semantics=("parallel",),
            vmem_limit_bytes=_VMEM_LIMIT),
        cost_estimate=pl.CostEstimate(flops=int(M * flops_per_row),
                                      transcendentals=0,
                                      bytes_accessed=bytes_acc),
    )(*row_args, *bcast_args)


def _conv3x3_bn_relu(x, w, b, *, stride, out_dtype):
    """x: (N, H, W, C) -> (N, H//stride, W//stride, Co). Row-tiled, halo via
    1-row neighbor blocks; padding + stride handled inside the kernel."""
    N, H, W, C = x.shape
    co = w.shape[-1]
    assert H % stride == 0 and W % stride == 0
    Ho, Wo = H // stride, W // stride
    tho = _pick_spatial_tile(Ho, Wo)
    n_rt = Ho // tho
    rows_in = stride * tho

    kernel = partial(_conv3x3_kernel, W=W, C=C, tho=tho, Wo=Wo,
                     stride=stride, n_row_tiles=n_rt)
    in_specs = [
        pl.BlockSpec((1, rows_in, W, C), lambda n, r: (n, r, 0, 0)),
        pl.BlockSpec((1, 1, W, C),
                     lambda n, r: (n, jnp.maximum(r * rows_in - 1, 0), 0, 0)),
        pl.BlockSpec((1, 1, W, C),
                     lambda n, r: (n, jnp.minimum((r + 1) * rows_in, H - 1), 0, 0)),
        pl.BlockSpec((3, 3 * C, co), lambda n, r: (0, 0, 0)),
        pl.BlockSpec((1, co), lambda n, r: (0, 0)),
    ]
    flops = 2 * N * Ho * Wo * 9 * C * co
    bytes_acc = int(x.size * x.dtype.itemsize + w.size * w.dtype.itemsize
                    + N * Ho * Wo * co * jnp.dtype(out_dtype).itemsize)

    return pl.pallas_call(
        kernel,
        out_shape=jax.ShapeDtypeStruct((N, Ho, Wo, co), out_dtype),
        grid=(N, n_rt),
        in_specs=in_specs,
        out_specs=pl.BlockSpec((1, tho, Wo, co), lambda n, r: (n, r, 0, 0)),
        scratch_shapes=[pltpu.VMEM((rows_in + 2, W + 2 * _PADW, C), jnp.float32)],
        compiler_params=pltpu.CompilerParams(
            dimension_semantics=("parallel", "parallel"),
            vmem_limit_bytes=_VMEM_LIMIT),
        cost_estimate=pl.CostEstimate(flops=int(flops), transcendentals=0,
                                      bytes_accessed=bytes_acc),
    )(x, x, x, w, b)


# ---------------------------------------------------------------------------
# Parameter construction (deterministic synthetic weights; BN folded at init)
# ---------------------------------------------------------------------------
def _fold_bn(w, conv_bias, gamma, beta, mean, var):
    """Fold BN scale into the output-channel columns of w; return (w', b')."""
    scale = gamma / jnp.sqrt(var + _EPS)
    return w * scale, (conv_bias - mean) * scale + beta


def _pad2(w, rows, cols):
    return jnp.pad(w, ((0, rows - w.shape[0]), (0, cols - w.shape[1])))


def _pad1(b, n):
    return jnp.pad(b, (0, n - b.shape[0]))


def _init_block_params(key, cin, cmid, cout, channels):
    cin_p, cmid_p, cout_p = (_round_up(c, _LANES) for c in (cin, cmid, cout))
    ks = jax.random.split(key, 12)

    def w(k, shape, fan_in):
        return jax.random.normal(k, shape, jnp.float32) / jnp.sqrt(fan_in)

    def bn(k, n):
        k1, k2, k3, k4 = jax.random.split(k, 4)
        gamma = 1.0 + 0.1 * jax.random.normal(k1, (n,), jnp.float32)
        beta = 0.1 * jax.random.normal(k2, (n,), jnp.float32)
        mean = 0.1 * jax.random.normal(k3, (n,), jnp.float32)
        var = jnp.abs(jax.random.normal(k4, (n,), jnp.float32)) + 0.5
        return gamma, beta, mean, var

    p = {}
    # conv1: 1x1 cin->cmid (+ BN1 folded into weight columns).
    w1 = w(ks[0], (cin, cmid), cin)
    b1 = 0.1 * jax.random.normal(ks[1], (cmid,), jnp.float32)
    w1, b1 = _fold_bn(w1, b1, *bn(ks[2], cmid))
    p["w1"] = _pad2(w1, cin_p, cmid_p).astype(_COMPUTE_DTYPE)
    p["b1"] = _pad1(b1, cmid_p).reshape(1, cmid_p)

    # conv2: 3x3 cmid->cmid (+ BN2 folded); layout (ki, kj*C + c, co).
    w2 = w(ks[3], (3, 3, cmid, cmid), 9 * cmid)
    b2 = 0.1 * jax.random.normal(ks[4], (cmid,), jnp.float32)
    w2, b2 = _fold_bn(w2, b2, *bn(ks[5], cmid))
    w2 = jnp.pad(w2, ((0, 0), (0, 0), (0, cmid_p - cmid), (0, cmid_p - cmid)))
    p["w2"] = w2.reshape(3, 3 * cmid_p, cmid_p).astype(_COMPUTE_DTYPE)
    p["b2"] = _pad1(b2, cmid_p).reshape(1, cmid_p)

    # conv3: 1x1 cmid->cout (+ BN3 folded).
    w3 = w(ks[6], (cmid, cout), cmid)
    b3 = 0.1 * jax.random.normal(ks[7], (cout,), jnp.float32)
    w3, b3 = _fold_bn(w3, b3, *bn(ks[8], cout))
    p["w3"] = _pad2(w3, cmid_p, cout_p).astype(_COMPUTE_DTYPE)
    p["b3"] = _pad1(b3, cout_p).reshape(1, cout_p)

    if channels:
        # residual projection 1x1 conv cin->cout (no BN in the spec).
        wr = w(ks[9], (cin, cout), cin)
        br = 0.1 * jax.random.normal(ks[10], (cout,), jnp.float32)
        p["wr"] = _pad2(wr, cin_p, cout_p).astype(_COMPUTE_DTYPE)
        p["br"] = _pad1(br, cout_p).reshape(1, cout_p)
    return p


def init_residual_blocks(key, in_ch, mid_ch, out_ch, depth, down=True):
    """Returns (params, configs): params = arrays only (jit-safe pytree),
    configs = static python (channels, down) flags per block."""
    keys = jax.random.split(key, depth)
    params = [_init_block_params(keys[0], in_ch, mid_ch, out_ch, channels=True)]
    configs = [(True, bool(down))]
    for d in range(1, depth):
        params.append(_init_block_params(keys[d], out_ch, mid_ch, out_ch,
                                         channels=False))
        configs.append((False, False))
    return params, configs


# ---------------------------------------------------------------------------
# Forward pass
# ---------------------------------------------------------------------------
def _residual_block_fwd(x_nhwc, p, channels, down):
    stride = 2 if down else 1
    N, H, W, cin_p = x_nhwc.shape
    cmid_p = p["w1"].shape[1]
    cout_p = p["w3"].shape[1]

    # conv1 (1x1) + BN + ReLU  (flat row matmul)
    h = _fused_row_matmul(
        partial(_conv1x1_kernel, relu=True),
        [x_nhwc.reshape(-1, cin_p)], [p["w1"], p["b1"]],
        cmid_p, _COMPUTE_DTYPE, flops_per_row=2 * cin_p * cmid_p,
    ).reshape(N, H, W, cmid_p)

    # conv2 (3x3, pad=1) + BN + ReLU, with the conv3 stride folded in so only
    # the strided outputs are ever computed / written.
    h = _conv3x3_bn_relu(h, p["w2"], p["b2"], stride=stride,
                         out_dtype=_COMPUTE_DTYPE)
    Ho, Wo = h.shape[1], h.shape[2]

    # Residual-path input at the conv3 stride.
    if stride != 1:
        # TODO(synk): fold this subsample into the fused conv3 BlockSpec
        #             (1-row blocks + in-kernel column stride).
        x_res = x_nhwc[:, ::stride, ::stride, :]
    else:
        x_res = x_nhwc

    # conv3 (1x1) + BN fused with residual (projection or identity) + ReLU
    if channels:
        out = _fused_row_matmul(
            _conv1x1_res_proj_kernel,
            [h.reshape(-1, cmid_p), x_res.reshape(-1, cin_p)],
            [p["w3"], p["b3"], p["wr"], p["br"]],
            cout_p, _COMPUTE_DTYPE,
            flops_per_row=2 * (cmid_p + cin_p) * cout_p)
    else:
        out = _fused_row_matmul(
            _conv1x1_res_ident_kernel,
            [h.reshape(-1, cmid_p), x_res.reshape(-1, x_res.shape[-1])],
            [p["w3"], p["b3"]],
            cout_p, _COMPUTE_DTYPE,
            flops_per_row=2 * cmid_p * cout_p)
    return out.reshape(N, Ho, Wo, cout_p)


def make_residual_blocks_fwd(configs, out_channels):
    """configs is static python structure (kept out of the jitted pytree)."""
    configs = tuple((bool(c), bool(d)) for c, d in configs)

    @jax.jit
    def fwd(x_nchw, params):
        x = jnp.transpose(x_nchw, (0, 2, 3, 1))                 # NCHW -> NHWC
        cin = x.shape[-1]
        cin_p = params[0]["w1"].shape[0]
        x = jnp.pad(x, ((0, 0), (0, 0), (0, 0), (0, cin_p - cin)))
        x = x.astype(_COMPUTE_DTYPE)
        for p, (channels, down) in zip(params, configs):
            x = _residual_block_fwd(x, p, channels, down)
        x = x[..., :out_channels].astype(jnp.float32)
        return jnp.transpose(x, (0, 3, 1, 2))                   # NHWC -> NCHW

    return fwd


# ---------------------------------------------------------------------------
if __name__ == "__main__":
    in_ch, mid_ch, out_ch, depth = 4, 4, 8, 2
    batch, spatial = 2, 16

    x = jax.random.normal(jax.random.PRNGKey(0),
                          (batch, in_ch, spatial, spatial), jnp.float32)
    params, configs = init_residual_blocks(jax.random.PRNGKey(1),
                                           in_ch, mid_ch, out_ch, depth,
                                           down=True)

    fwd = make_residual_blocks_fwd(configs, out_ch)
    y = fwd(x, params)
    jax.block_until_ready(y)

    assert y.shape == (batch, out_ch, spatial // 2, spatial // 2), y.shape
    assert bool(jnp.all(y >= 0.0))          # final ReLU
    print("KERNEL_OK")
</pallas_src>

<mosaic_0001>
module attributes {stable_mosaic.version = 11 : i64} {
  func.func @_conv1x1_kernel(%arg0: i32, %arg1: memref<512x128xbf16, #tpu.memory_space<vmem>>, %arg2: memref<128x128xbf16, #tpu.memory_space<vmem>>, %arg3: memref<1x128xf32, #tpu.memory_space<vmem>>, %arg4: memref<512x128xbf16, #tpu.memory_space<vmem>>) attributes {dimension_semantics = [#tpu.dimension_semantics<parallel>], iteration_bounds = array<i64: 1>, scalar_prefetch = 0 : i64, scratch_operands = 0 : i64, tpu.core_type = #tpu.core_type<tc>, window_params = [{transform_indices = @transform_0, window_bounds = array<i64: 512, 128>}, {pipeline_mode = #tpu.pipeline_mode<synchronous>, transform_indices = @transform_1, window_bounds = array<i64: 128, 128>}, {pipeline_mode = #tpu.pipeline_mode<synchronous>, transform_indices = @transform_2, window_bounds = array<i64: 1, 128>}, {transform_indices = @transform_3, window_bounds = array<i64: 512, 128>}]} {
    %c0 = arith.constant 0 : index
    %c0_0 = arith.constant 0 : index
    %0 = vector.load %arg1[%c0, %c0_0] : memref<512x128xbf16, #tpu.memory_space<vmem>>, vector<512x128xbf16>
    %c0_1 = arith.constant 0 : index
    %c0_2 = arith.constant 0 : index
    %1 = vector.load %arg2[%c0_1, %c0_2] : memref<128x128xbf16, #tpu.memory_space<vmem>>, vector<128x128xbf16>
    %cst = arith.constant dense<0.000000e+00> : vector<512x128xf32>
    %2 = tpu.matmul %0, %1, %cst {dimension_numbers = #tpu.dot_dimension_numbers<[1], [0], [0], [1], [0, 0, 1, 1], [], []>} : vector<512x128xbf16>, vector<128x128xbf16>, vector<512x128xf32> -> vector<512x128xf32>
    %c0_3 = arith.constant 0 : index
    %c0_4 = arith.constant 0 : index
    %3 = vector.load %arg3[%c0_3, %c0_4] : memref<1x128xf32, #tpu.memory_space<vmem>>, vector<1x128xf32>
    %4 = vector.broadcast %3 : vector<1x128xf32> to vector<512x128xf32>
    %5 = arith.addf %2, %4 : vector<512x128xf32>
    %cst_5 = arith.constant 0.000000e+00 : f32
    %6 = vector.broadcast %cst_5 : f32 to vector<512x128xf32>
    %7 = arith.maximumf %5, %6 : vector<512x128xf32>
    %8 = arith.truncf %7 : vector<512x128xf32> to vector<512x128xbf16>
    %c0_6 = arith.constant 0 : index
    %c0_7 = arith.constant 0 : index
    %9 = vector.load %arg4[%c0_6, %c0_7] : memref<512x128xbf16, #tpu.memory_space<vmem>>, vector<512x128xbf16>
    tpu.vector_store %arg4[%c0_6, %c0_7], %8 {strides = array<i32>} : memref<512x128xbf16, #tpu.memory_space<vmem>>, vector<512x128xbf16>,
    return
  }
  func.func @transform_0(%arg0: i32) -> (i32, i32) {
    %c0_i32 = arith.constant 0 : i32
    %c0_i32_0 = arith.constant 0 : i32
    return %arg0, %c0_i32 : i32, i32
  }
  func.func @transform_1(%arg0: i32) -> (i32, i32) {
    %c0_i32 = arith.constant 0 : i32
    %c0_i32_0 = arith.constant 0 : i32
    %c0_i32_1 = arith.constant 0 : i32
    return %c0_i32, %c0_i32_0 : i32, i32
  }
  func.func @transform_2(%arg0: i32) -> (i32, i32) {
    %c0_i32 = arith.constant 0 : i32
    %c0_i32_0 = arith.constant 0 : i32
    %c0_i32_1 = arith.constant 0 : i32
    return %c0_i32, %c0_i32_0 : i32, i32
  }
  func.func @transform_3(%arg0: i32) -> (i32, i32) {
    %c0_i32 = arith.constant 0 : i32
    %c0_i32_0 = arith.constant 0 : i32
    return %arg0, %c0_i32 : i32, i32
  }
}

module attributes {stable_mosaic.version = 11 : i64} {
  func.func @_conv3x3_kernel(%arg0: i32, %arg1: i32, %arg2: memref<1x16x16x128xbf16, #tpu.memory_space<vmem>>, %arg3: memref<1x1x16x128xbf16, #tpu.memory_space<vmem>>, %arg4: memref<1x1x16x128xbf16, #tpu.memory_space<vmem>>, %arg5: memref<3x384x128xbf16, #tpu.memory_space<vmem>>, %arg6: memref<1x128xf32, #tpu.memory_space<vmem>>, %arg7: memref<1x8x8x128xbf16, #tpu.memory_space<vmem>>, %arg8: memref<18x32x128xf32, #tpu.memory_space<vmem>>) attributes {dimension_semantics = [#tpu.dimension_semantics<parallel>, #tpu.dimension_semantics<parallel>], iteration_bounds = array<i64: 2, 1>, scalar_prefetch = 0 : i64, scratch_operands = 1 : i64, tpu.core_type = #tpu.core_type<tc>, window_params = [{transform_indices = @transform_0, window_bounds = array<i64: 1, 16, 16, 128>}, {transform_indices = @transform_1, window_bounds = array<i64: 1, 1, 16, 128>}, {transform_indices = @transform_2, window_bounds = array<i64: 1, 1, 16, 128>}, {pipeline_mode = #tpu.pipeline_mode<synchronous>, transform_indices = @transform_3, window_bounds = array<i64: 3, 384, 128>}, {pipeline_mode = #tpu.pipeline_mode<synchronous>, transform_indices = @transform_4, window_bounds = array<i64: 1, 128>}, {transform_indices = @transform_5, window_bounds = array<i64: 1, 8, 8, 128>}]} {
    %cst = arith.constant 0.000000e+00 : f32
    %0 = vector.broadcast %cst : f32 to vector<18x8x128xf32>
    %c0 = arith.constant 0 : index
    %c0_0 = arith.constant 0 : index
    %c0_1 = arith.constant 0 : index
    %1 = vector.load %arg8[%c0, %c0_0, %c0_1] : memref<18x32x128xf32, #tpu.memory_space<vmem>>, vector<18x8x128xf32>
    tpu.vector_store %arg8[%c0, %c0_0, %c0_1], %0 {strides = array<i32>} : memref<18x32x128xf32, #tpu.memory_space<vmem>>, vector<18x8x128xf32>,
    %c0_2 = arith.constant 0 : index
    %c24 = arith.constant 24 : index
    %c0_3 = arith.constant 0 : index
    %2 = vector.load %arg8[%c0_2, %c24, %c0_3] : memref<18x32x128xf32, #tpu.memory_space<vmem>>, vector<18x8x128xf32>
    tpu.vector_store %arg8[%c0_2, %c24, %c0_3], %0 {strides = array<i32>} : memref<18x32x128xf32, #tpu.memory_space<vmem>>, vector<18x8x128xf32>,
    %c0_4 = arith.constant 0 : index
    %c0_5 = arith.constant 0 : index
    %c0_6 = arith.constant 0 : index
    %c0_7 = arith.constant 0 : index
    %3 = vector.load %arg2[%c0_4, %c0_5, %c0_6, %c0_7] : memref<1x16x16x128xbf16, #tpu.memory_space<vmem>>, vector<1x16x16x128xbf16>
    %4 = vector.shape_cast %3 : vector<1x16x16x128xbf16> to vector<16x16x128xbf16>
    %5 = arith.extf %4 : vector<16x16x128xbf16> to vector<16x16x128xf32>
    %c1 = arith.constant 1 : index
    %c8 = arith.constant 8 : index
    %c0_8 = arith.constant 0 : index
    %6 = vector.load %arg8[%c1, %c8, %c0_8] : memref<18x32x128xf32, #tpu.memory_space<vmem>>, vector<16x16x128xf32>
    tpu.vector_store %arg8[%c1, %c8, %c0_8], %5 {strides = array<i32>} : memref<18x32x128xf32, #tpu.memory_space<vmem>>, vector<16x16x128xf32>,
    %c0_9 = arith.constant 0 : index
    %c0_10 = arith.constant 0 : index
    %c0_11 = arith.constant 0 : index
    %c0_12 = arith.constant 0 : index
    %7 = vector.load %arg3[%c0_9, %c0_10, %c0_11, %c0_12] : memref<1x1x16x128xbf16, #tpu.memory_space<vmem>>, vector<1x1x16x128xbf16>
    %8 = vector.shape_cast %7 : vector<1x1x16x128xbf16> to vector<1x16x128xbf16>
    %9 = arith.extf %8 : vector<1x16x128xbf16> to vector<1x16x128xf32>
    %c0_i32 = arith.constant 0 : i32
    %10 = arith.cmpi eq, %arg1, %c0_i32 : i32
    %cst_13 = arith.constant 0.000000e+00 : f32
    %11 = vector.broadcast %cst_13 : f32 to vector<1x16x128xf32>
    %12 = arith.select %10, %11, %9 : vector<1x16x128xf32>
    %c0_14 = arith.constant 0 : index
    %c8_15 = arith.constant 8 : index
    %c0_16 = arith.constant 0 : index
    %13 = vector.load %arg8[%c0_14, %c8_15, %c0_16] : memref<18x32x128xf32, #tpu.memory_space<vmem>>, vector<1x16x128xf32>
    tpu.vector_store %arg8[%c0_14, %c8_15, %c0_16], %12 {strides = array<i32>} : memref<18x32x128xf32, #tpu.memory_space<vmem>>, vector<1x16x128xf32>,
    %cst_17 = arith.constant 0.000000e+00 : f32
    %14 = vector.broadcast %cst_17 : f32 to vector<64x128xf32>
    %c0_18 = arith.constant 0 : index
    %c7 = arith.constant 7 : index
    %c0_19 = arith.constant 0 : index
    %15 = tpu.strided_load %arg8[%c0_18, %c7, %c0_19] {strides = array<i32: 2, 2, 1>} : memref<18x32x128xf32, #tpu.memory_space<vmem>>, vector<8x8x128xf32>
    %c0_20 = arith.constant 0 : index
    %c8_21 = arith.constant 8 : index
    %c0_22 = arith.constant 0 : index
    %16 = tpu.strided_load %arg8[%c0_20, %c8_21, %c0_22] {strides = array<i32: 2, 2, 1>} : memref<18x32x128xf32, #tpu.memory_space<vmem>>, vector<8x8x128xf32>
    %c0_23 = arith.constant 0 : index
    %c9 = arith.constant 9 : index
    %c0_24 = arith.constant 0 : index
    %17 = tpu.strided_load %arg8[%c0_23, %c9, %c0_24] {strides = array<i32: 2, 2, 1>} : memref<18x32x128xf32, #tpu.memory_space<vmem>>, vector<8x8x128xf32>
    %18 = tpu.concatenate %15, %16, %17 in 2 : vector<8x8x128xf32>, vector<8x8x128xf32>, vector<8x8x128xf32> -> vector<8x8x384xf32>
    %19 = vector.shape_cast %18 : vector<8x8x384xf32> to vector<64x384xf32>
    %20 = arith.truncf %19 : vector<64x384xf32> to vector<64x384xbf16>
    %c0_25 = arith.constant 0 : index
    %c0_26 = arith.constant 0 : index
    %c0_27 = arith.constant 0 : index
    %21 = vector.load %arg5[%c0_25, %c0_26, %c0_27] : memref<3x384x128xbf16, #tpu.memory_space<vmem>>, vector<1x384x128xbf16>
    %22 = vector.shape_cast %21 : vector<1x384x128xbf16> to vector<384x128xbf16>
    %cst_28 = arith.constant dense<0.000000e+00> : vector<64x128xf32>
    %23 = tpu.matmul %20, %22, %cst_28 {dimension_numbers = #tpu.dot_dimension_numbers<[1], [0], [0], [1], [0, 0, 1, 1], [], []>} : vector<64x384xbf16>, vector<384x128xbf16>, vector<64x128xf32> -> vector<64x128xf32>
    %24 = arith.addf %14, %23 : vector<64x128xf32>
    %c1_29 = arith.constant 1 : index
    %c7_30 = arith.constant 7 : index
    %c0_31 = arith.constant 0 : index
    %25 = tpu.strided_load %arg8[%c1_29, %c7_30, %c0_31] {strides = array<i32: 2, 2, 1>} : memref<18x32x128xf32, #tpu.memory_space<vmem>>, vector<8x8x128xf32>
    %c1_32 = arith.constant 1 : index
    %c8_33 = arith.constant 8 : index
    %c0_34 = arith.constant 0 : index
    %26 = tpu.strided_load %arg8[%c1_32, %c8_33, %c0_34] {strides = array<i32: 2, 2, 1>} : memref<18x32x128xf32, #tpu.memory_space<vmem>>, vector<8x8x128xf32>
    %c1_35 = arith.constant 1 : index
    %c9_36 = arith.constant 9 : index
    %c0_37 = arith.constant 0 : index
    %27 = tpu.strided_load %arg8[%c1_35, %c9_36, %c0_37] {strides = array<i32: 2, 2, 1>} : memref<18x32x128xf32, #tpu.memory_space<vmem>>, vector<8x8x128xf32>
    %28 = tpu.concatenate %25, %26, %27 in 2 : vector<8x8x128xf32>, vector<8x8x128xf32>, vector<8x8x128xf32> -> vector<8x8x384xf32>
    %29 = vector.shape_cast %28 : vector<8x8x384xf32> to vector<64x384xf32>
    %30 = arith.truncf %29 : vector<64x384xf32> to vector<64x384xbf16>
    %c1_38 = arith.constant 1 : index
    %c0_39 = arith.constant 0 : index
    %c0_40 = arith.constant 0 : index
    %31 = vector.load %arg5[%c1_38, %c0_39, %c0_40] : memref<3x384x128xbf16, #tpu.memory_space<vmem>>, vector<1x384x128xbf16>
    %32 = vector.shape_cast %31 : vector<1x384x128xbf16> to vector<384x128xbf16>
    %cst_41 = arith.constant dense<0.000000e+00> : vector<64x128xf32>
    %33 = tpu.matmul %30, %32, %cst_41 {dimension_numbers = #tpu.dot_dimension_numbers<[1], [0], [0], [1], [0, 0, 1, 1], [], []>} : vector<64x384xbf16>, vector<384x128xbf16>, vector<64x128xf32> -> vector<64x128xf32>
    %34 = arith.addf %24, %33 : vector<64x128xf32>
    %c2 = arith.constant 2 : index
    %c7_42 = arith.constant 7 : index
    %c0_43 = arith.constant 0 : index
    %35 = tpu.strided_load %arg8[%c2, %c7_42, %c0_43] {strides = array<i32: 2, 2, 1>} : memref<18x32x128xf32, #tpu.memory_space<vmem>>, vector<8x8x128xf32>
    %c2_44 = arith.constant 2 : index
    %c8_45 = arith.constant 8 : index
    %c0_46 = arith.constant 0 : index
    %36 = tpu.strided_load %arg8[%c2_44, %c8_45, %c0_46] {strides = array<i32: 2, 2, 1>} : memref<18x32x128xf32, #tpu.memory_space<vmem>>, vector<8x8x128xf32>
    %c2_47 = arith.constant 2 : index
    %c9_48 = arith.constant 9 : index
    %c0_49 = arith.constant 0 : index
    %37 = tpu.strided_load %arg8[%c2_47, %c9_48, %c0_49] {strides = array<i32: 2, 2, 1>} : memref<18x32x128xf32, #tpu.memory_space<vmem>>, vector<8x8x128xf32>
    %38 = tpu.concatenate %35, %36, %37 in 2 : vector<8x8x128xf32>, vector<8x8x128xf32>, vector<8x8x128xf32> -> vector<8x8x384xf32>
    %39 = vector.shape_cast %38 : vector<8x8x384xf32> to vector<64x384xf32>
    %40 = arith.truncf %39 : vector<64x384xf32> to vector<64x384xbf16>
    %c2_50 = arith.constant 2 : index
    %c0_51 = arith.constant 0 : index
    %c0_52 = arith.constant 0 : index
    %41 = vector.load %arg5[%c2_50, %c0_51, %c0_52] : memref<3x384x128xbf16, #tpu.memory_space<vmem>>, vector<1x384x128xbf16>
    %42 = vector.shape_cast %41 : vector<1x384x128xbf16> to vector<384x128xbf16>
    %cst_53 = arith.constant dense<0.000000e+00> : vector<64x128xf32>
    %43 = tpu.matmul %40, %42, %cst_53 {dimension_numbers = #tpu.dot_dimension_numbers<[1], [0], [0], [1], [0, 0, 1, 1], [], []>} : vector<64x384xbf16>, vector<384x128xbf16>, vector<64x128xf32> -> vector<64x128xf32>
    %44 = arith.addf %34, %43 : vector<64x128xf32>
    %c0_54 = arith.constant 0 : index
    %c0_55 = arith.constant 0 : index
    %45 = vector.load %arg6[%c0_54, %c0_55] : memref<1x128xf32, #tpu.memory_space<vmem>>, vector<1x128xf32>
    %46 = vector.broadcast %45 : vector<1x128xf32> to vector<64x128xf32>
    %47 = arith.addf %44, %46 : vector<64x128xf32>
    %cst_56 = arith.constant 0.000000e+00 : f32
    %48 = vector.broadcast %cst_56 : f32 to vector<64x128xf32>
    %49 = arith.maximumf %47, %48 : vector<64x128xf32>
    %50 = vector.shape_cast %49 : vector<64x128xf32> to vector<1x8x8x128xf32>
    %51 = arith.truncf %50 : vector<1x8x8x128xf32> to vector<1x8x8x128xbf16>
    %c0_57 = arith.constant 0 : index
    %c0_58 = arith.constant 0 : index
    %c0_59 = arith.constant 0 : index
    %c0_60 = arith.constant 0 : index
    %52 = vector.load %arg7[%c0_57, %c0_58, %c0_59, %c0_60] : memref<1x8x8x128xbf16, #tpu.memory_space<vmem>>, vector<1x8x8x128xbf16>
    tpu.vector_store %arg7[%c0_57, %c0_58, %c0_59, %c0_60], %51 {strides = array<i32>} : memref<1x8x8x128xbf16, #tpu.memory_space<vmem>>, vector<1x8x8x128xbf16>,
    return
  }
  func.func @transform_0(%arg0: i32, %arg1: i32) -> (i32, i32, i32, i32) {
    %c0_i32 = arith.constant 0 : i32
    %c0_i32_0 = arith.constant 0 : i32
    %c0_i32_1 = arith.constant 0 : i32
    return %arg0, %arg1, %c0_i32, %c0_i32_0 : i32, i32, i32, i32
  }
  func.func @transform_1(%arg0: i32, %arg1: i32) -> (i32, i32, i32, i32) {
    %c16_i32 = arith.constant 16 : i32
    %0 = arith.muli %arg1, %c16_i32 : i32
    %c1_i32 = arith.constant 1 : i32
    %1 = arith.subi %0, %c1_i32 : i32
    %c0_i32 = arith.constant 0 : i32
    %2 = arith.maxsi %1, %c0_i32 : i32
    %c0_i32_0 = arith.constant 0 : i32
    %c0_i32_1 = arith.constant 0 : i32
    %c0_i32_2 = arith.constant 0 : i32
    return %arg0, %2, %c0_i32_0, %c0_i32_1 : i32, i32, i32, i32
  }
  func.func @transform_2(%arg0: i32, %arg1: i32) -> (i32, i32, i32, i32) {
    %c1_i32 = arith.constant 1 : i32
    %0 = arith.addi %arg1, %c1_i32 : i32
    %c16_i32 = arith.constant 16 : i32
    %1 = arith.muli %0, %c16_i32 : i32
    %c15_i32 = arith.constant 15 : i32
    %2 = arith.minsi %1, %c15_i32 : i32
    %c0_i32 = arith.constant 0 : i32
    %c0_i32_0 = arith.constant 0 : i32
    %c0_i32_1 = arith.constant 0 : i32
    return %arg0, %2, %c0_i32, %c0_i32_0 : i32, i32, i32, i32
  }
  func.func @transform_3(%arg0: i32, %arg1: i32) -> (i32, i32, i32) {
    %c0_i32 = arith.constant 0 : i32
    %c0_i32_0 = arith.constant 0 : i32
    %c0_i32_1 = arith.constant 0 : i32
    %c0_i32_2 = arith.constant 0 : i32
    return %c0_i32, %c0_i32_0, %c0_i32_1 : i32, i32, i32
  }
  func.func @transform_4(%arg0: i32, %arg1: i32) -> (i32, i32) {
    %c0_i32 = arith.constant 0 : i32
    %c0_i32_0 = arith.constant 0 : i32
    %c0_i32_1 = arith.constant 0 : i32
    return %c0_i32, %c0_i32_0 : i32, i32
  }
  func.func @transform_5(%arg0: i32, %arg1: i32) -> (i32, i32, i32, i32) {
    %c0_i32 = arith.constant 0 : i32
    %c0_i32_0 = arith.constant 0 : i32
    %c0_i32_1 = arith.constant 0 : i32
    return %arg0, %arg1, %c0_i32, %c0_i32_0 : i32, i32, i32, i32
  }
}

module attributes {stable_mosaic.version = 11 : i64} {
  func.func @_conv1x1_res_proj_kernel(%arg0: i32, %arg1: memref<128x128xbf16, #tpu.memory_space<vmem>>, %arg2: memref<128x128xbf16, #tpu.memory_space<vmem>>, %arg3: memref<128x128xbf16, #tpu.memory_space<vmem>>, %arg4: memref<1x128xf32, #tpu.memory_space<vmem>>, %arg5: memref<128x128xbf16, #tpu.memory_space<vmem>>, %arg6: memref<1x128xf32, #tpu.memory_space<vmem>>, %arg7: memref<128x128xbf16, #tpu.memory_space<vmem>>) attributes {dimension_semantics = [#tpu.dimension_semantics<parallel>], iteration_bounds = array<i64: 1>, scalar_prefetch = 0 : i64, scratch_operands = 0 : i64, tpu.core_type = #tpu.core_type<tc>, window_params = [{transform_indices = @transform_0, window_bounds = array<i64: 128, 128>}, {transform_indices = @transform_1, window_bounds = array<i64: 128, 128>}, {pipeline_mode = #tpu.pipeline_mode<synchronous>, transform_indices = @transform_2, window_bounds = array<i64: 128, 128>}, {pipeline_mode = #tpu.pipeline_mode<synchronous>, transform_indices = @transform_3, window_bounds = array<i64: 1, 128>}, {pipeline_mode = #tpu.pipeline_mode<synchronous>, transform_indices = @transform_4, window_bounds = array<i64: 128, 128>}, {pipeline_mode = #tpu.pipeline_mode<synchronous>, transform_indices = @transform_5, window_bounds = array<i64: 1, 128>}, {transform_indices = @transform_6, window_bounds = array<i64: 128, 128>}]} {
    %c0 = arith.constant 0 : index
    %c0_0 = arith.constant 0 : index
    %0 = vector.load %arg1[%c0, %c0_0] : memref<128x128xbf16, #tpu.memory_space<vmem>>, vector<128x128xbf16>
    %c0_1 = arith.constant 0 : index
    %c0_2 = arith.constant 0 : index
    %1 = vector.load %arg3[%c0_1, %c0_2] : memref<128x128xbf16, #tpu.memory_space<vmem>>, vector<128x128xbf16>
    %cst = arith.constant dense<0.000000e+00> : vector<128x128xf32>
    %2 = tpu.matmul %0, %1, %cst {dimension_numbers = #tpu.dot_dimension_numbers<[1], [0], [0], [1], [0, 0, 1, 1], [], []>} : vector<128x128xbf16>, vector<128x128xbf16>, vector<128x128xf32> -> vector<128x128xf32>
    %c0_3 = arith.constant 0 : index
    %c0_4 = arith.constant 0 : index
    %3 = vector.load %arg4[%c0_3, %c0_4] : memref<1x128xf32, #tpu.memory_space<vmem>>, vector<1x128xf32>
    %4 = vector.broadcast %3 : vector<1x128xf32> to vector<128x128xf32>
    %5 = arith.addf %2, %4 : vector<128x128xf32>
    %c0_5 = arith.constant 0 : index
    %c0_6 = arith.constant 0 : index
    %6 = vector.load %arg2[%c0_5, %c0_6] : memref<128x128xbf16, #tpu.memory_space<vmem>>, vector<128x128xbf16>
    %c0_7 = arith.constant 0 : index
    %c0_8 = arith.constant 0 : index
    %7 = vector.load %arg5[%c0_7, %c0_8] : memref<128x128xbf16, #tpu.memory_space<vmem>>, vector<128x128xbf16>
    %cst_9 = arith.constant dense<0.000000e+00> : vector<128x128xf32>
    %8 = tpu.matmul %6, %7, %cst_9 {dimension_numbers = #tpu.dot_dimension_numbers<[1], [0], [0], [1], [0, 0, 1, 1], [], []>} : vector<128x128xbf16>, vector<128x128xbf16>, vector<128x128xf32> -> vector<128x128xf32>
    %c0_10 = arith.constant 0 : index
    %c0_11 = arith.constant 0 : index
    %9 = vector.load %arg6[%c0_10, %c0_11] : memref<1x128xf32, #tpu.memory_space<vmem>>, vector<1x128xf32>
    %10 = vector.broadcast %9 : vector<1x128xf32> to vector<128x128xf32>
    %11 = arith.addf %8, %10 : vector<128x128xf32>
    %12 = arith.addf %5, %11 : vector<128x128xf32>
    %cst_12 = arith.constant 0.000000e+00 : f32
    %13 = vector.broadcast %cst_12 : f32 to vector<128x128xf32>
    %14 = arith.maximumf %12, %13 : vector<128x128xf32>
    %15 = arith.truncf %14 : vector<128x128xf32> to vector<128x128xbf16>
    %c0_13 = arith.constant 0 : index
    %c0_14 = arith.constant 0 : index
    %16 = vector.load %arg7[%c0_13, %c0_14] : memref<128x128xbf16, #tpu.memory_space<vmem>>, vector<128x128xbf16>
    tpu.vector_store %arg7[%c0_13, %c0_14], %15 {strides = array<i32>} : memref<128x128xbf16, #tpu.memory_space<vmem>>, vector<128x128xbf16>,
    return
  }
  func.func @transform_0(%arg0: i32) -> (i32, i32) {
    %c0_i32 = arith.constant 0 : i32
    %c0_i32_0 = arith.constant 0 : i32
    return %arg0, %c0_i32 : i32, i32
  }
  func.func @transform_1(%arg0: i32) -> (i32, i32) {
    %c0_i32 = arith.constant 0 : i32
    %c0_i32_0 = arith.constant 0 : i32
    return %arg0, %c0_i32 : i32, i32
  }
  func.func @transform_2(%arg0: i32) -> (i32, i32) {
    %c0_i32 = arith.constant 0 : i32
    %c0_i32_0 = arith.constant 0 : i32
    %c0_i32_1 = arith.constant 0 : i32
    return %c0_i32, %c0_i32_0 : i32, i32
  }
  func.func @transform_3(%arg0: i32) -> (i32, i32) {
    %c0_i32 = arith.constant 0 : i32
    %c0_i32_0 = arith.constant 0 : i32
    %c0_i32_1 = arith.constant 0 : i32
    return %c0_i32, %c0_i32_0 : i32, i32
  }
  func.func @transform_4(%arg0: i32) -> (i32, i32) {
    %c0_i32 = arith.constant 0 : i32
    %c0_i32_0 = arith.constant 0 : i32
    %c0_i32_1 = arith.constant 0 : i32
    return %c0_i32, %c0_i32_0 : i32, i32
  }
  func.func @transform_5(%arg0: i32) -> (i32, i32) {
    %c0_i32 = arith.constant 0 : i32
    %c0_i32_0 = arith.constant 0 : i32
    %c0_i32_1 = arith.constant 0 : i32
    return %c0_i32, %c0_i32_0 : i32, i32
  }
  func.func @transform_6(%arg0: i32) -> (i32, i32) {
    %c0_i32 = arith.constant 0 : i32
    %c0_i32_0 = arith.constant 0 : i32
    return %arg0, %c0_i32 : i32, i32
  }
}

module attributes {stable_mosaic.version = 11 : i64} {
  func.func @_conv1x1_kernel(%arg0: i32, %arg1: memref<128x128xbf16, #tpu.memory_space<vmem>>, %arg2: memref<128x128xbf16, #tpu.memory_space<vmem>>, %arg3: memref<1x128xf32, #tpu.memory_space<vmem>>, %arg4: memref<128x128xbf16, #tpu.memory_space<vmem>>) attributes {dimension_semantics = [#tpu.dimension_semantics<parallel>], iteration_bounds = array<i64: 1>, scalar_prefetch = 0 : i64, scratch_operands = 0 : i64, tpu.core_type = #tpu.core_type<tc>, window_params = [{transform_indices = @transform_0, window_bounds = array<i64: 128, 128>}, {pipeline_mode = #tpu.pipeline_mode<synchronous>, transform_indices = @transform_1, window_bounds = array<i64: 128, 128>}, {pipeline_mode = #tpu.pipeline_mode<synchronous>, transform_indices = @transform_2, window_bounds = array<i64: 1, 128>}, {transform_indices = @transform_3, window_bounds = array<i64: 128, 128>}]} {
    %c0 = arith.constant 0 : index
    %c0_0 = arith.constant 0 : index
    %0 = vector.load %arg1[%c0, %c0_0] : memref<128x128xbf16, #tpu.memory_space<vmem>>, vector<128x128xbf16>
    %c0_1 = arith.constant 0 : index
    %c0_2 = arith.constant 0 : index
    %1 = vector.load %arg2[%c0_1, %c0_2] : memref<128x128xbf16, #tpu.memory_space<vmem>>, vector<128x128xbf16>
    %cst = arith.constant dense<0.000000e+00> : vector<128x128xf32>
    %2 = tpu.matmul %0, %1, %cst {dimension_numbers = #tpu.dot_dimension_numbers<[1], [0], [0], [1], [0, 0, 1, 1], [], []>} : vector<128x128xbf16>, vector<128x128xbf16>, vector<128x128xf32> -> vector<128x128xf32>
    %c0_3 = arith.constant 0 : index
    %c0_4 = arith.constant 0 : index
    %3 = vector.load %arg3[%c0_3, %c0_4] : memref<1x128xf32, #tpu.memory_space<vmem>>, vector<1x128xf32>
    %4 = vector.broadcast %3 : vector<1x128xf32> to vector<128x128xf32>
    %5 = arith.addf %2, %4 : vector<128x128xf32>
    %cst_5 = arith.constant 0.000000e+00 : f32
    %6 = vector.broadcast %cst_5 : f32 to vector<128x128xf32>
    %7 = arith.maximumf %5, %6 : vector<128x128xf32>
    %8 = arith.truncf %7 : vector<128x128xf32> to vector<128x128xbf16>
    %c0_6 = arith.constant 0 : index
    %c0_7 = arith.constant 0 : index
    %9 = vector.load %arg4[%c0_6, %c0_7] : memref<128x128xbf16, #tpu.memory_space<vmem>>, vector<128x128xbf16>
    tpu.vector_store %arg4[%c0_6, %c0_7], %8 {strides = array<i32>} : memref<128x128xbf16, #tpu.memory_space<vmem>>, vector<128x128xbf16>,
    return
  }
  func.func @transform_0(%arg0: i32) -> (i32, i32) {
    %c0_i32 = arith.constant 0 : i32
    %c0_i32_0 = arith.constant 0 : i32
    return %arg0, %c0_i32 : i32, i32
  }
  func.func @transform_1(%arg0: i32) -> (i32, i32) {
    %c0_i32 = arith.constant 0 : i32
    %c0_i32_0 = arith.constant 0 : i32
    %c0_i32_1 = arith.constant 0 : i32
    return %c0_i32, %c0_i32_0 : i32, i32
  }
  func.func @transform_2(%arg0: i32) -> (i32, i32) {
    %c0_i32 = arith.constant 0 : i32
    %c0_i32_0 = arith.constant 0 : i32
    %c0_i32_1 = arith.constant 0 : i32
    return %c0_i32, %c0_i32_0 : i32, i32
  }
  func.func @transform_3(%arg0: i32) -> (i32, i32) {
    %c0_i32 = arith.constant 0 : i32
    %c0_i32_0 = arith.constant 0 : i32
    return %arg0, %c0_i32 : i32, i32
  }
}

module attributes {stable_mosaic.version = 11 : i64} {
  func.func @_conv3x3_kernel(%arg0: i32, %arg1: i32, %arg2: memref<1x8x8x128xbf16, #tpu.memory_space<vmem>>, %arg3: memref<1x1x8x128xbf16, #tpu.memory_space<vmem>>, %arg4: memref<1x1x8x128xbf16, #tpu.memory_space<vmem>>, %arg5: memref<3x384x128xbf16, #tpu.memory_space<vmem>>, %arg6: memref<1x128xf32, #tpu.memory_space<vmem>>, %arg7: memref<1x8x8x128xbf16, #tpu.memory_space<vmem>>, %arg8: memref<10x24x128xf32, #tpu.memory_space<vmem>>) attributes {dimension_semantics = [#tpu.dimension_semantics<parallel>, #tpu.dimension_semantics<parallel>], iteration_bounds = array<i64: 2, 1>, scalar_prefetch = 0 : i64, scratch_operands = 1 : i64, tpu.core_type = #tpu.core_type<tc>, window_params = [{transform_indices = @transform_0, window_bounds = array<i64: 1, 8, 8, 128>}, {transform_indices = @transform_1, window_bounds = array<i64: 1, 1, 8, 128>}, {transform_indices = @transform_2, window_bounds = array<i64: 1, 1, 8, 128>}, {pipeline_mode = #tpu.pipeline_mode<synchronous>, transform_indices = @transform_3, window_bounds = array<i64: 3, 384, 128>}, {pipeline_mode = #tpu.pipeline_mode<synchronous>, transform_indices = @transform_4, window_bounds = array<i64: 1, 128>}, {transform_indices = @transform_5, window_bounds = array<i64: 1, 8, 8, 128>}]} {
    %cst = arith.constant 0.000000e+00 : f32
    %0 = vector.broadcast %cst : f32 to vector<10x8x128xf32>
    %c0 = arith.constant 0 : index
    %c0_0 = arith.constant 0 : index
    %c0_1 = arith.constant 0 : index
    %1 = vector.load %arg8[%c0, %c0_0, %c0_1] : memref<10x24x128xf32, #tpu.memory_space<vmem>>, vector<10x8x128xf32>
    tpu.vector_store %arg8[%c0, %c0_0, %c0_1], %0 {strides = array<i32>} : memref<10x24x128xf32, #tpu.memory_space<vmem>>, vector<10x8x128xf32>,
    %c0_2 = arith.constant 0 : index
    %c16 = arith.constant 16 : index
    %c0_3 = arith.constant 0 : index
    %2 = vector.load %arg8[%c0_2, %c16, %c0_3] : memref<10x24x128xf32, #tpu.memory_space<vmem>>, vector<10x8x128xf32>
    tpu.vector_store %arg8[%c0_2, %c16, %c0_3], %0 {strides = array<i32>} : memref<10x24x128xf32, #tpu.memory_space<vmem>>, vector<10x8x128xf32>,
    %c0_4 = arith.constant 0 : index
    %c0_5 = arith.constant 0 : index
    %c0_6 = arith.constant 0 : index
    %c0_7 = arith.constant 0 : index
    %3 = vector.load %arg2[%c0_4, %c0_5, %c0_6, %c0_7] : memref<1x8x8x128xbf16, #tpu.memory_space<vmem>>, vector<1x8x8x128xbf16>
    %4 = vector.shape_cast %3 : vector<1x8x8x128xbf16> to vector<8x8x128xbf16>
    %5 = arith.extf %4 : vector<8x8x128xbf16> to vector<8x8x128xf32>
    %c1 = arith.constant 1 : index
    %c8 = arith.constant 8 : index
    %c0_8 = arith.constant 0 : index
    %6 = vector.load %arg8[%c1, %c8, %c0_8] : memref<10x24x128xf32, #tpu.memory_space<vmem>>, vector<8x8x128xf32>
    tpu.vector_store %arg8[%c1, %c8, %c0_8], %5 {strides = array<i32>} : memref<10x24x128xf32, #tpu.memory_space<vmem>>, vector<8x8x128xf32>,
    %c0_9 = arith.constant 0 : index
    %c0_10 = arith.constant 0 : index
    %c0_11 = arith.constant 0 : index
    %c0_12 = arith.constant 0 : index
    %7 = vector.load %arg3[%c0_9, %c0_10, %c0_11, %c0_12] : memref<1x1x8x128xbf16, #tpu.memory_space<vmem>>, vector<1x1x8x128xbf16>
    %8 = vector.shape_cast %7 : vector<1x1x8x128xbf16> to vector<1x8x128xbf16>
    %9 = arith.extf %8 : vector<1x8x128xbf16> to vector<1x8x128xf32>
    %c0_i32 = arith.constant 0 : i32
    %10 = arith.cmpi eq, %arg1, %c0_i32 : i32
    %cst_13 = arith.constant 0.000000e+00 : f32
    %11 = vector.broadcast %cst_13 : f32 to vector<1x8x128xf32>
    %12 = arith.select %10, %11, %9 : vector<1x8x128xf32>
    %c0_14 = arith.constant 0 : index
    %c8_15 = arith.constant 8 : index
    %c0_16 = arith.constant 0 : index
    %13 = vector.load %arg8[%c0_14, %c8_15, %c0_16] : memref<10x24x128xf32, #tpu.memory_space<vmem>>, vector<1x8x128xf32>
    tpu.vector_store %arg8[%c0_14, %c8_15, %c0_16], %12 {strides = array<i32>} : memref<10x24x128xf32, #tpu.memory_space<vmem>>, vector<1x8x128xf32>,
    %c0_17 = arith.constant 0 : index
    %c0_18 = arith.constant 0 : index
    %c0_19 = arith.constant 0 : index
    %c0_20 = arith.constant 0 : index
    %14 = vector.load %arg4[%c0_17, %c0_18, %c0_19, %c0_20] : memref<1x1x8x128xbf16, #tpu.memory_space<vmem>>, vector<1x1x8x128xbf16>
    %15 = vector.shape_cast %14 : vector<1x1x8x128xbf16> to vector<1x8x128xbf16>
    %16 = arith.extf %15 : vector<1x8x128xbf16> to vector<1x8x128xf32>
    %c0_i32_21 = arith.constant 0 : i32
    %17 = arith.cmpi eq, %arg1, %c0_i32_21 : i32
    %cst_22 = arith.constant 0.000000e+00 : f32
    %18 = vector.broadcast %cst_22 : f32 to vector<1x8x128xf32>
    %19 = arith.select %17, %18, %16 : vector<1x8x128xf32>
    %c9 = arith.constant 9 : index
    %c8_23 = arith.constant 8 : index
    %c0_24 = arith.constant 0 : index
    %20 = vector.load %arg8[%c9, %c8_23, %c0_24] : memref<10x24x128xf32, #tpu.memory_space<vmem>>, vector<1x8x128xf32>
    tpu.vector_store %arg8[%c9, %c8_23, %c0_24], %19 {strides = array<i32>} : memref<10x24x128xf32, #tpu.memory_space<vmem>>, vector<1x8x128xf32>,
    %cst_25 = arith.constant 0.000000e+00 : f32
    %21 = vector.broadcast %cst_25 : f32 to vector<64x128xf32>
    %c0_26 = arith.constant 0 : index
    %c7 = arith.constant 7 : index
    %c0_27 = arith.constant 0 : index
    %22 = vector.load %arg8[%c0_26, %c7, %c0_27] : memref<10x24x128xf32, #tpu.memory_space<vmem>>, vector<8x8x128xf32>
    %c0_28 = arith.constant 0 : index
    %c8_29 = arith.constant 8 : index
    %c0_30 = arith.constant 0 : index
    %23 = vector.load %arg8[%c0_28, %c8_29, %c0_30] : memref<10x24x128xf32, #tpu.memory_space<vmem>>, vector<8x8x128xf32>
    %c0_31 = arith.constant 0 : index
    %c9_32 = arith.constant 9 : index
    %c0_33 = arith.constant 0 : index
    %24 = vector.load %arg8[%c0_31, %c9_32, %c0_33] : memref<10x24x128xf32, #tpu.memory_space<vmem>>, vector<8x8x128xf32>
    %25 = tpu.concatenate %22, %23, %24 in 2 : vector<8x8x128xf32>, vector<8x8x128xf32>, vector<8x8x128xf32> -> vector<8x8x384xf32>
    %26 = vector.shape_cast %25 : vector<8x8x384xf32> to vector<64x384xf32>
    %27 = arith.truncf %26 : vector<64x384xf32> to vector<64x384xbf16>
    %c0_34 = arith.constant 0 : index
    %c0_35 = arith.constant 0 : index
    %c0_36 = arith.constant 0 : index
    %28 = vector.load %arg5[%c0_34, %c0_35, %c0_36] : memref<3x384x128xbf16, #tpu.memory_space<vmem>>, vector<1x384x128xbf16>
    %29 = vector.shape_cast %28 : vector<1x384x128xbf16> to vector<384x128xbf16>
    %cst_37 = arith.constant dense<0.000000e+00> : vector<64x128xf32>
    %30 = tpu.matmul %27, %29, %cst_37 {dimension_numbers = #tpu.dot_dimension_numbers<[1], [0], [0], [1], [0, 0, 1, 1], [], []>} : vector<64x384xbf16>, vector<384x128xbf16>, vector<64x128xf32> -> vector<64x128xf32>
    %31 = arith.addf %21, %30 : vector<64x128xf32>
    %c1_38 = arith.constant 1 : index
    %c7_39 = arith.constant 7 : index
    %c0_40 = arith.constant 0 : index
    %32 = vector.load %arg8[%c1_38, %c7_39, %c0_40] : memref<10x24x128xf32, #tpu.memory_space<vmem>>, vector<8x8x128xf32>
    %c1_41 = arith.constant 1 : index
    %c8_42 = arith.constant 8 : index
    %c0_43 = arith.constant 0 : index
    %33 = vector.load %arg8[%c1_41, %c8_42, %c0_43] : memref<10x24x128xf32, #tpu.memory_space<vmem>>, vector<8x8x128xf32>
    %c1_44 = arith.constant 1 : index
    %c9_45 = arith.constant 9 : index
    %c0_46 = arith.constant 0 : index
    %34 = vector.load %arg8[%c1_44, %c9_45, %c0_46] : memref<10x24x128xf32, #tpu.memory_space<vmem>>, vector<8x8x128xf32>
    %35 = tpu.concatenate %32, %33, %34 in 2 : vector<8x8x128xf32>, vector<8x8x128xf32>, vector<8x8x128xf32> -> vector<8x8x384xf32>
    %36 = vector.shape_cast %35 : vector<8x8x384xf32> to vector<64x384xf32>
    %37 = arith.truncf %36 : vector<64x384xf32> to vector<64x384xbf16>
    %c1_47 = arith.constant 1 : index
    %c0_48 = arith.constant 0 : index
    %c0_49 = arith.constant 0 : index
    %38 = vector.load %arg5[%c1_47, %c0_48, %c0_49] : memref<3x384x128xbf16, #tpu.memory_space<vmem>>, vector<1x384x128xbf16>
    %39 = vector.shape_cast %38 : vector<1x384x128xbf16> to vector<384x128xbf16>
    %cst_50 = arith.constant dense<0.000000e+00> : vector<64x128xf32>
    %40 = tpu.matmul %37, %39, %cst_50 {dimension_numbers = #tpu.dot_dimension_numbers<[1], [0], [0], [1], [0, 0, 1, 1], [], []>} : vector<64x384xbf16>, vector<384x128xbf16>, vector<64x128xf32> -> vector<64x128xf32>
    %41 = arith.addf %31, %40 : vector<64x128xf32>
    %c2 = arith.constant 2 : index
    %c7_51 = arith.constant 7 : index
    %c0_52 = arith.constant 0 : index
    %42 = vector.load %arg8[%c2, %c7_51, %c0_52] : memref<10x24x128xf32, #tpu.memory_space<vmem>>, vector<8x8x128xf32>
    %c2_53 = arith.constant 2 : index
    %c8_54 = arith.constant 8 : index
    %c0_55 = arith.constant 0 : index
    %43 = vector.load %arg8[%c2_53, %c8_54, %c0_55] : memref<10x24x128xf32, #tpu.memory_space<vmem>>, vector<8x8x128xf32>
    %c2_56 = arith.constant 2 : index
    %c9_57 = arith.constant 9 : index
    %c0_58 = arith.constant 0 : index
    %44 = vector.load %arg8[%c2_56, %c9_57, %c0_58] : memref<10x24x128xf32, #tpu.memory_space<vmem>>, vector<8x8x128xf32>
    %45 = tpu.concatenate %42, %43, %44 in 2 : vector<8x8x128xf32>, vector<8x8x128xf32>, vector<8x8x128xf32> -> vector<8x8x384xf32>
    %46 = vector.shape_cast %45 : vector<8x8x384xf32> to vector<64x384xf32>
    %47 = arith.truncf %46 : vector<64x384xf32> to vector<64x384xbf16>
    %c2_59 = arith.constant 2 : index
    %c0_60 = arith.constant 0 : index
    %c0_61 = arith.constant 0 : index
    %48 = vector.load %arg5[%c2_59, %c0_60, %c0_61] : memref<3x384x128xbf16, #tpu.memory_space<vmem>>, vector<1x384x128xbf16>
    %49 = vector.shape_cast %48 : vector<1x384x128xbf16> to vector<384x128xbf16>
    %cst_62 = arith.constant dense<0.000000e+00> : vector<64x128xf32>
    %50 = tpu.matmul %47, %49, %cst_62 {dimension_numbers = #tpu.dot_dimension_numbers<[1], [0], [0], [1], [0, 0, 1, 1], [], []>} : vector<64x384xbf16>, vector<384x128xbf16>, vector<64x128xf32> -> vector<64x128xf32>
    %51 = arith.addf %41, %50 : vector<64x128xf32>
    %c0_63 = arith.constant 0 : index
    %c0_64 = arith.constant 0 : index
    %52 = vector.load %arg6[%c0_63, %c0_64] : memref<1x128xf32, #tpu.memory_space<vmem>>, vector<1x128xf32>
    %53 = vector.broadcast %52 : vector<1x128xf32> to vector<64x128xf32>
    %54 = arith.addf %51, %53 : vector<64x128xf32>
    %cst_65 = arith.constant 0.000000e+00 : f32
    %55 = vector.broadcast %cst_65 : f32 to vector<64x128xf32>
    %56 = arith.maximumf %54, %55 : vector<64x128xf32>
    %57 = vector.shape_cast %56 : vector<64x128xf32> to vector<1x8x8x128xf32>
    %58 = arith.truncf %57 : vector<1x8x8x128xf32> to vector<1x8x8x128xbf16>
    %c0_66 = arith.constant 0 : index
    %c0_67 = arith.constant 0 : index
    %c0_68 = arith.constant 0 : index
    %c0_69 = arith.constant 0 : index
    %59 = vector.load %arg7[%c0_66, %c0_67, %c0_68, %c0_69] : memref<1x8x8x128xbf16, #tpu.memory_space<vmem>>, vector<1x8x8x128xbf16>
    tpu.vector_store %arg7[%c0_66, %c0_67, %c0_68, %c0_69], %58 {strides = array<i32>} : memref<1x8x8x128xbf16, #tpu.memory_space<vmem>>, vector<1x8x8x128xbf16>,
    return
  }
  func.func @transform_0(%arg0: i32, %arg1: i32) -> (i32, i32, i32, i32) {
    %c0_i32 = arith.constant 0 : i32
    %c0_i32_0 = arith.constant 0 : i32
    %c0_i32_1 = arith.constant 0 : i32
    return %arg0, %arg1, %c0_i32, %c0_i32_0 : i32, i32, i32, i32
  }
  func.func @transform_1(%arg0: i32, %arg1: i32) -> (i32, i32, i32, i32) {
    %c8_i32 = arith.constant 8 : i32
    %0 = arith.muli %arg1, %c8_i32 : i32
    %c1_i32 = arith.constant 1 : i32
    %1 = arith.subi %0, %c1_i32 : i32
    %c0_i32 = arith.constant 0 : i32
    %2 = arith.maxsi %1, %c0_i32 : i32
    %c0_i32_0 = arith.constant 0 : i32
    %c0_i32_1 = arith.constant 0 : i32
    %c0_i32_2 = arith.constant 0 : i32
    return %arg0, %2, %c0_i32_0, %c0_i32_1 : i32, i32, i32, i32
  }
  func.func @transform_2(%arg0: i32, %arg1: i32) -> (i32, i32, i32, i32) {
    %c1_i32 = arith.constant 1 : i32
    %0 = arith.addi %arg1, %c1_i32 : i32
    %c8_i32 = arith.constant 8 : i32
    %1 = arith.muli %0, %c8_i32 : i32
    %c7_i32 = arith.constant 7 : i32
    %2 = arith.minsi %1, %c7_i32 : i32
    %c0_i32 = arith.constant 0 : i32
    %c0_i32_0 = arith.constant 0 : i32
    %c0_i32_1 = arith.constant 0 : i32
    return %arg0, %2, %c0_i32, %c0_i32_0 : i32, i32, i32, i32
  }
  func.func @transform_3(%arg0: i32, %arg1: i32) -> (i32, i32, i32) {
    %c0_i32 = arith.constant 0 : i32
    %c0_i32_0 = arith.constant 0 : i32
    %c0_i32_1 = arith.constant 0 : i32
    %c0_i32_2 = arith.constant 0 : i32
    return %c0_i32, %c0_i32_0, %c0_i32_1 : i32, i32, i32
  }
  func.func @transform_4(%arg0: i32, %arg1: i32) -> (i32, i32) {
    %c0_i32 = arith.constant 0 : i32
    %c0_i32_0 = arith.constant 0 : i32
    %c0_i32_1 = arith.constant 0 : i32
    return %c0_i32, %c0_i32_0 : i32, i32
  }
  func.func @transform_5(%arg0: i32, %arg1: i32) -> (i32, i32, i32, i32) {
    %c0_i32 = arith.constant 0 : i32
    %c0_i32_0 = arith.constant 0 : i32
    %c0_i32_1 = arith.constant 0 : i32
    return %arg0, %arg1, %c0_i32, %c0_i32_0 : i32, i32, i32, i32
  }
}

module attributes {stable_mosaic.version = 11 : i64} {
  func.func @_conv1x1_res_ident_kernel(%arg0: i32, %arg1: memref<128x128xbf16, #tpu.memory_space<vmem>>, %arg2: memref<128x128xbf16, #tpu.memory_space<vmem>>, %arg3: memref<128x128xbf16, #tpu.memory_space<vmem>>, %arg4: memref<1x128xf32, #tpu.memory_space<vmem>>, %arg5: memref<128x128xbf16, #tpu.memory_space<vmem>>) attributes {dimension_semantics = [#tpu.dimension_semantics<parallel>], iteration_bounds = array<i64: 1>, scalar_prefetch = 0 : i64, scratch_operands = 0 : i64, tpu.core_type = #tpu.core_type<tc>, window_params = [{transform_indices = @transform_0, window_bounds = array<i64: 128, 128>}, {transform_indices = @transform_1, window_bounds = array<i64: 128, 128>}, {pipeline_mode = #tpu.pipeline_mode<synchronous>, transform_indices = @transform_2, window_bounds = array<i64: 128, 128>}, {pipeline_mode = #tpu.pipeline_mode<synchronous>, transform_indices = @transform_3, window_bounds = array<i64: 1, 128>}, {transform_indices = @transform_4, window_bounds = array<i64: 128, 128>}]} {
    %c0 = arith.constant 0 : index
    %c0_0 = arith.constant 0 : index
    %0 = vector.load %arg1[%c0, %c0_0] : memref<128x128xbf16, #tpu.memory_space<vmem>>, vector<128x128xbf16>
    %c0_1 = arith.constant 0 : index
    %c0_2 = arith.constant 0 : index
    %1 = vector.load %arg3[%c0_1, %c0_2] : memref<128x128xbf16, #tpu.memory_space<vmem>>, vector<128x128xbf16>
    %cst = arith.constant dense<0.000000e+00> : vector<128x128xf32>
    %2 = tpu.matmul %0, %1, %cst {dimension_numbers = #tpu.dot_dimension_numbers<[1], [0], [0], [1], [0, 0, 1, 1], [], []>} : vector<128x128xbf16>, vector<128x128xbf16>, vector<128x128xf32> -> vector<128x128xf32>
    %c0_3 = arith.constant 0 : index
    %c0_4 = arith.constant 0 : index
    %3 = vector.load %arg4[%c0_3, %c0_4] : memref<1x128xf32, #tpu.memory_space<vmem>>, vector<1x128xf32>
    %4 = vector.broadcast %3 : vector<1x128xf32> to vector<128x128xf32>
    %5 = arith.addf %2, %4 : vector<128x128xf32>
    %c0_5 = arith.constant 0 : index
    %c0_6 = arith.constant 0 : index
    %6 = vector.load %arg2[%c0_5, %c0_6] : memref<128x128xbf16, #tpu.memory_space<vmem>>, vector<128x128xbf16>
    %7 = arith.extf %6 : vector<128x128xbf16> to vector<128x128xf32>
    %8 = arith.addf %5, %7 : vector<128x128xf32>
    %cst_7 = arith.constant 0.000000e+00 : f32
    %9 = vector.broadcast %cst_7 : f32 to vector<128x128xf32>
    %10 = arith.maximumf %8, %9 : vector<128x128xf32>
    %11 = arith.truncf %10 : vector<128x128xf32> to vector<128x128xbf16>
    %c0_8 = arith.constant 0 : index
    %c0_9 = arith.constant 0 : index
    %12 = vector.load %arg5[%c0_8, %c0_9] : memref<128x128xbf16, #tpu.memory_space<vmem>>, vector<128x128xbf16>
    tpu.vector_store %arg5[%c0_8, %c0_9], %11 {strides = array<i32>} : memref<128x128xbf16, #tpu.memory_space<vmem>>, vector<128x128xbf16>,
    return
  }
  func.func @transform_0(%arg0: i32) -> (i32, i32) {
    %c0_i32 = arith.constant 0 : i32
    %c0_i32_0 = arith.constant 0 : i32
    return %arg0, %c0_i32 : i32, i32
  }
  func.func @transform_1(%arg0: i32) -> (i32, i32) {
    %c0_i32 = arith.constant 0 : i32
    %c0_i32_0 = arith.constant 0 : i32
    return %arg0, %c0_i32 : i32, i32
  }
  func.func @transform_2(%arg0: i32) -> (i32, i32) {
    %c0_i32 = arith.constant 0 : i32
    %c0_i32_0 = arith.constant 0 : i32
    %c0_i32_1 = arith.constant 0 : i32
    return %c0_i32, %c0_i32_0 : i32, i32
  }
  func.func @transform_3(%arg0: i32) -> (i32, i32) {
    %c0_i32 = arith.constant 0 : i32
    %c0_i32_0 = arith.constant 0 : i32
    %c0_i32_1 = arith.constant 0 : i32
    return %c0_i32, %c0_i32_0 : i32, i32
  }
  func.func @transform_4(%arg0: i32) -> (i32, i32) {
    %c0_i32 = arith.constant 0 : i32
    %c0_i32_0 = arith.constant 0 : i32
    return %arg0, %c0_i32 : i32, i32
  }
}

</mosaic_0001>

<llo_original>
// kernel: fwd.6
$region0: #{fwd.6}
  #allocation0 [shape = 'u32[]', space=smem, size = 0x4, offset = 0x4, fixed_abs, tag = 'smem constant byte address 0x4 - core index']
  #allocation1 [shape = 'u32[144,128]{1,0:T(1,128)}', space=vmem, size = 0x12000, scoped, tag = 'internal scratch']
  %s0 = inlined_call_operand.vmem [shape: bf16[512,128], index: 0, kind: input, shape index: {}]
  %s1 = inlined_call_operand.vmem [shape: bf16[128,128], index: 1, kind: input, shape index: {}]
  %s2 = inlined_call_operand.vmem [shape: f32[1,128], index: 2, kind: input, shape index: {}]
  %s3 = inlined_call_operand.vmem [shape: bf16[512,128], index: 3, kind: output, shape index: {}]
  %s4 = sld [smem:[#allocation0]]
  $region22: #{fwd.6} parent=0
    _
  %s6 = ssub.s32 1, %s4
  %s7 = scalar_select 0, %s6, %s4
  // Predicated region
  $region2: #{fwd.6} parent=0 // pred_check
    _
  $region3: #{fwd.6} parent=0 // pred_check_branch
    %9 = sbr.rel (0) target = $region5
  $region4: #{fwd.6} parent=0 // pred_region
    _
  $region5: #{fwd.6} parent=0 // pred_fallthru
    _
  // Predicated region
  $region6: #{fwd.6} parent=0 // pred_check
    _
  $region7: #{fwd.6} parent=0 // pred_check_branch
    %11 = sbr.rel (0) target = $region9
  $region8: #{fwd.6} parent=0 // pred_region
    _
  $region9: #{fwd.6} parent=0 // pred_fallthru
    _
  // Predicated region
  $region10: #{fwd.6} parent=0 // pred_check
    _
  $region11: #{fwd.6} parent=0 // pred_check_branch
    %13 = sbr.rel (0) target = $region13
  $region12: #{fwd.6} parent=0 // pred_region
    _
  $region13: #{fwd.6} parent=0 // pred_fallthru
    _
  %v15 = vld [vmem:[%s0] sm:$0xf]
  %v16 = vld [vmem:[%s0 + $0x4] sm:$0xf]
  %v17 = vld [vmem:[%s0 + $0x8] sm:$0xf]
  %v18 = vld [vmem:[%s0 + $0xc] sm:$0xf]
  %v19 = vld [vmem:[%s0 + $0x10] sm:$0xf]
  %v20 = vld [vmem:[%s0 + $0x14] sm:$0xf]
  %v21 = vld [vmem:[%s0 + $0x18] sm:$0xf]
  %v22 = vld [vmem:[%s0 + $0x1c] sm:$0xf]
  %v23 = vld [vmem:[%s0 + $0x20] sm:$0xf]
  %v24 = vld [vmem:[%s0 + $0x24] sm:$0xf]
  %v25 = vld [vmem:[%s0 + $0x28] sm:$0xf]
  %v26 = vld [vmem:[%s0 + $0x2c] sm:$0xf]
  %v27 = vld [vmem:[%s0 + $0x30] sm:$0xf]
  %v28 = vld [vmem:[%s0 + $0x34] sm:$0xf]
  %v29 = vld [vmem:[%s0 + $0x38] sm:$0xf]
  %v30 = vld [vmem:[%s0 + $0x3c] sm:$0xf]
  %v31 = vld [vmem:[%s0 + $0x40] sm:$0xf]
  %v32 = vld [vmem:[%s0 + $0x44] sm:$0xf]
  %v33 = vld [vmem:[%s0 + $0x48] sm:$0xf]
  %v34 = vld [vmem:[%s0 + $0x4c] sm:$0xf]
  %v35 = vld [vmem:[%s0 + $0x50] sm:$0xf]
  %v36 = vld [vmem:[%s0 + $0x54] sm:$0xf]
  %v37 = vld [vmem:[%s0 + $0x58] sm:$0xf]
  %v38 = vld [vmem:[%s0 + $0x5c] sm:$0xf]
  %v39 = vld [vmem:[%s0 + $0x60] sm:$0xf]
  %v40 = vld [vmem:[%s0 + $0x64] sm:$0xf]
  %v41 = vld [vmem:[%s0 + $0x68] sm:$0xf]
  %v42 = vld [vmem:[%s0 + $0x6c] sm:$0xf]
  %v43 = vld [vmem:[%s0 + $0x70] sm:$0xf]
  %v44 = vld [vmem:[%s0 + $0x74] sm:$0xf]
  %v45 = vld [vmem:[%s0 + $0x78] sm:$0xf]
  %v46 = vld [vmem:[%s0 + $0x7c] sm:$0xf]
  %v47 = vld [vmem:[%s0 + $0x80] sm:$0xf]
  %v48 = vld [vmem:[%s0 + $0x84] sm:$0xf]
  %v49 = vld [vmem:[%s0 + $0x88] sm:$0xf]
  %v50 = vld [vmem:[%s0 + $0x8c] sm:$0xf]
  %v51 = vld [vmem:[%s0 + $0x90] sm:$0xf]
  %v52 = vld [vmem:[%s0 + $0x94] sm:$0xf]
  %v53 = vld [vmem:[%s0 + $0x98] sm:$0xf]
  %v54 = vld [vmem:[%s0 + $0x9c] sm:$0xf]
  %v55 = vld [vmem:[%s0 + $0xa0] sm:$0xf]
  %v56 = vld [vmem:[%s0 + $0xa4] sm:$0xf]
  %v57 = vld [vmem:[%s0 + $0xa8] sm:$0xf]
  %v58 = vld [vmem:[%s0 + $0xac] sm:$0xf]
  %v59 = vld [vmem:[%s0 + $0xb0] sm:$0xf]
  %v60 = vld [vmem:[%s0 + $0xb4] sm:$0xf]
  %v61 = vld [vmem:[%s0 + $0xb8] sm:$0xf]
  %v62 = vld [vmem:[%s0 + $0xbc] sm:$0xf]
  %v63 = vld [vmem:[%s0 + $0xc0] sm:$0xf]
  %v64 = vld [vmem:[%s0 + $0xc4] sm:$0xf]
  %v65 = vld [vmem:[%s0 + $0xc8] sm:$0xf]
  %v66 = vld [vmem:[%s0 + $0xcc] sm:$0xf]
  %v67 = vld [vmem:[%s0 + $0xd0] sm:$0xf]
  %v68 = vld [vmem:[%s0 + $0xd4] sm:$0xf]
  %v69 = vld [vmem:[%s0 + $0xd8] sm:$0xf]
  %v70 = vld [vmem:[%s0 + $0xdc] sm:$0xf]
  %v71 = vld [vmem:[%s0 + $0xe0] sm:$0xf]
  %v72 = vld [vmem:[%s0 + $0xe4] sm:$0xf]
  %v73 = vld [vmem:[%s0 + $0xe8] sm:$0xf]
  %v74 = vld [vmem:[%s0 + $0xec] sm:$0xf]
  %v75 = vld [vmem:[%s0 + $0xf0] sm:$0xf]
  %v76 = vld [vmem:[%s0 + $0xf4] sm:$0xf]
  %v77 = vld [vmem:[%s0 + $0xf8] sm:$0xf]
  %v78 = vld [vmem:[%s0 + $0xfc] sm:$0xf]
  %v79 = vld [vmem:[%s1] sm:$0xf]
  %v80 = vld [vmem:[%s1 + $0x4] sm:$0xf]
  %v81 = vld [vmem:[%s1 + $0x8] sm:$0xf]
  %v82 = vld [vmem:[%s1 + $0xc] sm:$0xf]
  %v83 = vld [vmem:[%s1 + $0x10] sm:$0xf]
  %v84 = vld [vmem:[%s1 + $0x14] sm:$0xf]
  %v85 = vld [vmem:[%s1 + $0x18] sm:$0xf]
  %v86 = vld [vmem:[%s1 + $0x1c] sm:$0xf]
  %v87 = vld [vmem:[%s1 + $0x20] sm:$0xf]
  %v88 = vld [vmem:[%s1 + $0x24] sm:$0xf]
  %v89 = vld [vmem:[%s1 + $0x28] sm:$0xf]
  %v90 = vld [vmem:[%s1 + $0x2c] sm:$0xf]
  %v91 = vld [vmem:[%s1 + $0x30] sm:$0xf]
  %v92 = vld [vmem:[%s1 + $0x34] sm:$0xf]
  %v93 = vld [vmem:[%s1 + $0x38] sm:$0xf]
  %v94 = vld [vmem:[%s1 + $0x3c] sm:$0xf]
  %v95 = vld [vmem:[%s2] sm:$0x1]
  %v97 = vlaneseq
  %v98 = vshrl.u32 %v97, 7
  %v99 = vsub.s32 0, %v98
  %v100 = vrot.slane %v95, %v99
  %v166 = vunpack.c.l.b16 %v15
  %v167 = vunpack.c.l.b16 %v16
  %v168 = vunpack.c.l.b16 %v17
  %v169 = vunpack.c.l.b16 %v18
  %v170 = vunpack.c.l.b16 %v19
  %v171 = vunpack.c.l.b16 %v20
  %v172 = vunpack.c.l.b16 %v21
  %v173 = vunpack.c.l.b16 %v22
  %v174 = vunpack.c.l.b16 %v23
  %v175 = vunpack.c.l.b16 %v24
  %v176 = vunpack.c.l.b16 %v25
  %v177 = vunpack.c.l.b16 %v26
  %v178 = vunpack.c.l.b16 %v27
  %v179 = vunpack.c.l.b16 %v28
  %v180 = vunpack.c.l.b16 %v29
  %v181 = vunpack.c.l.b16 %v30
  %v182 = vunpack.c.l.b16 %v31
  %v183 = vunpack.c.l.b16 %v32
  %v184 = vunpack.c.l.b16 %v33
  %v185 = vunpack.c.l.b16 %v34
  %v186 = vunpack.c.l.b16 %v35
  %v187 = vunpack.c.l.b16 %v36
  %v188 = vunpack.c.l.b16 %v37
  %v189 = vunpack.c.l.b16 %v38
  %v190 = vunpack.c.l.b16 %v39
  %v191 = vunpack.c.l.b16 %v40
  %v192 = vunpack.c.l.b16 %v41
  %v193 = vunpack.c.l.b16 %v42
  %v194 = vunpack.c.l.b16 %v43
  %v195 = vunpack.c.l.b16 %v44
  %v196 = vunpack.c.l.b16 %v45
  %v197 = vunpack.c.l.b16 %v46
  %v198 = vunpack.c.l.b16 %v47
  %v199 = vunpack.c.l.b16 %v48
  %v200 = vunpack.c.l.b16 %v49
  %v201 = vunpack.c.l.b16 %v50
  %v202 = vunpack.c.l.b16 %v51
  %v203 = vunpack.c.l.b16 %v52
  %v204 = vunpack.c.l.b16 %v53
  %v205 = vunpack.c.l.b16 %v54
  %v206 = vunpack.c.l.b16 %v55
  %v207 = vunpack.c.l.b16 %v56
  %v208 = vunpack.c.l.b16 %v57
  %v209 = vunpack.c.l.b16 %v58
  %v210 = vunpack.c.l.b16 %v59
  %v211 = vunpack.c.l.b16 %v60
  %v212 = vunpack.c.l.b16 %v61
  %v213 = vunpack.c.l.b16 %v62
  %v214 = vunpack.c.l.b16 %v63
  %v215 = vunpack.c.l.b16 %v64
  %v216 = vunpack.c.l.b16 %v65
  %v217 = vunpack.c.l.b16 %v66
  %v218 = vunpack.c.l.b16 %v67
  %v219 = vunpack.c.l.b16 %v68
  %v220 = vunpack.c.l.b16 %v69
  %v221 = vunpack.c.l.b16 %v70
  %v222 = vunpack.c.l.b16 %v71
  %v223 = vunpack.c.l.b16 %v72
  %v224 = vunpack.c.l.b16 %v73
  %v225 = vunpack.c.l.b16 %v74
  %v226 = vunpack.c.l.b16 %v75
  %v227 = vunpack.c.l.b16 %v76
  %v228 = vunpack.c.l.b16 %v77
  %v229 = vunpack.c.l.b16 %v78
  %v230 = vpack.c.b16 %v167, %v166
  %v231 = vpack.c.b16 %v169, %v168
  %v232 = vpack.c.b16 %v171, %v170
  %v233 = vpack.c.b16 %v173, %v172
  %v234 = vpack.c.b16 %v175, %v174
  %v235 = vpack.c.b16 %v177, %v176
  %v236 = vpack.c.b16 %v179, %v178
  %v237 = vpack.c.b16 %v181, %v180
  %v238 = vpack.c.b16 %v183, %v182
  %v239 = vpack.c.b16 %v185, %v184
  %v240 = vpack.c.b16 %v187, %v186
  %v241 = vpack.c.b16 %v189, %v188
  %v242 = vpack.c.b16 %v191, %v190
  %v243 = vpack.c.b16 %v193, %v192
  %v244 = vpack.c.b16 %v195, %v194
  %v245 = vpack.c.b16 %v197, %v196
  %v246 = vpack.c.b16 %v199, %v198
  %v247 = vpack.c.b16 %v201, %v200
  %v248 = vpack.c.b16 %v203, %v202
  %v249 = vpack.c.b16 %v205, %v204
  %v250 = vpack.c.b16 %v207, %v206
  %v251 = vpack.c.b16 %v209, %v208
  %v252 = vpack.c.b16 %v211, %v210
  %v253 = vpack.c.b16 %v213, %v212
  %v254 = vpack.c.b16 %v215, %v214
  %v255 = vpack.c.b16 %v217, %v216
  %v256 = vpack.c.b16 %v219, %v218
  %v257 = vpack.c.b16 %v221, %v220
  %v258 = vpack.c.b16 %v223, %v222
  %v259 = vpack.c.b16 %v225, %v224
  %v260 = vpack.c.b16 %v227, %v226
  %v261 = vpack.c.b16 %v229, %v228
  %v310 = vunpack.c.l.b16 %v79
  %v311 = vunpack.c.l.b16 %v80
  %v312 = vunpack.c.l.b16 %v81
  %v313 = vunpack.c.l.b16 %v82
  %v314 = vunpack.c.l.b16 %v83
  %v315 = vunpack.c.l.b16 %v84
  %v316 = vunpack.c.l.b16 %v85
  %v317 = vunpack.c.l.b16 %v86
  %v318 = vunpack.c.l.b16 %v87
  %v319 = vunpack.c.l.b16 %v88
  %v320 = vunpack.c.l.b16 %v89
  %v321 = vunpack.c.l.b16 %v90
  %v322 = vunpack.c.l.b16 %v91
  %v323 = vunpack.c.l.b16 %v92
  %v324 = vunpack.c.l.b16 %v93
  %v325 = vunpack.c.l.b16 %v94
  %v326 = vpack.c.b16 %v311, %v310
  %v327 = vpack.c.b16 %v313, %v312
  %v328 = vpack.c.b16 %v315, %v314
  %v329 = vpack.c.b16 %v317, %v316
  %v330 = vpack.c.b16 %v319, %v318
  %v331 = vpack.c.b16 %v321, %v320
  %v332 = vpack.c.b16 %v323, %v322
  %v333 = vpack.c.b16 %v325, %v324
  %342 = vmatprep.subr.bf16.mxu0 0
  %343 = vmatpush1.bf16.msra.mxu0 %v333
  %344 = vmatprep.subr.bf16.mxu0 0
  %345 = vmatpush1.bf16.msra.mxu0 %v332
  %346 = vmatprep.subr.bf16.mxu0 0
  %347 = vmatpush1.bf16.msra.mxu0 %v331
  %348 = vmatprep.subr.bf16.mxu0 0
  %349 = vmatpush1.bf16.msra.mxu0 %v330
  %350 = vmatprep.subr.bf16.mxu0 0
  %351 = vmatpush1.bf16.msra.mxu0 %v329
  %352 = vmatprep.subr.bf16.mxu0 0
  %353 = vmatpush1.bf16.msra.mxu0 %v328
  %354 = vmatprep.subr.bf16.mxu0 0
  %355 = vmatpush1.bf16.msra.mxu0 %v327
  %356 = vmatprep.subr.bf16.mxu0 0
  %357 = vmatpush1.bf16.msra.mxu0 %v326
  %358 = vmatprep.subr.bf16.mxu0 0
  %359 = vmatpush2.bf16.msra.mxu0 0
  %360 = vmatprep.subr.bf16.mxu0 0
  %361 = vmatpush2.bf16.msra.mxu0 0
  %362 = vmatprep.subr.bf16.mxu0 0
  %363 = vmatpush2.bf16.msra.mxu0 0
  %364 = vmatprep.subr.bf16.mxu0 0
  %365 = vmatpush2.bf16.msra.mxu0 0
  %366 = vmatprep.subr.bf16.mxu0 0
  %367 = vmatpush2.bf16.msra.mxu0 0
  %368 = vmatprep.subr.bf16.mxu0 0
  %369 = vmatpush2.bf16.msra.mxu0 0
  %370 = vmatprep.subr.bf16.mxu0 0
  %371 = vmatpush2.bf16.msra.mxu0 0
  %372 = vmatprep.subr.bf16.mxu0 0
  %373 = vmatpush2.bf16.msra.mxu0 0
  %374 = vmatprep.mubr.bf16.mxu0 0
  %375 = vmatmul.mubr.bf16.gmra.mxu0 %v230
  %v376 = vpop.f32.mrf.mxu0
  %v377 = vadd.f32 %v100, %v376
  %v378 = vpop.f32.mrf.mxu0
  %v379 = vpop.f32.mrf.mxu0
  %v380 = vadd.f32 %v100, %v379
  %v381 = vpop.f32.mrf.mxu0
  %382 = vmatprep.mubr.bf16.mxu0 0
  %383 = vmatmul.mubr.bf16.gmra.mxu0 %v231
  %v384 = vpop.f32.mrf.mxu0
  %v385 = vadd.f32 %v100, %v384
  %v386 = vpop.f32.mrf.mxu0
  %v387 = vpop.f32.mrf.mxu0
  %v388 = vadd.f32 %v100, %v387
  %v389 = vpop.f32.mrf.mxu0
  %390 = vmatprep.mubr.bf16.mxu0 0
  %391 = vmatmul.mubr.bf16.gmra.mxu0 %v232
  %v392 = vpop.f32.mrf.mxu0
  %v393 = vadd.f32 %v100, %v392
  %v394 = vpop.f32.mrf.mxu0
  %v395 = vpop.f32.mrf.mxu0
  %v396 = vadd.f32 %v100, %v395
  %v397 = vpop.f32.mrf.mxu0
  %398 = vmatprep.mubr.bf16.mxu0 0
  %399 = vmatmul.mubr.bf16.gmra.mxu0 %v233
  %v400 = vpop.f32.mrf.mxu0
  %v401 = vadd.f32 %v100, %v400
  %v402 = vpop.f32.mrf.mxu0
  %v403 = vpop.f32.mrf.mxu0
  %v404 = vadd.f32 %v100, %v403
  %v405 = vpop.f32.mrf.mxu0
  %406 = vmatprep.mubr.bf16.mxu0 0
  %407 = vmatmul.mubr.bf16.gmra.mxu0 %v234
  %v408 = vpop.f32.mrf.mxu0
  %v409 = vadd.f32 %v100, %v408
  %v410 = vpop.f32.mrf.mxu0
  %v411 = vpop.f32.mrf.mxu0
  %v412 = vadd.f32 %v100, %v411
  %v413 = vpop.f32.mrf.mxu0
  %414 = vmatprep.mubr.bf16.mxu0 0
  %415 = vmatmul.mubr.bf16.gmra.mxu0 %v235
  %v416 = vpop.f32.mrf.mxu0
  %v417 = vadd.f32 %v100, %v416
  %v418 = vpop.f32.mrf.mxu0
  %v419 = vpop.f32.mrf.mxu0
  %v420 = vadd.f32 %v100, %v419
  %v421 = vpop.f32.mrf.mxu0
  %422 = vmatprep.mubr.bf16.mxu0 0
  %423 = vmatmul.mubr.bf16.gmra.mxu0 %v236
  %v424 = vpop.f32.mrf.mxu0
  %v425 = vadd.f32 %v100, %v424
  %v426 = vpop.f32.mrf.mxu0
  %v427 = vpop.f32.mrf.mxu0
  %v428 = vadd.f32 %v100, %v427
  %v429 = vpop.f32.mrf.mxu0
  %430 = vmatprep.mubr.bf16.mxu0 0
  %431 = vmatmul.mubr.bf16.gmra.mxu0 %v237
  %v432 = vpop.f32.mrf.mxu0
  %v433 = vadd.f32 %v100, %v432
  %v434 = vpop.f32.mrf.mxu0
  %v435 = vpop.f32.mrf.mxu0
  %v436 = vadd.f32 %v100, %v435
  %v437 = vpop.f32.mrf.mxu0
  %438 = vmatprep.mubr.bf16.mxu0 0
  %439 = vmatmul.mubr.bf16.gmra.mxu0 %v238
  %v440 = vpop.f32.mrf.mxu0
  %v441 = vadd.f32 %v100, %v440
  %v442 = vpop.f32.mrf.mxu0
  %v443 = vpop.f32.mrf.mxu0
  %v444 = vadd.f32 %v100, %v443
  %v445 = vpop.f32.mrf.mxu0
  %446 = vmatprep.mubr.bf16.mxu0 0
  %447 = vmatmul.mubr.bf16.gmra.mxu0 %v239
  %v448 = vpop.f32.mrf.mxu0
  %v449 = vadd.f32 %v100, %v448
  %v450 = vpop.f32.mrf.mxu0
  %v451 = vpop.f32.mrf.mxu0
  %v452 = vadd.f32 %v100, %v451
  %v453 = vpop.f32.mrf.mxu0
  %454 = vmatprep.mubr.bf16.mxu0 0
  %455 = vmatmul.mubr.bf16.gmra.mxu0 %v240
  %v456 = vpop.f32.mrf.mxu0
  %v457 = vadd.f32 %v100, %v456
  %v458 = vpop.f32.mrf.mxu0
  %v459 = vpop.f32.mrf.mxu0
  %v460 = vadd.f32 %v100, %v459
  %v461 = vpop.f32.mrf.mxu0
  %462 = vmatprep.mubr.bf16.mxu0 0
  %463 = vmatmul.mubr.bf16.gmra.mxu0 %v241
  %v464 = vpop.f32.mrf.mxu0
  %v465 = vadd.f32 %v100, %v464
  %v466 = vpop.f32.mrf.mxu0
  %v467 = vpop.f32.mrf.mxu0
  %v468 = vadd.f32 %v100, %v467
  %v469 = vpop.f32.mrf.mxu0
  %470 = vmatprep.mubr.bf16.mxu0 0
  %471 = vmatmul.mubr.bf16.gmra.mxu0 %v242
  %v472 = vpop.f32.mrf.mxu0
  %v473 = vadd.f32 %v100, %v472
  %v474 = vpop.f32.mrf.mxu0
  %v475 = vpop.f32.mrf.mxu0
  %v476 = vadd.f32 %v100, %v475
  %v477 = vpop.f32.mrf.mxu0
  %478 = vmatprep.mubr.bf16.mxu0 0
  %479 = vmatmul.mubr.bf16.gmra.mxu0 %v243
  %v480 = vpop.f32.mrf.mxu0
  %v481 = vadd.f32 %v100, %v480
  %v482 = vpop.f32.mrf.mxu0
  %v483 = vpop.f32.mrf.mxu0
  %v484 = vadd.f32 %v100, %v483
  %v485 = vpop.f32.mrf.mxu0
  %486 = vmatprep.mubr.bf16.mxu0 0
  %487 = vmatmul.mubr.bf16.gmra.mxu0 %v244
  %v488 = vpop.f32.mrf.mxu0
  %v489 = vadd.f32 %v100, %v488
  %v490 = vpop.f32.mrf.mxu0
  %v491 = vpop.f32.mrf.mxu0
  %v492 = vadd.f32 %v100, %v491
  %v493 = vpop.f32.mrf.mxu0
  %494 = vmatprep.mubr.bf16.mxu0 0
  %495 = vmatmul.mubr.bf16.gmra.mxu0 %v245
  %v496 = vpop.f32.mrf.mxu0
  %v497 = vadd.f32 %v100, %v496
  %v498 = vpop.f32.mrf.mxu0
  %v499 = vpop.f32.mrf.mxu0
  %v500 = vadd.f32 %v100, %v499
  %v501 = vpop.f32.mrf.mxu0
  %502 = vmatprep.mubr.bf16.mxu0 0
  %503 = vmatmul.mubr.bf16.gmra.mxu0 %v246
  %v504 = vpop.f32.mrf.mxu0
  %v505 = vadd.f32 %v100, %v504
  %v506 = vpop.f32.mrf.mxu0
  %v507 = vpop.f32.mrf.mxu0
  %v508 = vadd.f32 %v100, %v507
  %v509 = vpop.f32.mrf.mxu0
  %510 = vmatprep.mubr.bf16.mxu0 0
  %511 = vmatmul.mubr.bf16.gmra.mxu0 %v247
  %v512 = vpop.f32.mrf.mxu0
  %v513 = vadd.f32 %v100, %v512
  %v514 = vpop.f32.mrf.mxu0
  %v515 = vpop.f32.mrf.mxu0
  %v516 = vadd.f32 %v100, %v515
  %v517 = vpop.f32.mrf.mxu0
  %518 = vmatprep.mubr.bf16.mxu0 0
  %519 = vmatmul.mubr.bf16.gmra.mxu0 %v248
  %v520 = vpop.f32.mrf.mxu0
  %v521 = vadd.f32 %v100, %v520
  %v522 = vpop.f32.mrf.mxu0
  %v523 = vpop.f32.mrf.mxu0
  %v524 = vadd.f32 %v100, %v523
  %v525 = vpop.f32.mrf.mxu0
  %526 = vmatprep.mubr.bf16.mxu0 0
  %527 = vmatmul.mubr.bf16.gmra.mxu0 %v249
  %v528 = vpop.f32.mrf.mxu0
  %v529 = vadd.f32 %v100, %v528
  %v530 = vpop.f32.mrf.mxu0
  %v531 = vpop.f32.mrf.mxu0
  %v532 = vadd.f32 %v100, %v531
  %v533 = vpop.f32.mrf.mxu0
  %534 = vmatprep.mubr.bf16.mxu0 0
  %535 = vmatmul.mubr.bf16.gmra.mxu0 %v250
  %v536 = vpop.f32.mrf.mxu0
  %v537 = vadd.f32 %v100, %v536
  %v538 = vpop.f32.mrf.mxu0
  %v539 = vpop.f32.mrf.mxu0
  %v540 = vadd.f32 %v100, %v539
  %v541 = vpop.f32.mrf.mxu0
  %542 = vmatprep.mubr.bf16.mxu0 0
  %543 = vmatmul.mubr.bf16.gmra.mxu0 %v251
  %v544 = vpop.f32.mrf.mxu0
  %v545 = vadd.f32 %v100, %v544
  %v546 = vpop.f32.mrf.mxu0
  %v547 = vpop.f32.mrf.mxu0
  %v548 = vadd.f32 %v100, %v547
  %v549 = vpop.f32.mrf.mxu0
  %550 = vmatprep.mubr.bf16.mxu0 0
  %551 = vmatmul.mubr.bf16.gmra.mxu0 %v252
  %v552 = vpop.f32.mrf.mxu0
  %v553 = vadd.f32 %v100, %v552
  %v554 = vpop.f32.mrf.mxu0
  %v555 = vpop.f32.mrf.mxu0
  %v556 = vadd.f32 %v100, %v555
  %v557 = vpop.f32.mrf.mxu0
  %558 = vmatprep.mubr.bf16.mxu0 0
  %559 = vmatmul.mubr.bf16.gmra.mxu0 %v253
  %v560 = vpop.f32.mrf.mxu0
  %v561 = vadd.f32 %v100, %v560
  %v562 = vpop.f32.mrf.mxu0
  %v563 = vpop.f32.mrf.mxu0
  %v564 = vadd.f32 %v100, %v563
  %v565 = vpop.f32.mrf.mxu0
  %566 = vmatprep.mubr.bf16.mxu0 0
  %567 = vmatmul.mubr.bf16.gmra.mxu0 %v254
  %v568 = vpop.f32.mrf.mxu0
  %v569 = vadd.f32 %v100, %v568
  %v570 = vpop.f32.mrf.mxu0
  %v571 = vpop.f32.mrf.mxu0
  %v572 = vadd.f32 %v100, %v571
  %v573 = vpop.f32.mrf.mxu0
  %574 = vmatprep.mubr.bf16.mxu0 0
  %575 = vmatmul.mubr.bf16.gmra.mxu0 %v255
  %v576 = vpop.f32.mrf.mxu0
  %v577 = vadd.f32 %v100, %v576
  %v578 = vpop.f32.mrf.mxu0
  %v579 = vpop.f32.mrf.mxu0
  %v580 = vadd.f32 %v100, %v579
  %v581 = vpop.f32.mrf.mxu0
  %582 = vmatprep.mubr.bf16.mxu0 0
  %583 = vmatmul.mubr.bf16.gmra.mxu0 %v256
  %v584 = vpop.f32.mrf.mxu0
  %v585 = vadd.f32 %v100, %v584
  %v586 = vpop.f32.mrf.mxu0
  %v587 = vpop.f32.mrf.mxu0
  %v588 = vadd.f32 %v100, %v587
  %v589 = vpop.f32.mrf.mxu0
  %590 = vmatprep.mubr.bf16.mxu0 0
  %591 = vmatmul.mubr.bf16.gmra.mxu0 %v257
  %v592 = vpop.f32.mrf.mxu0
  %v593 = vadd.f32 %v100, %v592
  %v594 = vpop.f32.mrf.mxu0
  %v595 = vpop.f32.mrf.mxu0
  %v596 = vadd.f32 %v100, %v595
  %v597 = vpop.f32.mrf.mxu0
  %598 = vmatprep.mubr.bf16.mxu0 0
  %599 = vmatmul.mubr.bf16.gmra.mxu0 %v258
  %v600 = vpop.f32.mrf.mxu0
  %v601 = vadd.f32 %v100, %v600
  %v602 = vpop.f32.mrf.mxu0
  %v603 = vpop.f32.mrf.mxu0
  %v604 = vadd.f32 %v100, %v603
  %v605 = vpop.f32.mrf.mxu0
  %606 = vmatprep.mubr.bf16.mxu0 0
  %607 = vmatmul.mubr.bf16.gmra.mxu0 %v259
  %v608 = vpop.f32.mrf.mxu0
  %v609 = vadd.f32 %v100, %v608
  %v610 = vpop.f32.mrf.mxu0
  %v611 = vpop.f32.mrf.mxu0
  %v612 = vadd.f32 %v100, %v611
  %v613 = vpop.f32.mrf.mxu0
  %614 = vmatprep.mubr.bf16.mxu0 0
  %615 = vmatmul.mubr.bf16.gmra.mxu0 %v260
  %v616 = vpop.f32.mrf.mxu0
  %v617 = vadd.f32 %v100, %v616
  %v618 = vpop.f32.mrf.mxu0
  %v619 = vpop.f32.mrf.mxu0
  %v620 = vadd.f32 %v100, %v619
  %v621 = vpop.f32.mrf.mxu0
  %622 = vmatprep.mubr.bf16.mxu0 0
  %623 = vmatmul.mubr.bf16.gmra.mxu0 %v261
  %v624 = vpop.f32.mrf.mxu0
  %v625 = vadd.f32 %v100, %v624
  %v626 = vpop.f32.mrf.mxu0
  %v627 = vpop.f32.mrf.mxu0
  %v628 = vadd.f32 %v100, %v627
  %v629 = vpop.f32.mrf.mxu0
  %630 = vdwg.mxu0
  %v631 = vmax.f32 %v377, 0.0
  %v632 = vmax.f32 %v380, 0.0
  %v633 = vmax.f32 %v385, 0.0
  %v634 = vmax.f32 %v388, 0.0
  %v635 = vmax.f32 %v393, 0.0
  %v636 = vmax.f32 %v396, 0.0
  %v637 = vmax.f32 %v401, 0.0
  %v638 = vmax.f32 %v404, 0.0
  %v639 = vmax.f32 %v409, 0.0
  %v640 = vmax.f32 %v412, 0.0
  %v641 = vmax.f32 %v417, 0.0
  %v642 = vmax.f32 %v420, 0.0
  %v643 = vmax.f32 %v425, 0.0
  %v644 = vmax.f32 %v428, 0.0
  %v645 = vmax.f32 %v433, 0.0
  %v646 = vmax.f32 %v436, 0.0
  %v647 = vmax.f32 %v441, 0.0
  %v648 = vmax.f32 %v444, 0.0
  %v649 = vmax.f32 %v449, 0.0
  %v650 = vmax.f32 %v452, 0.0
  %v651 = vmax.f32 %v457, 0.0
  %v652 = vmax.f32 %v460, 0.0
  %v653 = vmax.f32 %v465, 0.0
  %v654 = vmax.f32 %v468, 0.0
  %v655 = vmax.f32 %v473, 0.0
  %v656 = vmax.f32 %v476, 0.0
  %v657 = vmax.f32 %v481, 0.0
  %v658 = vmax.f32 %v484, 0.0
  %v659 = vmax.f32 %v489, 0.0
  %v660 = vmax.f32 %v492, 0.0
  %v661 = vmax.f32 %v497, 0.0
  %v662 = vmax.f32 %v500, 0.0
  %v663 = vmax.f32 %v505, 0.0
  %v664 = vmax.f32 %v508, 0.0
  %v665 = vmax.f32 %v513, 0.0
  %v666 = vmax.f32 %v516, 0.0
  %v667 = vmax.f32 %v521, 0.0
  %v668 = vmax.f32 %v524, 0.0
  %v669 = vmax.f32 %v529, 0.0
  %v670 = vmax.f32 %v532, 0.0
  %v671 = vmax.f32 %v537, 0.0
  %v672 = vmax.f32 %v540, 0.0
  %v673 = vmax.f32 %v545, 0.0
  %v674 = vmax.f32 %v548, 0.0
  %v675 = vmax.f32 %v553, 0.0
  %v676 = vmax.f32 %v556, 0.0
  %v677 = vmax.f32 %v561, 0.0
  %v678 = vmax.f32 %v564, 0.0
  %v679 = vmax.f32 %v569, 0.0
  %v680 = vmax.f32 %v572, 0.0
  %v681 = vmax.f32 %v577, 0.0
  %v682 = vmax.f32 %v580, 0.0
  %v683 = vmax.f32 %v585, 0.0
  %v684 = vmax.f32 %v588, 0.0
  %v685 = vmax.f32 %v593, 0.0
  %v686 = vmax.f32 %v596, 0.0
  %v687 = vmax.f32 %v601, 0.0
  %v688 = vmax.f32 %v604, 0.0
  %v689 = vmax.f32 %v609, 0.0
  %v690 = vmax.f32 %v612, 0.0
  %v691 = vmax.f32 %v617, 0.0
  %v692 = vmax.f32 %v620, 0.0
  %v693 = vmax.f32 %v625, 0.0
  %v694 = vmax.f32 %v628, 0.0
  %v695 = vpack.c.bf16 %v632, %v631
  %v696 = vpack.c.bf16 %v634, %v633
  %v697 = vpack.c.bf16 %v636, %v635
  %v698 = vpack.c.bf16 %v638, %v637
  %v699 = vpack.c.bf16 %v640, %v639
  %v700 = vpack.c.bf16 %v642, %v641
  %v701 = vpack.c.bf16 %v644, %v643
  %v702 = vpack.c.bf16 %v646, %v645
  %v703 = vpack.c.bf16 %v648, %v647
  %v704 = vpack.c.bf16 %v650, %v649
  %v705 = vpack.c.bf16 %v652, %v651
  %v706 = vpack.c.bf16 %v654, %v653
  %v707 = vpack.c.bf16 %v656, %v655
  %v708 = vpack.c.bf16 %v658, %v657
  %v709 = vpack.c.bf16 %v660, %v659
  %v710 = vpack.c.bf16 %v662, %v661
  %v711 = vpack.c.bf16 %v664, %v663
  %v712 = vpack.c.bf16 %v666, %v665
  %v713 = vpack.c.bf16 %v668, %v667
  %v714 = vpack.c.bf16 %v670, %v669
  %v715 = vpack.c.bf16 %v672, %v671
  %v716 = vpack.c.bf16 %v674, %v673
  %v717 = vpack.c.bf16 %v676, %v675
  %v718 = vpack.c.bf16 %v678, %v677
  %v719 = vpack.c.bf16 %v680, %v679
  %v720 = vpack.c.bf16 %v682, %v681
  %v721 = vpack.c.bf16 %v684, %v683
  %v722 = vpack.c.bf16 %v686, %v685
  %v723 = vpack.c.bf16 %v688, %v687
  %v724 = vpack.c.bf16 %v690, %v689
  %v725 = vpack.c.bf16 %v692, %v691
  %v726 = vpack.c.bf16 %v694, %v693
  %v759 = vunpack.c.l.b16 %v695
  %v760 = vunpack.c.h.b16 %v695
  %v761 = vunpack.c.l.b16 %v696
  %v762 = vunpack.c.h.b16 %v696
  %v763 = vunpack.c.l.b16 %v697
  %v764 = vunpack.c.h.b16 %v697
  %v765 = vunpack.c.l.b16 %v698
  %v766 = vunpack.c.h.b16 %v698
  %v767 = vunpack.c.l.b16 %v699
  %v768 = vunpack.c.h.b16 %v699
  %v769 = vunpack.c.l.b16 %v700
  %v770 = vunpack.c.h.b16 %v700
  %v771 = vunpack.c.l.b16 %v701
  %v772 = vunpack.c.h.b16 %v701
  %v773 = vunpack.c.l.b16 %v702
  %v774 = vunpack.c.h.b16 %v702
  %v775 = vunpack.c.l.b16 %v703
  %v776 = vunpack.c.h.b16 %v703
  %v777 = vunpack.c.l.b16 %v704
  %v778 = vunpack.c.h.b16 %v704
  %v779 = vunpack.c.l.b16 %v705
  %v780 = vunpack.c.h.b16 %v705
  %v781 = vunpack.c.l.b16 %v706
  %v782 = vunpack.c.h.b16 %v706
  %v783 = vunpack.c.l.b16 %v707
  %v784 = vunpack.c.h.b16 %v707
  %v785 = vunpack.c.l.b16 %v708
  %v786 = vunpack.c.h.b16 %v708
  %v787 = vunpack.c.l.b16 %v709
  %v788 = vunpack.c.h.b16 %v709
  %v789 = vunpack.c.l.b16 %v710
  %v790 = vunpack.c.h.b16 %v710
  %v791 = vunpack.c.l.b16 %v711
  %v792 = vunpack.c.h.b16 %v711
  %v793 = vunpack.c.l.b16 %v712
  %v794 = vunpack.c.h.b16 %v712
  %v795 = vunpack.c.l.b16 %v713
  %v796 = vunpack.c.h.b16 %v713
  %v797 = vunpack.c.l.b16 %v714
  %v798 = vunpack.c.h.b16 %v714
  %v799 = vunpack.c.l.b16 %v715
  %v800 = vunpack.c.h.b16 %v715
  %v801 = vunpack.c.l.b16 %v716
  %v802 = vunpack.c.h.b16 %v716
  %v803 = vunpack.c.l.b16 %v717
  %v804 = vunpack.c.h.b16 %v717
  %v805 = vunpack.c.l.b16 %v718
  %v806 = vunpack.c.h.b16 %v718
  %v807 = vunpack.c.l.b16 %v719
  %v808 = vunpack.c.h.b16 %v719
  %v809 = vunpack.c.l.b16 %v720
  %v810 = vunpack.c.h.b16 %v720
  %v811 = vunpack.c.l.b16 %v721
  %v812 = vunpack.c.h.b16 %v721
  %v813 = vunpack.c.l.b16 %v722
  %v814 = vunpack.c.h.b16 %v722
  %v815 = vunpack.c.l.b16 %v723
  %v816 = vunpack.c.h.b16 %v723
  %v817 = vunpack.c.l.b16 %v724
  %v818 = vunpack.c.h.b16 %v724
  %v819 = vunpack.c.l.b16 %v725
  %v820 = vunpack.c.h.b16 %v725
  %v821 = vunpack.c.l.b16 %v726
  %v822 = vunpack.c.h.b16 %v726
  %v823 = vpack.c.b16 %v759, %v759
  %v824 = vpack.c.b16 %v760, %v760
  %v825 = vpack.c.b16 %v761, %v761
  %v826 = vpack.c.b16 %v762, %v762
  %v827 = vpack.c.b16 %v763, %v763
  %v828 = vpack.c.b16 %v764, %v764
  %v829 = vpack.c.b16 %v765, %v765
  %v830 = vpack.c.b16 %v766, %v766
  %v831 = vpack.c.b16 %v767, %v767
  %v832 = vpack.c.b16 %v768, %v768
  %v833 = vpack.c.b16 %v769, %v769
  %v834 = vpack.c.b16 %v770, %v770
  %v835 = vpack.c.b16 %v771, %v771
  %v836 = vpack.c.b16 %v772, %v772
  %v837 = vpack.c.b16 %v773, %v773
  %v838 = vpack.c.b16 %v774, %v774
  %v839 = vpack.c.b16 %v775, %v775
  %v840 = vpack.c.b16 %v776, %v776
  %v841 = vpack.c.b16 %v777, %v777
  %v842 = vpack.c.b16 %v778, %v778
  %v843 = vpack.c.b16 %v779, %v779
  %v844 = vpack.c.b16 %v780, %v780
  %v845 = vpack.c.b16 %v781, %v781
  %v846 = vpack.c.b16 %v782, %v782
  %v847 = vpack.c.b16 %v783, %v783
  %v848 = vpack.c.b16 %v784, %v784
  %v849 = vpack.c.b16 %v785, %v785
  %v850 = vpack.c.b16 %v786, %v786
  %v851 = vpack.c.b16 %v787, %v787
  %v852 = vpack.c.b16 %v788, %v788
  %v853 = vpack.c.b16 %v789, %v789
  %v854 = vpack.c.b16 %v790, %v790
  %v855 = vpack.c.b16 %v791, %v791
  %v856 = vpack.c.b16 %v792, %v792
  %v857 = vpack.c.b16 %v793, %v793
  %v858 = vpack.c.b16 %v794, %v794
  %v859 = vpack.c.b16 %v795, %v795
  %v860 = vpack.c.b16 %v796, %v796
  %v861 = vpack.c.b16 %v797, %v797
  %v862 = vpack.c.b16 %v798, %v798
  %v863 = vpack.c.b16 %v799, %v799
  %v864 = vpack.c.b16 %v800, %v800
  %v865 = vpack.c.b16 %v801, %v801
  %v866 = vpack.c.b16 %v802, %v802
  %v867 = vpack.c.b16 %v803, %v803
  %v868 = vpack.c.b16 %v804, %v804
  %v869 = vpack.c.b16 %v805, %v805
  %v870 = vpack.c.b16 %v806, %v806
  %v871 = vpack.c.b16 %v807, %v807
  %v872 = vpack.c.b16 %v808, %v808
  %v873 = vpack.c.b16 %v809, %v809
  %v874 = vpack.c.b16 %v810, %v810
  %v875 = vpack.c.b16 %v811, %v811
  %v876 = vpack.c.b16 %v812, %v812
  %v877 = vpack.c.b16 %v813, %v813
  %v878 = vpack.c.b16 %v814, %v814
  %v879 = vpack.c.b16 %v815, %v815
  %v880 = vpack.c.b16 %v816, %v816
  %v881 = vpack.c.b16 %v817, %v817
  %v882 = vpack.c.b16 %v818, %v818
  %v883 = vpack.c.b16 %v819, %v819
  %v884 = vpack.c.b16 %v820, %v820
  %v885 = vpack.c.b16 %v821, %v821
  %v886 = vpack.c.b16 %v822, %v822
  %951 = vst [vmem:[%s3] sm:$0xf] %v823
  %952 = vst [vmem:[%s3 + $0x4] sm:$0xf] %v824
  %953 = vst [vmem:[%s3 + $0x8] sm:$0xf] %v825
  %954 = vst [vmem:[%s3 + $0xc] sm:$0xf] %v826
  %955 = vst [vmem:[%s3 + $0x10] sm:$0xf] %v827
  %956 = vst [vmem:[%s3 + $0x14] sm:$0xf] %v828
  %957 = vst [vmem:[%s3 + $0x18] sm:$0xf] %v829
  %958 = vst [vmem:[%s3 + $0x1c] sm:$0xf] %v830
  %959 = vst [vmem:[%s3 + $0x20] sm:$0xf] %v831
  %960 = vst [vmem:[%s3 + $0x24] sm:$0xf] %v832
  %961 = vst [vmem:[%s3 + $0x28] sm:$0xf] %v833
  %962 = vst [vmem:[%s3 + $0x2c] sm:$0xf] %v834
  %963 = vst [vmem:[%s3 + $0x30] sm:$0xf] %v835
  %964 = vst [vmem:[%s3 + $0x34] sm:$0xf] %v836
  %965 = vst [vmem:[%s3 + $0x38] sm:$0xf] %v837
  %966 = vst [vmem:[%s3 + $0x3c] sm:$0xf] %v838
  %967 = vst [vmem:[%s3 + $0x40] sm:$0xf] %v839
  %968 = vst [vmem:[%s3 + $0x44] sm:$0xf] %v840
  %969 = vst [vmem:[%s3 + $0x48] sm:$0xf] %v841
  %970 = vst [vmem:[%s3 + $0x4c] sm:$0xf] %v842
  %971 = vst [vmem:[%s3 + $0x50] sm:$0xf] %v843
  %972 = vst [vmem:[%s3 + $0x54] sm:$0xf] %v844
  %973 = vst [vmem:[%s3 + $0x58] sm:$0xf] %v845
  %974 = vst [vmem:[%s3 + $0x5c] sm:$0xf] %v846
  %975 = vst [vmem:[%s3 + $0x60] sm:$0xf] %v847
  %976 = vst [vmem:[%s3 + $0x64] sm:$0xf] %v848
  %977 = vst [vmem:[%s3 + $0x68] sm:$0xf] %v849
  %978 = vst [vmem:[%s3 + $0x6c] sm:$0xf] %v850
  %979 = vst [vmem:[%s3 + $0x70] sm:$0xf] %v851
  %980 = vst [vmem:[%s3 + $0x74] sm:$0xf] %v852
  %981 = vst [vmem:[%s3 + $0x78] sm:$0xf] %v853
  %982 = vst [vmem:[%s3 + $0x7c] sm:$0xf] %v854
  %983 = vst [vmem:[%s3 + $0x80] sm:$0xf] %v855
  %984 = vst [vmem:[%s3 + $0x84] sm:$0xf] %v856
  %985 = vst [vmem:[%s3 + $0x88] sm:$0xf] %v857
  %986 = vst [vmem:[%s3 + $0x8c] sm:$0xf] %v858
  %987 = vst [vmem:[%s3 + $0x90] sm:$0xf] %v859
  %988 = vst [vmem:[%s3 + $0x94] sm:$0xf] %v860
  %989 = vst [vmem:[%s3 + $0x98] sm:$0xf] %v861
  %990 = vst [vmem:[%s3 + $0x9c] sm:$0xf] %v862
  %991 = vst [vmem:[%s3 + $0xa0] sm:$0xf] %v863
  %992 = vst [vmem:[%s3 + $0xa4] sm:$0xf] %v864
  %993 = vst [vmem:[%s3 + $0xa8] sm:$0xf] %v865
  %994 = vst [vmem:[%s3 + $0xac] sm:$0xf] %v866
  %995 = vst [vmem:[%s3 + $0xb0] sm:$0xf] %v867
  %996 = vst [vmem:[%s3 + $0xb4] sm:$0xf] %v868
  %997 = vst [vmem:[%s3 + $0xb8] sm:$0xf] %v869
  %998 = vst [vmem:[%s3 + $0xbc] sm:$0xf] %v870
  %999 = vst [vmem:[%s3 + $0xc0] sm:$0xf] %v871
  %1000 = vst [vmem:[%s3 + $0xc4] sm:$0xf] %v872
  %1001 = vst [vmem:[%s3 + $0xc8] sm:$0xf] %v873
  %1002 = vst [vmem:[%s3 + $0xcc] sm:$0xf] %v874
  %1003 = vst [vmem:[%s3 + $0xd0] sm:$0xf] %v875
  %1004 = vst [vmem:[%s3 + $0xd4] sm:$0xf] %v876
  %1005 = vst [vmem:[%s3 + $0xd8] sm:$0xf] %v877
  %1006 = vst [vmem:[%s3 + $0xdc] sm:$0xf] %v878
  %1007 = vst [vmem:[%s3 + $0xe0] sm:$0xf] %v879
  %1008 = vst [vmem:[%s3 + $0xe4] sm:$0xf] %v880
  %1009 = vst [vmem:[%s3 + $0xe8] sm:$0xf] %v881
  %1010 = vst [vmem:[%s3 + $0xec] sm:$0xf] %v882
  %1011 = vst [vmem:[%s3 + $0xf0] sm:$0xf] %v883
  %1012 = vst [vmem:[%s3 + $0xf4] sm:$0xf] %v884
  %1013 = vst [vmem:[%s3 + $0xf8] sm:$0xf] %v885
  %1014 = vst [vmem:[%s3 + $0xfc] sm:$0xf] %v886
  // Predicated region
  $region14: #{fwd.6} parent=0 // pred_check
    _
  $region15: #{fwd.6} parent=0 // pred_check_branch
    %1016 = sbr.rel (0) target = $region17
  $region16: #{fwd.6} parent=0 // pred_region
    _
  $region17: #{fwd.6} parent=0 // pred_fallthru
    _
  // Predicated region
  $region18: #{fwd.6} parent=0 // pred_check
    _
  $region19: #{fwd.6} parent=0 // pred_check_branch
    %1018 = sbr.rel (0) target = $region21
  $region20: #{fwd.6} parent=0 // pred_region
    _
  $region21: #{fwd.6} parent=0 // pred_fallthru
    _

// kernel: fwd.8
$region0: #{fwd.8}
  #allocation0 [shape = 'u32[]', space=smem, size = 0x4, offset = 0x4, fixed_abs, tag = 'smem constant byte address 0x4 - core index']
  #allocation1 [shape = 'u32[144,128]{1,0:T(1,128)}', space=vmem, size = 0x12000, scoped, tag = 'internal scratch']
  %s0 = inlined_call_operand.vmem [shape: bf16[128,128], index: 0, kind: input, shape index: {}]
  %s1 = inlined_call_operand.vmem [shape: bf16[128,128], index: 1, kind: input, shape index: {}]
  %s2 = inlined_call_operand.vmem [shape: bf16[128,128], index: 2, kind: input, shape index: {}]
  %s3 = inlined_call_operand.vmem [shape: f32[1,128], index: 3, kind: input, shape index: {}]
  %s4 = inlined_call_operand.vmem [shape: bf16[128,128], index: 4, kind: input, shape index: {}]
  %s5 = inlined_call_operand.vmem [shape: f32[1,128], index: 5, kind: input, shape index: {}]
  %s6 = inlined_call_operand.vmem [shape: bf16[128,128], index: 6, kind: output, shape index: {}]
  %s7 = sld [smem:[#allocation0]]
  $region34: #{fwd.8} parent=0
    _
  %s9 = ssub.s32 1, %s7
  %s10 = scalar_select 0, %s9, %s7
  // Predicated region
  $region2: #{fwd.8} parent=0 // pred_check
    _
  $region3: #{fwd.8} parent=0 // pred_check_branch
    %12 = sbr.rel (0) target = $region5
  $region4: #{fwd.8} parent=0 // pred_region
    _
  $region5: #{fwd.8} parent=0 // pred_fallthru
    _
  // Predicated region
  $region6: #{fwd.8} parent=0 // pred_check
    _
  $region7: #{fwd.8} parent=0 // pred_check_branch
    %14 = sbr.rel (0) target = $region9
  $region8: #{fwd.8} parent=0 // pred_region
    _
  $region9: #{fwd.8} parent=0 // pred_fallthru
    _
  // Predicated region
  $region10: #{fwd.8} parent=0 // pred_check
    _
  $region11: #{fwd.8} parent=0 // pred_check_branch
    %16 = sbr.rel (0) target = $region13
  $region12: #{fwd.8} parent=0 // pred_region
    _
  $region13: #{fwd.8} parent=0 // pred_fallthru
    _
  // Predicated region
  $region14: #{fwd.8} parent=0 // pred_check
    _
  $region15: #{fwd.8} parent=0 // pred_check_branch
    %18 = sbr.rel (0) target = $region17
  $region16: #{fwd.8} parent=0 // pred_region
    _
  $region17: #{fwd.8} parent=0 // pred_fallthru
    _
  // Predicated region
  $region18: #{fwd.8} parent=0 // pred_check
    _
  $region19: #{fwd.8} parent=0 // pred_check_branch
    %20 = sbr.rel (0) target = $region21
  $region20: #{fwd.8} parent=0 // pred_region
    _
  $region21: #{fwd.8} parent=0 // pred_fallthru
    _
  // Predicated region
  $region22: #{fwd.8} parent=0 // pred_check
    _
  $region23: #{fwd.8} parent=0 // pred_check_branch
    %22 = sbr.rel (0) target = $region25
  $region24: #{fwd.8} parent=0 // pred_region
    _
  $region25: #{fwd.8} parent=0 // pred_fallthru
    _
  %v24 = vld [vmem:[%s0] sm:$0xf]
  %v25 = vld [vmem:[%s0 + $0x4] sm:$0xf]
  %v26 = vld [vmem:[%s0 + $0x8] sm:$0xf]
  %v27 = vld [vmem:[%s0 + $0xc] sm:$0xf]
  %v28 = vld [vmem:[%s0 + $0x10] sm:$0xf]
  %v29 = vld [vmem:[%s0 + $0x14] sm:$0xf]
  %v30 = vld [vmem:[%s0 + $0x18] sm:$0xf]
  %v31 = vld [vmem:[%s0 + $0x1c] sm:$0xf]
  %v32 = vld [vmem:[%s0 + $0x20] sm:$0xf]
  %v33 = vld [vmem:[%s0 + $0x24] sm:$0xf]
  %v34 = vld [vmem:[%s0 + $0x28] sm:$0xf]
  %v35 = vld [vmem:[%s0 + $0x2c] sm:$0xf]
  %v36 = vld [vmem:[%s0 + $0x30] sm:$0xf]
  %v37 = vld [vmem:[%s0 + $0x34] sm:$0xf]
  %v38 = vld [vmem:[%s0 + $0x38] sm:$0xf]
  %v39 = vld [vmem:[%s0 + $0x3c] sm:$0xf]
  %v40 = vld [vmem:[%s2] sm:$0xf]
  %v41 = vld [vmem:[%s2 + $0x4] sm:$0xf]
  %v42 = vld [vmem:[%s2 + $0x8] sm:$0xf]
  %v43 = vld [vmem:[%s2 + $0xc] sm:$0xf]
  %v44 = vld [vmem:[%s2 + $0x10] sm:$0xf]
  %v45 = vld [vmem:[%s2 + $0x14] sm:$0xf]
  %v46 = vld [vmem:[%s2 + $0x18] sm:$0xf]
  %v47 = vld [vmem:[%s2 + $0x1c] sm:$0xf]
  %v48 = vld [vmem:[%s2 + $0x20] sm:$0xf]
  %v49 = vld [vmem:[%s2 + $0x24] sm:$0xf]
  %v50 = vld [vmem:[%s2 + $0x28] sm:$0xf]
  %v51 = vld [vmem:[%s2 + $0x2c] sm:$0xf]
  %v52 = vld [vmem:[%s2 + $0x30] sm:$0xf]
  %v53 = vld [vmem:[%s2 + $0x34] sm:$0xf]
  %v54 = vld [vmem:[%s2 + $0x38] sm:$0xf]
  %v55 = vld [vmem:[%s2 + $0x3c] sm:$0xf]
  %v56 = vld [vmem:[%s3] sm:$0x1]
  %v58 = vlaneseq
  %v59 = vshrl.u32 %v58, 7
  %v60 = vsub.s32 0, %v59
  %v61 = vrot.slane %v56, %v60
  %v79 = vunpack.c.l.b16 %v24
  %v80 = vunpack.c.l.b16 %v25
  %v81 = vunpack.c.l.b16 %v26
  %v82 = vunpack.c.l.b16 %v27
  %v83 = vunpack.c.l.b16 %v28
  %v84 = vunpack.c.l.b16 %v29
  %v85 = vunpack.c.l.b16 %v30
  %v86 = vunpack.c.l.b16 %v31
  %v87 = vunpack.c.l.b16 %v32
  %v88 = vunpack.c.l.b16 %v33
  %v89 = vunpack.c.l.b16 %v34
  %v90 = vunpack.c.l.b16 %v35
  %v91 = vunpack.c.l.b16 %v36
  %v92 = vunpack.c.l.b16 %v37
  %v93 = vunpack.c.l.b16 %v38
  %v94 = vunpack.c.l.b16 %v39
  %v95 = vpack.c.b16 %v80, %v79
  %v96 = vpack.c.b16 %v82, %v81
  %v97 = vpack.c.b16 %v84, %v83
  %v98 = vpack.c.b16 %v86, %v85
  %v99 = vpack.c.b16 %v88, %v87
  %v100 = vpack.c.b16 %v90, %v89
  %v101 = vpack.c.b16 %v92, %v91
  %v102 = vpack.c.b16 %v94, %v93
  %v127 = vunpack.c.l.b16 %v40
  %v128 = vunpack.c.l.b16 %v41
  %v129 = vunpack.c.l.b16 %v42
  %v130 = vunpack.c.l.b16 %v43
  %v131 = vunpack.c.l.b16 %v44
  %v132 = vunpack.c.l.b16 %v45
  %v133 = vunpack.c.l.b16 %v46
  %v134 = vunpack.c.l.b16 %v47
  %v135 = vunpack.c.l.b16 %v48
  %v136 = vunpack.c.l.b16 %v49
  %v137 = vunpack.c.l.b16 %v50
  %v138 = vunpack.c.l.b16 %v51
  %v139 = vunpack.c.l.b16 %v52
  %v140 = vunpack.c.l.b16 %v53
  %v141 = vunpack.c.l.b16 %v54
  %v142 = vunpack.c.l.b16 %v55
  %v143 = vpack.c.b16 %v128, %v127
  %v144 = vpack.c.b16 %v130, %v129
  %v145 = vpack.c.b16 %v132, %v131
  %v146 = vpack.c.b16 %v134, %v133
  %v147 = vpack.c.b16 %v136, %v135
  %v148 = vpack.c.b16 %v138, %v137
  %v149 = vpack.c.b16 %v140, %v139
  %v150 = vpack.c.b16 %v142, %v141
  %159 = vmatprep.subr.bf16.mxu0 0
  %160 = vmatpush1.bf16.msra.mxu0 %v150
  %161 = vmatprep.subr.bf16.mxu0 0
  %162 = vmatpush1.bf16.msra.mxu0 %v149
  %163 = vmatprep.subr.bf16.mxu0 0
  %164 = vmatpush1.bf16.msra.mxu0 %v148
  %165 = vmatprep.subr.bf16.mxu0 0
  %166 = vmatpush1.bf16.msra.mxu0 %v147
  %167 = vmatprep.subr.bf16.mxu0 0
  %168 = vmatpush1.bf16.msra.mxu0 %v146
  %169 = vmatprep.subr.bf16.mxu0 0
  %170 = vmatpush1.bf16.msra.mxu0 %v145
  %171 = vmatprep.subr.bf16.mxu0 0
  %172 = vmatpush1.bf16.msra.mxu0 %v144
  %173 = vmatprep.subr.bf16.mxu0 0
  %174 = vmatpush1.bf16.msra.mxu0 %v143
  %175 = vmatprep.subr.bf16.mxu0 0
  %176 = vmatpush2.bf16.msra.mxu0 0
  %177 = vmatprep.subr.bf16.mxu0 0
  %178 = vmatpush2.bf16.msra.mxu0 0
  %179 = vmatprep.subr.bf16.mxu0 0
  %180 = vmatpush2.bf16.msra.mxu0 0
  %181 = vmatprep.subr.bf16.mxu0 0
  %182 = vmatpush2.bf16.msra.mxu0 0
  %183 = vmatprep.subr.bf16.mxu0 0
  %184 = vmatpush2.bf16.msra.mxu0 0
  %185 = vmatprep.subr.bf16.mxu0 0
  %186 = vmatpush2.bf16.msra.mxu0 0
  %187 = vmatprep.subr.bf16.mxu0 0
  %188 = vmatpush2.bf16.msra.mxu0 0
  %189 = vmatprep.subr.bf16.mxu0 0
  %190 = vmatpush2.bf16.msra.mxu0 0
  %191 = vmatprep.mubr.bf16.mxu0 0
  %192 = vmatmul.mubr.bf16.gmra.mxu0 %v95
  %v193 = vpop.f32.mrf.mxu0
  %v194 = vadd.f32 %v61, %v193
  %v195 = vpop.f32.mrf.mxu0
  %v196 = vpop.f32.mrf.mxu0
  %v197 = vadd.f32 %v61, %v196
  %v198 = vpop.f32.mrf.mxu0
  %199 = vmatprep.mubr.bf16.mxu0 0
  %200 = vmatmul.mubr.bf16.gmra.mxu0 %v96
  %v201 = vpop.f32.mrf.mxu0
  %v202 = vadd.f32 %v61, %v201
  %v203 = vpop.f32.mrf.mxu0
  %v204 = vpop.f32.mrf.mxu0
  %v205 = vadd.f32 %v61, %v204
  %v206 = vpop.f32.mrf.mxu0
  %207 = vmatprep.mubr.bf16.mxu0 0
  %208 = vmatmul.mubr.bf16.gmra.mxu0 %v97
  %v209 = vpop.f32.mrf.mxu0
  %v210 = vadd.f32 %v61, %v209
  %v211 = vpop.f32.mrf.mxu0
  %v212 = vpop.f32.mrf.mxu0
  %v213 = vadd.f32 %v61, %v212
  %v214 = vpop.f32.mrf.mxu0
  %215 = vmatprep.mubr.bf16.mxu0 0
  %216 = vmatmul.mubr.bf16.gmra.mxu0 %v98
  %v217 = vpop.f32.mrf.mxu0
  %v218 = vadd.f32 %v61, %v217
  %v219 = vpop.f32.mrf.mxu0
  %v220 = vpop.f32.mrf.mxu0
  %v221 = vadd.f32 %v61, %v220
  %v222 = vpop.f32.mrf.mxu0
  %223 = vmatprep.mubr.bf16.mxu0 0
  %224 = vmatmul.mubr.bf16.gmra.mxu0 %v99
  %v225 = vpop.f32.mrf.mxu0
  %v226 = vadd.f32 %v61, %v225
  %v227 = vpop.f32.mrf.mxu0
  %v228 = vpop.f32.mrf.mxu0
  %v229 = vadd.f32 %v61, %v228
  %v230 = vpop.f32.mrf.mxu0
  %231 = vmatprep.mubr.bf16.mxu0 0
  %232 = vmatmul.mubr.bf16.gmra.mxu0 %v100
  %v233 = vpop.f32.mrf.mxu0
  %v234 = vadd.f32 %v61, %v233
  %v235 = vpop.f32.mrf.mxu0
  %v236 = vpop.f32.mrf.mxu0
  %v237 = vadd.f32 %v61, %v236
  %v238 = vpop.f32.mrf.mxu0
  %239 = vmatprep.mubr.bf16.mxu0 0
  %240 = vmatmul.mubr.bf16.gmra.mxu0 %v101
  %v241 = vpop.f32.mrf.mxu0
  %v242 = vadd.f32 %v61, %v241
  %v243 = vpop.f32.mrf.mxu0
  %v244 = vpop.f32.mrf.mxu0
  %v245 = vadd.f32 %v61, %v244
  %v246 = vpop.f32.mrf.mxu0
  %247 = vmatprep.mubr.bf16.mxu0 0
  %248 = vmatmul.mubr.bf16.gmra.mxu0 %v102
  %v249 = vpop.f32.mrf.mxu0
  %v250 = vadd.f32 %v61, %v249
  %v251 = vpop.f32.mrf.mxu0
  %v252 = vpop.f32.mrf.mxu0
  %v253 = vadd.f32 %v61, %v252
  %v254 = vpop.f32.mrf.mxu0
  %255 = vdwg.mxu0
  %v256 = vld [vmem:[%s1] sm:$0xf]
  %v257 = vld [vmem:[%s1 + $0x4] sm:$0xf]
  %v258 = vld [vmem:[%s1 + $0x8] sm:$0xf]
  %v259 = vld [vmem:[%s1 + $0xc] sm:$0xf]
  %v260 = vld [vmem:[%s1 + $0x10] sm:$0xf]
  %v261 = vld [vmem:[%s1 + $0x14] sm:$0xf]
  %v262 = vld [vmem:[%s1 + $0x18] sm:$0xf]
  %v263 = vld [vmem:[%s1 + $0x1c] sm:$0xf]
  %v264 = vld [vmem:[%s1 + $0x20] sm:$0xf]
  %v265 = vld [vmem:[%s1 + $0x24] sm:$0xf]
  %v266 = vld [vmem:[%s1 + $0x28] sm:$0xf]
  %v267 = vld [vmem:[%s1 + $0x2c] sm:$0xf]
  %v268 = vld [vmem:[%s1 + $0x30] sm:$0xf]
  %v269 = vld [vmem:[%s1 + $0x34] sm:$0xf]
  %v270 = vld [vmem:[%s1 + $0x38] sm:$0xf]
  %v271 = vld [vmem:[%s1 + $0x3c] sm:$0xf]
  %v272 = vld [vmem:[%s4] sm:$0xf]
  %v273 = vld [vmem:[%s4 + $0x4] sm:$0xf]
  %v274 = vld [vmem:[%s4 + $0x8] sm:$0xf]
  %v275 = vld [vmem:[%s4 + $0xc] sm:$0xf]
  %v276 = vld [vmem:[%s4 + $0x10] sm:$0xf]
  %v277 = vld [vmem:[%s4 + $0x14] sm:$0xf]
  %v278 = vld [vmem:[%s4 + $0x18] sm:$0xf]
  %v279 = vld [vmem:[%s4 + $0x1c] sm:$0xf]
  %v280 = vld [vmem:[%s4 + $0x20] sm:$0xf]
  %v281 = vld [vmem:[%s4 + $0x24] sm:$0xf]
  %v282 = vld [vmem:[%s4 + $0x28] sm:$0xf]
  %v283 = vld [vmem:[%s4 + $0x2c] sm:$0xf]
  %v284 = vld [vmem:[%s4 + $0x30] sm:$0xf]
  %v285 = vld [vmem:[%s4 + $0x34] sm:$0xf]
  %v286 = vld [vmem:[%s4 + $0x38] sm:$0xf]
  %v287 = vld [vmem:[%s4 + $0x3c] sm:$0xf]
  %v288 = vld [vmem:[%s5] sm:$0x1]
  %v290 = vlaneseq
  %v291 = vshrl.u32 %v290, 7
  %v292 = vsub.s32 0, %v291
  %v293 = vrot.slane %v288, %v292
  %v311 = vunpack.c.l.b16 %v256
  %v312 = vunpack.c.l.b16 %v257
  %v313 = vunpack.c.l.b16 %v258
  %v314 = vunpack.c.l.b16 %v259
  %v315 = vunpack.c.l.b16 %v260
  %v316 = vunpack.c.l.b16 %v261
  %v317 = vunpack.c.l.b16 %v262
  %v318 = vunpack.c.l.b16 %v263
  %v319 = vunpack.c.l.b16 %v264
  %v320 = vunpack.c.l.b16 %v265
  %v321 = vunpack.c.l.b16 %v266
  %v322 = vunpack.c.l.b16 %v267
  %v323 = vunpack.c.l.b16 %v268
  %v324 = vunpack.c.l.b16 %v269
  %v325 = vunpack.c.l.b16 %v270
  %v326 = vunpack.c.l.b16 %v271
  %v327 = vpack.c.b16 %v312, %v311
  %v328 = vpack.c.b16 %v314, %v313
  %v329 = vpack.c.b16 %v316, %v315
  %v330 = vpack.c.b16 %v318, %v317
  %v331 = vpack.c.b16 %v320, %v319
  %v332 = vpack.c.b16 %v322, %v321
  %v333 = vpack.c.b16 %v324, %v323
  %v334 = vpack.c.b16 %v326, %v325
  %v359 = vunpack.c.l.b16 %v272
  %v360 = vunpack.c.l.b16 %v273
  %v361 = vunpack.c.l.b16 %v274
  %v362 = vunpack.c.l.b16 %v275
  %v363 = vunpack.c.l.b16 %v276
  %v364 = vunpack.c.l.b16 %v277
  %v365 = vunpack.c.l.b16 %v278
  %v366 = vunpack.c.l.b16 %v279
  %v367 = vunpack.c.l.b16 %v280
  %v368 = vunpack.c.l.b16 %v281
  %v369 = vunpack.c.l.b16 %v282
  %v370 = vunpack.c.l.b16 %v283
  %v371 = vunpack.c.l.b16 %v284
  %v372 = vunpack.c.l.b16 %v285
  %v373 = vunpack.c.l.b16 %v286
  %v374 = vunpack.c.l.b16 %v287
  %v375 = vpack.c.b16 %v360, %v359
  %v376 = vpack.c.b16 %v362, %v361
  %v377 = vpack.c.b16 %v364, %v363
  %v378 = vpack.c.b16 %v366, %v365
  %v379 = vpack.c.b16 %v368, %v367
  %v380 = vpack.c.b16 %v370, %v369
  %v381 = vpack.c.b16 %v372, %v371
  %v382 = vpack.c.b16 %v374, %v373
  %391 = vmatprep.subr.bf16.mxu0 0
  %392 = vmatpush1.bf16.msra.mxu0 %v382
  %393 = vmatprep.subr.bf16.mxu0 0
  %394 = vmatpush1.bf16.msra.mxu0 %v381
  %395 = vmatprep.subr.bf16.mxu0 0
  %396 = vmatpush1.bf16.msra.mxu0 %v380
  %397 = vmatprep.subr.bf16.mxu0 0
  %398 = vmatpush1.bf16.msra.mxu0 %v379
  %399 = vmatprep.subr.bf16.mxu0 0
  %400 = vmatpush1.bf16.msra.mxu0 %v378
  %401 = vmatprep.subr.bf16.mxu0 0
  %402 = vmatpush1.bf16.msra.mxu0 %v377
  %403 = vmatprep.subr.bf16.mxu0 0
  %404 = vmatpush1.bf16.msra.mxu0 %v376
  %405 = vmatprep.subr.bf16.mxu0 0
  %406 = vmatpush1.bf16.msra.mxu0 %v375
  %407 = vmatprep.subr.bf16.mxu0 0
  %408 = vmatpush2.bf16.msra.mxu0 0
  %409 = vmatprep.subr.bf16.mxu0 0
  %410 = vmatpush2.bf16.msra.mxu0 0
  %411 = vmatprep.subr.bf16.mxu0 0
  %412 = vmatpush2.bf16.msra.mxu0 0
  %413 = vmatprep.subr.bf16.mxu0 0
  %414 = vmatpush2.bf16.msra.mxu0 0
  %415 = vmatprep.subr.bf16.mxu0 0
  %416 = vmatpush2.bf16.msra.mxu0 0
  %417 = vmatprep.subr.bf16.mxu0 0
  %418 = vmatpush2.bf16.msra.mxu0 0
  %419 = vmatprep.subr.bf16.mxu0 0
  %420 = vmatpush2.bf16.msra.mxu0 0
  %421 = vmatprep.subr.bf16.mxu0 0
  %422 = vmatpush2.bf16.msra.mxu0 0
  %423 = vmatprep.mubr.bf16.mxu0 0
  %424 = vmatmul.mubr.bf16.gmra.mxu0 %v327
  %v425 = vpop.f32.mrf.mxu0
  %v426 = vadd.f32 %v293, %v425
  %v427 = vpop.f32.mrf.mxu0
  %v428 = vpop.f32.mrf.mxu0
  %v429 = vadd.f32 %v293, %v428
  %v430 = vpop.f32.mrf.mxu0
  %431 = vmatprep.mubr.bf16.mxu0 0
  %432 = vmatmul.mubr.bf16.gmra.mxu0 %v328
  %v433 = vpop.f32.mrf.mxu0
  %v434 = vadd.f32 %v293, %v433
  %v435 = vpop.f32.mrf.mxu0
  %v436 = vpop.f32.mrf.mxu0
  %v437 = vadd.f32 %v293, %v436
  %v438 = vpop.f32.mrf.mxu0
  %439 = vmatprep.mubr.bf16.mxu0 0
  %440 = vmatmul.mubr.bf16.gmra.mxu0 %v329
  %v441 = vpop.f32.mrf.mxu0
  %v442 = vadd.f32 %v293, %v441
  %v443 = vpop.f32.mrf.mxu0
  %v444 = vpop.f32.mrf.mxu0
  %v445 = vadd.f32 %v293, %v444
  %v446 = vpop.f32.mrf.mxu0
  %447 = vmatprep.mubr.bf16.mxu0 0
  %448 = vmatmul.mubr.bf16.gmra.mxu0 %v330
  %v449 = vpop.f32.mrf.mxu0
  %v450 = vadd.f32 %v293, %v449
  %v451 = vpop.f32.mrf.mxu0
  %v452 = vpop.f32.mrf.mxu0
  %v453 = vadd.f32 %v293, %v452
  %v454 = vpop.f32.mrf.mxu0
  %455 = vmatprep.mubr.bf16.mxu0 0
  %456 = vmatmul.mubr.bf16.gmra.mxu0 %v331
  %v457 = vpop.f32.mrf.mxu0
  %v458 = vadd.f32 %v293, %v457
  %v459 = vpop.f32.mrf.mxu0
  %v460 = vpop.f32.mrf.mxu0
  %v461 = vadd.f32 %v293, %v460
  %v462 = vpop.f32.mrf.mxu0
  %463 = vmatprep.mubr.bf16.mxu0 0
  %464 = vmatmul.mubr.bf16.gmra.mxu0 %v332
  %v465 = vpop.f32.mrf.mxu0
  %v466 = vadd.f32 %v293, %v465
  %v467 = vpop.f32.mrf.mxu0
  %v468 = vpop.f32.mrf.mxu0
  %v469 = vadd.f32 %v293, %v468
  %v470 = vpop.f32.mrf.mxu0
  %471 = vmatprep.mubr.bf16.mxu0 0
  %472 = vmatmul.mubr.bf16.gmra.mxu0 %v333
  %v473 = vpop.f32.mrf.mxu0
  %v474 = vadd.f32 %v293, %v473
  %v475 = vpop.f32.mrf.mxu0
  %v476 = vpop.f32.mrf.mxu0
  %v477 = vadd.f32 %v293, %v476
  %v478 = vpop.f32.mrf.mxu0
  %479 = vmatprep.mubr.bf16.mxu0 0
  %480 = vmatmul.mubr.bf16.gmra.mxu0 %v334
  %v481 = vpop.f32.mrf.mxu0
  %v482 = vadd.f32 %v293, %v481
  %v483 = vpop.f32.mrf.mxu0
  %v484 = vpop.f32.mrf.mxu0
  %v485 = vadd.f32 %v293, %v484
  %v486 = vpop.f32.mrf.mxu0
  %487 = vdwg.mxu0
  %v488 = vadd.f32 %v194, %v426
  %v489 = vadd.f32 %v197, %v429
  %v490 = vadd.f32 %v202, %v434
  %v491 = vadd.f32 %v205, %v437
  %v492 = vadd.f32 %v210, %v442
  %v493 = vadd.f32 %v213, %v445
  %v494 = vadd.f32 %v218, %v450
  %v495 = vadd.f32 %v221, %v453
  %v496 = vadd.f32 %v226, %v458
  %v497 = vadd.f32 %v229, %v461
  %v498 = vadd.f32 %v234, %v466
  %v499 = vadd.f32 %v237, %v469
  %v500 = vadd.f32 %v242, %v474
  %v501 = vadd.f32 %v245, %v477
  %v502 = vadd.f32 %v250, %v482
  %v503 = vadd.f32 %v253, %v485
  %v504 = vmax.f32 %v488, 0.0
  %v505 = vmax.f32 %v489, 0.0
  %v506 = vmax.f32 %v490, 0.0
  %v507 = vmax.f32 %v491, 0.0
  %v508 = vmax.f32 %v492, 0.0
  %v509 = vmax.f32 %v493, 0.0
  %v510 = vmax.f32 %v494, 0.0
  %v511 = vmax.f32 %v495, 0.0
  %v512 = vmax.f32 %v496, 0.0
  %v513 = vmax.f32 %v497, 0.0
  %v514 = vmax.f32 %v498, 0.0
  %v515 = vmax.f32 %v499, 0.0
  %v516 = vmax.f32 %v500, 0.0
  %v517 = vmax.f32 %v501, 0.0
  %v518 = vmax.f32 %v502, 0.0
  %v519 = vmax.f32 %v503, 0.0
  %v520 = vpack.c.bf16 %v505, %v504
  %v521 = vpack.c.bf16 %v507, %v506
  %v522 = vpack.c.bf16 %v509, %v508
  %v523 = vpack.c.bf16 %v511, %v510
  %v524 = vpack.c.bf16 %v513, %v512
  %v525 = vpack.c.bf16 %v515, %v514
  %v526 = vpack.c.bf16 %v517, %v516
  %v527 = vpack.c.bf16 %v519, %v518
  %v536 = vunpack.c.l.b16 %v520
  %v537 = vunpack.c.h.b16 %v520
  %v538 = vunpack.c.l.b16 %v521
  %v539 = vunpack.c.h.b16 %v521
  %v540 = vunpack.c.l.b16 %v522
  %v541 = vunpack.c.h.b16 %v522
  %v542 = vunpack.c.l.b16 %v523
  %v543 = vunpack.c.h.b16 %v523
  %v544 = vunpack.c.l.b16 %v524
  %v545 = vunpack.c.h.b16 %v524
  %v546 = vunpack.c.l.b16 %v525
  %v547 = vunpack.c.h.b16 %v525
  %v548 = vunpack.c.l.b16 %v526
  %v549 = vunpack.c.h.b16 %v526
  %v550 = vunpack.c.l.b16 %v527
  %v551 = vunpack.c.h.b16 %v527
  %v552 = vpack.c.b16 %v536, %v536
  %v553 = vpack.c.b16 %v537, %v537
  %v554 = vpack.c.b16 %v538, %v538
  %v555 = vpack.c.b16 %v539, %v539
  %v556 = vpack.c.b16 %v540, %v540
  %v557 = vpack.c.b16 %v541, %v541
  %v558 = vpack.c.b16 %v542, %v542
  %v559 = vpack.c.b16 %v543, %v543
  %v560 = vpack.c.b16 %v544, %v544
  %v561 = vpack.c.b16 %v545, %v545
  %v562 = vpack.c.b16 %v546, %v546
  %v563 = vpack.c.b16 %v547, %v547
  %v564 = vpack.c.b16 %v548, %v548
  %v565 = vpack.c.b16 %v549, %v549
  %v566 = vpack.c.b16 %v550, %v550
  %v567 = vpack.c.b16 %v551, %v551
  %584 = vst [vmem:[%s6] sm:$0xf] %v552
  %585 = vst [vmem:[%s6 + $0x4] sm:$0xf] %v553
  %586 = vst [vmem:[%s6 + $0x8] sm:$0xf] %v554
  %587 = vst [vmem:[%s6 + $0xc] sm:$0xf] %v555
  %588 = vst [vmem:[%s6 + $0x10] sm:$0xf] %v556
  %589 = vst [vmem:[%s6 + $0x14] sm:$0xf] %v557
  %590 = vst [vmem:[%s6 + $0x18] sm:$0xf] %v558
  %591 = vst [vmem:[%s6 + $0x1c] sm:$0xf] %v559
  %592 = vst [vmem:[%s6 + $0x20] sm:$0xf] %v560
  %593 = vst [vmem:[%s6 + $0x24] sm:$0xf] %v561
  %594 = vst [vmem:[%s6 + $0x28] sm:$0xf] %v562
  %595 = vst [vmem:[%s6 + $0x2c] sm:$0xf] %v563
  %596 = vst [vmem:[%s6 + $0x30] sm:$0xf] %v564
  %597 = vst [vmem:[%s6 + $0x34] sm:$0xf] %v565
  %598 = vst [vmem:[%s6 + $0x38] sm:$0xf] %v566
  %599 = vst [vmem:[%s6 + $0x3c] sm:$0xf] %v567
  // Predicated region
  $region26: #{fwd.8} parent=0 // pred_check
    _
  $region27: #{fwd.8} parent=0 // pred_check_branch
    %601 = sbr.rel (0) target = $region29
  $region28: #{fwd.8} parent=0 // pred_region
    _
  $region29: #{fwd.8} parent=0 // pred_fallthru
    _
  // Predicated region
  $region30: #{fwd.8} parent=0 // pred_check
    _
  $region31: #{fwd.8} parent=0 // pred_check_branch
    %603 = sbr.rel (0) target = $region33
  $region32: #{fwd.8} parent=0 // pred_region
    _
  $region33: #{fwd.8} parent=0 // pred_fallthru
    _

// kernel: fwd.7
$region0: #{fwd.7}
  #allocation0 [shape = 'u32[]', space=smem, size = 0x4, offset = 0x4, fixed_abs, tag = 'smem constant byte address 0x4 - core index']
  #allocation1 [shape = 'u32[144,128]{1,0:T(1,128)}', space=vmem, size = 0x12000, scoped, tag = 'internal scratch']
  #allocation2 [shape = 'f32[18,32,128]{2,1,0:T(8,128)}', space=vmem, size = 0x48000, scoped, tag = 'scratch operand']
  %s0 = inlined_call_operand.vmem [shape: bf16[2,16,16,128], index: 0, kind: input, shape index: {}, may-alias: {0,1,2}]
  %s1 = inlined_call_operand.vmem [shape: bf16[2,16,16,128], index: 1, kind: input, shape index: {}, may-alias: {0,1,2}]
  %s2 = inlined_call_operand.vmem [shape: bf16[2,16,16,128], index: 2, kind: input, shape index: {}, may-alias: {0,1,2}]
  %s3 = inlined_call_operand.vmem [shape: bf16[3,384,128], index: 3, kind: input, shape index: {}]
  %s4 = inlined_call_operand.vmem [shape: f32[1,128], index: 4, kind: input, shape index: {}]
  %s5 = inlined_call_operand.vmem [shape: bf16[2,8,8,128], index: 5, kind: output, shape index: {}]
  %s6 = sld [smem:[#allocation0]]
  $region53: #{fwd.7} parent=0
    _
  %s8 = ssub.s32 1, %s6
  %s9 = scalar_select 0, %s8, %s6
  loop: start=0, step=1, limit=4
  $region2: #{fwd.7} parent=0 // loop_pre_header
    _
  $region3: #{fwd.7} parent=0 // loop_header
    %s11 = sphi 0, %s15
    %p12 = scmp.ge.s32.totalorder %s11, 4
    %s18 = sphi 0, %s30
    %s19 = sphi 0, %s26
    %s20 = sphi 0, %s18
    %s21 = sphi 0, %s19
    %s22 = sphi 0, %s20
    %s23 = sphi 0, %s21
    %s35 = sphi 0, %s37
    %s38 = sphi 0, %s35
    %s39 = sphi 0, %s38
    %s55 = sphi 0, %s39
    %s71 = sphi 0, %s73
    %s74 = sphi 0, %s71
    %s75 = sphi 0, %s74
    %s91 = sphi 0, %s75
    %s107 = sphi 0, %s109
    %s110 = sphi 0, %s107
    %s111 = sphi 0, %s110
    %s127 = sphi 0, %s111
    %s131 = sphi 0, %s131
    %s133 = sphi 0, %s131
    %s134 = sphi 0, %s133
    %s148 = sphi 0, %s134
    %s152 = sphi 0, %s152
    %s154 = sphi 0, %s152
    %s155 = sphi 0, %s154
    %s169 = sphi 0, %s155
    %s177 = sphi 0, %s179
    %s180 = sphi 0, %s177
    %s181 = sphi 0, %s180
    %s197 = sphi 0, %s181
  $region4: #{fwd.7} parent=0 // loop_header_branch
    %14 = sbr.rel (%p12) target = $region8
  $region5: #{fwd.7} parent=0 // loop_body
    %s16 = ssub.s32 %s11, 1
    %s17 = ssub.s32 %s11, 2
    %s24 = sadd.s32 1, %s19
    %p25 = scmp.ge.s32.totalorder %s24, 1
    %s26 = scalar_select %p25, 0, %s24
    %s27 = sadd.s32 1, %s18
    %s28 = scalar_select %p25, %s27, %s18
    %p29 = scmp.ge.s32.totalorder %s28, 2
    %s30 = scalar_select %p29, 0, %s28
    %s31 = ssub.s32 %s18, %s30
    %s32 = ssub.s32 %s19, %s26
    %s33 = sor.u32 %s31, %s32
    %p34 = scmp.eq.s32.totalorder %s33, 0
    %s36 = sadd.s32 %s35, 1
    %s37 = scalar_select %p34, %s35, %s36
    %p40 = pneg %p34
    %p41 = scmp.eq.s32.totalorder %s11, 1
    %p42 = por %p40, %p41
    %p43 = scmp.ne.s32.totalorder %s35, %s38
    %p44 = scmp.eq.s32.totalorder %s11, 0
    %p45 = por %p43, %p44
    %p46 = scmp.ne.s32.totalorder %s35, %s38
    %p47 = scmp.eq.s32.totalorder %s16, 1
    %p48 = por %p46, %p47
    %p49 = scmp.ne.s32.totalorder %s38, %s39
    %p50 = scmp.eq.s32.totalorder %s16, 0
    %p51 = por %p49, %p50
    %p52 = scmp.ne.s32.totalorder %s38, %s39
    %p53 = scmp.eq.s32.totalorder %s17, 1
    %p54 = por %p52, %p53
    %p56 = scmp.ne.s32.totalorder %s39, %s55
    %p57 = scmp.eq.s32.totalorder %s17, 0
    %p58 = por %p56, %p57
    %s59 = smul.u32 %s19, 16
    %s60 = ssub.s32 %s59, 1
    %p61 = scmp.gt.s32.totalorder %s60, 0
    %s62 = scalar_select %p61, %s60, 0
    %s63 = smul.u32 %s26, 16
    %s64 = ssub.s32 %s63, 1
    %p65 = scmp.gt.s32.totalorder %s64, 0
    %s66 = scalar_select %p65, %s64, 0
    %s67 = ssub.s32 %s18, %s30
    %s68 = ssub.s32 %s62, %s66
    %s69 = sor.u32 %s67, %s68
    %p70 = scmp.eq.s32.totalorder %s69, 0
    %s72 = sadd.s32 %s71, 1
    %s73 = scalar_select %p70, %s71, %s72
    %p76 = pneg %p70
    %p77 = scmp.eq.s32.totalorder %s11, 1
    %p78 = por %p76, %p77
    %p79 = scmp.ne.s32.totalorder %s71, %s74
    %p80 = scmp.eq.s32.totalorder %s11, 0
    %p81 = por %p79, %p80
    %p82 = scmp.ne.s32.totalorder %s71, %s74
    %p83 = scmp.eq.s32.totalorder %s16, 1
    %p84 = por %p82, %p83
    %p85 = scmp.ne.s32.totalorder %s74, %s75
    %p86 = scmp.eq.s32.totalorder %s16, 0
    %p87 = por %p85, %p86
    %p88 = scmp.ne.s32.totalorder %s74, %s75
    %p89 = scmp.eq.s32.totalorder %s17, 1
    %p90 = por %p88, %p89
    %p92 = scmp.ne.s32.totalorder %s75, %s91
    %p93 = scmp.eq.s32.totalorder %s17, 0
    %p94 = por %p92, %p93
    %s95 = sadd.s32 %s19, 1
    %s96 = smul.u32 %s95, 16
    %p97 = scmp.lt.s32.totalorder %s96, 15
    %s98 = scalar_select %p97, %s96, 15
    %s99 = sadd.s32 %s26, 1
    %s100 = smul.u32 %s99, 16
    %p101 = scmp.lt.s32.totalorder %s100, 15
    %s102 = scalar_select %p101, %s100, 15
    %s103 = ssub.s32 %s18, %s30
    %s104 = ssub.s32 %s98, %s102
    %s105 = sor.u32 %s103, %s104
    %p106 = scmp.eq.s32.totalorder %s105, 0
    %s108 = sadd.s32 %s107, 1
    %s109 = scalar_select %p106, %s107, %s108
    %p112 = pneg %p106
    %p113 = scmp.eq.s32.totalorder %s11, 1
    %p114 = por %p112, %p113
    %p115 = scmp.ne.s32.totalorder %s107, %s110
    %p116 = scmp.eq.s32.totalorder %s11, 0
    %p117 = por %p115, %p116
    %p118 = scmp.ne.s32.totalorder %s107, %s110
    %p119 = scmp.eq.s32.totalorder %s16, 1
    %p120 = por %p118, %p119
    %p121 = scmp.ne.s32.totalorder %s110, %s111
    %p122 = scmp.eq.s32.totalorder %s16, 0
    %p123 = por %p121, %p122
    %p124 = scmp.ne.s32.totalorder %s110, %s111
    %p125 = scmp.eq.s32.totalorder %s17, 1
    %p126 = por %p124, %p125
    %p128 = scmp.ne.s32.totalorder %s111, %s127
    %p129 = scmp.eq.s32.totalorder %s17, 0
    %p130 = por %p128, %p129
    %s132 = sadd.s32 %s131, 1
    %p135 = scmp.eq.s32.totalorder %s11, 1
    %p136 = scmp.ne.s32.totalorder %s131, %s133
    %p137 = scmp.eq.s32.totalorder %s11, 0
    %p138 = por %p136, %p137
    %p139 = scmp.ne.s32.totalorder %s131, %s133
    %p140 = scmp.eq.s32.totalorder %s16, 1
    %p141 = por %p139, %p140
    %p142 = scmp.ne.s32.totalorder %s133, %s134
    %p143 = scmp.eq.s32.totalorder %s16, 0
    %p144 = por %p142, %p143
    %p145 = scmp.ne.s32.totalorder %s133, %s134
    %p146 = scmp.eq.s32.totalorder %s17, 1
    %p147 = por %p145, %p146
    %p149 = scmp.ne.s32.totalorder %s134, %s148
    %p150 = scmp.eq.s32.totalorder %s17, 0
    %p151 = por %p149, %p150
    %s153 = sadd.s32 %s152, 1
    %p156 = scmp.eq.s32.totalorder %s11, 1
    %p157 = scmp.ne.s32.totalorder %s152, %s154
    %p158 = scmp.eq.s32.totalorder %s11, 0
    %p159 = por %p157, %p158
    %p160 = scmp.ne.s32.totalorder %s152, %s154
    %p161 = scmp.eq.s32.totalorder %s16, 1
    %p162 = por %p160, %p161
    %p163 = scmp.ne.s32.totalorder %s154, %s155
    %p164 = scmp.eq.s32.totalorder %s16, 0
    %p165 = por %p163, %p164
    %p166 = scmp.ne.s32.totalorder %s154, %s155
    %p167 = scmp.eq.s32.totalorder %s17, 1
    %p168 = por %p166, %p167
    %p170 = scmp.ne.s32.totalorder %s155, %s169
    %p171 = scmp.eq.s32.totalorder %s17, 0
    %p172 = por %p170, %p171
    %s173 = ssub.s32 %s18, %s30
    %s174 = ssub.s32 %s19, %s26
    %s175 = sor.u32 %s173, %s174
    %p176 = scmp.eq.s32.totalorder %s175, 0
    %s178 = sadd.s32 %s177, 1
    %s179 = scalar_select %p176, %s177, %s178
    %p182 = pneg %p176
    %p183 = scmp.eq.s32.totalorder %s11, 1
    %p184 = por %p182, %p183
    %p185 = scmp.ne.s32.totalorder %s177, %s180
    %p186 = scmp.eq.s32.totalorder %s11, 0
    %p187 = por %p185, %p186
    %p188 = scmp.ne.s32.totalorder %s177, %s180
    %p189 = scmp.eq.s32.totalorder %s16, 1
    %p190 = por %p188, %p189
    %p191 = scmp.ne.s32.totalorder %s180, %s181
    %p192 = scmp.eq.s32.totalorder %s16, 0
    %p193 = por %p191, %p192
    %p194 = scmp.ne.s32.totalorder %s180, %s181
    %p195 = scmp.eq.s32.totalorder %s17, 1
    %p196 = por %p194, %p195
    %p198 = scmp.ne.s32.totalorder %s181, %s197
    %p199 = scmp.eq.s32.totalorder %s17, 0
    %p200 = por %p198, %p199
    %p201 = scmp.le.s32.totalorder 1, %s11
    %p202 = scmp.lt.s32.totalorder %s11, 3
    %p203 = pnand %p201, %p202
    %p204 = pneg %p203
    // Predicated region
    $region9: #{fwd.7} parent=5 // pred_check
      _
    $region10: #{fwd.7} parent=5 // pred_check_branch
      %206 = sbr.rel (%p203) target = $region12
    $region11: #{fwd.7} parent=5 // pred_region
      %s207 = ssub.s32 %s11, 1
      // Predicated region
      $region13: #{fwd.7} parent=11 // pred_check
        %p208 = pneg %p144
      $region14: #{fwd.7} parent=11 // pred_check_branch
        %210 = sbr.rel (%p208) target = $region16
      $region15: #{fwd.7} parent=11 // pred_region
        _
      $region16: #{fwd.7} parent=11 // pred_fallthru
        _
      // Predicated region
      $region17: #{fwd.7} parent=11 // pred_check
        %p211 = pneg %p165
      $region18: #{fwd.7} parent=11 // pred_check_branch
        %213 = sbr.rel (%p211) target = $region20
      $region19: #{fwd.7} parent=11 // pred_region
        _
      $region20: #{fwd.7} parent=11 // pred_fallthru
        _
    $region12: #{fwd.7} parent=5 // pred_fallthru
      _
    %p214 = scmp.lt.s32.totalorder %s11, 2
    // Predicated region
    $region21: #{fwd.7} parent=5 // pred_check
      %p215 = pneg %p214
    $region22: #{fwd.7} parent=5 // pred_check_branch
      %217 = sbr.rel (%p215) target = $region24
    $region23: #{fwd.7} parent=5 // pred_region
      // Predicated region
      $region25: #{fwd.7} parent=23 // pred_check
        %p218 = pneg %p45
      $region26: #{fwd.7} parent=23 // pred_check_branch
        %220 = sbr.rel (%p218) target = $region28
      $region27: #{fwd.7} parent=23 // pred_region
        %s221 = smul.u32 16, %s19
        %p222 = scmp.lt.s32.totalorder %s18, 1
        %s223 = scalar_select %p222, %s18, 1
        %p224 = scmp.lt.s32.totalorder %s221, 15
        %s225 = scalar_select %p224, %s221, 15
        %s226 = smul.addr %s225, 2
        %s227 = smul.addr %s223, 32
        %s228 = sadd.s32 %s226, %s227
        %s229 = smul.addr %s228, 4
        %s230 = scalar_lea.vmem %s0, %s229
        %s231 = smul.u32 16, %s19
      $region28: #{fwd.7} parent=23 // pred_fallthru
        _
      // Predicated region
      $region29: #{fwd.7} parent=23 // pred_check
        %p232 = pneg %p81
      $region30: #{fwd.7} parent=23 // pred_check_branch
        %234 = sbr.rel (%p232) target = $region32
      $region31: #{fwd.7} parent=23 // pred_region
        %s235 = smul.u32 %s19, 16
        %s236 = ssub.s32 %s235, 1
        %p237 = scmp.gt.s32.totalorder %s236, 0
        %s238 = scalar_select %p237, %s236, 0
        %p239 = scmp.lt.s32.totalorder %s18, 1
        %s240 = scalar_select %p239, %s18, 1
        %p241 = scmp.lt.s32.totalorder %s238, 15
        %s242 = scalar_select %p241, %s238, 15
        %s243 = smul.addr %s242, 2
        %s244 = smul.addr %s240, 32
        %s245 = sadd.s32 %s243, %s244
        %s246 = smul.addr %s245, 4
        %s247 = scalar_lea.vmem %s1, %s246
        %s248 = smul.u32 %s19, 16
        %s249 = ssub.s32 %s248, 1
        %p250 = scmp.gt.s32.totalorder %s249, 0
        %s251 = scalar_select %p250, %s249, 0
      $region32: #{fwd.7} parent=23 // pred_fallthru
        _
      // Predicated region
      $region33: #{fwd.7} parent=23 // pred_check
        %p252 = pneg %p117
      $region34: #{fwd.7} parent=23 // pred_check_branch
        %254 = sbr.rel (%p252) target = $region36
      $region35: #{fwd.7} parent=23 // pred_region
        %s255 = sadd.s32 %s19, 1
        %s256 = smul.u32 %s255, 16
        %p257 = scmp.lt.s32.totalorder %s256, 15
        %s258 = scalar_select %p257, %s256, 15
        %p259 = scmp.lt.s32.totalorder %s18, 1
        %s260 = scalar_select %p259, %s18, 1
        %p261 = scmp.lt.s32.totalorder %s258, 15
        %s262 = scalar_select %p261, %s258, 15
        %s263 = smul.addr %s262, 2
        %s264 = smul.addr %s260, 32
        %s265 = sadd.s32 %s263, %s264
        %s266 = smul.addr %s265, 4
        %s267 = scalar_lea.vmem %s2, %s266
        %s268 = sadd.s32 %s19, 1
        %s269 = smul.u32 %s268, 16
        %p270 = scmp.lt.s32.totalorder %s269, 15
        %s271 = scalar_select %p270, %s269, 15
      $region36: #{fwd.7} parent=23 // pred_fallthru
        _
    $region24: #{fwd.7} parent=5 // pred_fallthru
      _
    %p272 = scmp.le.s32.totalorder 1, %s11
    %p273 = scmp.lt.s32.totalorder %s11, 3
    %p274 = pnand %p272, %p273
    %p275 = pneg %p274
    // Predicated region
    $region37: #{fwd.7} parent=5 // pred_check
      _
    $region38: #{fwd.7} parent=5 // pred_check_branch
      %277 = sbr.rel (%p274) target = $region40
    $region39: #{fwd.7} parent=5 // pred_region
      %s278 = ssub.s32 %s11, 1
      %s279 = smul.u32 16, %s21
      %p280 = scmp.lt.s32.totalorder %s20, 1
      %s281 = scalar_select %p280, %s20, 1
      %p282 = scmp.lt.s32.totalorder %s279, 15
      %s283 = scalar_select %p282, %s279, 15
      %s284 = smul.addr %s283, 2
      %s285 = smul.addr %s281, 32
      %s286 = sadd.s32 %s284, %s285
      %s287 = smul.addr %s286, 4
      %s288 = scalar_lea.vmem %s0, %s287
      %p289 = pneg %p51
      %p290 = pneg %p48
      %s291 = smul.u32 %s21, 16
      %s292 = ssub.s32 %s291, 1
      %p293 = scmp.gt.s32.totalorder %s292, 0
      %s294 = scalar_select %p293, %s292, 0
      %p295 = scmp.lt.s32.totalorder %s20, 1
      %s296 = scalar_select %p295, %s20, 1
      %p297 = scmp.lt.s32.totalorder %s294, 15
      %s298 = scalar_select %p297, %s294, 15
      %s299 = smul.addr %s298, 2
      %s300 = smul.addr %s296, 32
      %s301 = sadd.s32 %s299, %s300
      %s302 = smul.addr %s301, 4
      %s303 = scalar_lea.vmem %s1, %s302
      %p304 = pneg %p87
      %p305 = pneg %p84
      %s306 = sadd.s32 %s21, 1
      %s307 = smul.u32 %s306, 16
      %p308 = scmp.lt.s32.totalorder %s307, 15
      %s309 = scalar_select %p308, %s307, 15
      %p310 = scmp.lt.s32.totalorder %s20, 1
      %s311 = scalar_select %p310, %s20, 1
      %p312 = scmp.lt.s32.totalorder %s309, 15
      %s313 = scalar_select %p312, %s309, 15
      %s314 = smul.addr %s313, 2
      %s315 = smul.addr %s311, 32
      %s316 = sadd.s32 %s314, %s315
      %s317 = smul.addr %s316, 4
      %s318 = scalar_lea.vmem %s2, %s317
      %p319 = pneg %p123
      %p320 = pneg %p120
      %p321 = pneg %p144
      %p322 = pneg %p141
      %p323 = pneg %p165
      %p324 = pneg %p162
      %p325 = pneg %p193
      %p326 = pneg %p190
      %s327 = smul.u32 8, %s21
      %p328 = scmp.lt.s32.totalorder %s20, 1
      %s329 = scalar_select %p328, %s20, 1
      %p330 = scmp.lt.s32.totalorder %s327, 7
      %s331 = scalar_select %p330, %s327, 7
      %s332 = smul.addr %s329, 8
      %s333 = sadd.s32 %s331, %s332
      %s334 = smul.addr %s333, 4
      %s335 = scalar_lea.vmem %s5, %s334
      %s336 = smul.u32 16, %s21
      %p337 = scmp.lt.s32.totalorder %s20, 1
      %s338 = scalar_select %p337, %s20, 1
      %p339 = scmp.lt.s32.totalorder %s336, 15
      %s340 = scalar_select %p339, %s336, 15
      %s341 = smul.addr %s340, 2
      %s342 = smul.addr %s338, 32
      %s343 = sadd.s32 %s341, %s342
      %s344 = smul.addr %s343, 4
      %s345 = scalar_lea.vmem %s0, %s344
      %s346 = smul.u32 16, %s21
      %s347 = smul.u32 %s21, 16
      %s348 = ssub.s32 %s347, 1
      %p349 = scmp.gt.s32.totalorder %s348, 0
      %s350 = scalar_select %p349, %s348, 0
      %p351 = scmp.lt.s32.totalorder %s20, 1
      %s352 = scalar_select %p351, %s20, 1
      %p353 = scmp.lt.s32.totalorder %s350, 15
      %s354 = scalar_select %p353, %s350, 15
      %s355 = smul.addr %s354, 2
      %s356 = smul.addr %s352, 32
      %s357 = sadd.s32 %s355, %s356
      %s358 = smul.addr %s357, 4
      %s359 = scalar_lea.vmem %s1, %s358
      %s360 = smul.u32 %s21, 16
      %s361 = ssub.s32 %s360, 1
      %p362 = scmp.gt.s32.totalorder %s361, 0
      %s363 = scalar_select %p362, %s361, 0
      %s364 = sadd.s32 %s21, 1
      %s365 = smul.u32 %s364, 16
      %p366 = scmp.lt.s32.totalorder %s365, 15
      %s367 = scalar_select %p366, %s365, 15
      %p368 = scmp.lt.s32.totalorder %s20, 1
      %s369 = scalar_select %p368, %s20, 1
      %p370 = scmp.lt.s32.totalorder %s367, 15
      %s371 = scalar_select %p370, %s367, 15
      %s372 = smul.addr %s371, 2
      %s373 = smul.addr %s369, 32
      %s374 = sadd.s32 %s372, %s373
      %s375 = smul.addr %s374, 4
      %s376 = scalar_lea.vmem %s2, %s375
      %s377 = sadd.s32 %s21, 1
      %s378 = smul.u32 %s377, 16
      %p379 = scmp.lt.s32.totalorder %s378, 15
      %s380 = scalar_select %p379, %s378, 15
      %s381 = smul.u32 8, %s21
      %p382 = scmp.lt.s32.totalorder %s20, 1
      %s383 = scalar_select %p382, %s20, 1
      %p384 = scmp.lt.s32.totalorder %s381, 7
      %s385 = scalar_select %p384, %s381, 7
      %s386 = smul.addr %s383, 8
      %s387 = sadd.s32 %s385, %s386
      %s388 = smul.addr %s387, 4
      %s389 = scalar_lea.vmem %s5, %s388
      %s390 = smul.u32 8, %s21
      %392 = vst [vmem:[#allocation2] sm:$0xff] 0.0
      %393 = vst [vmem:[#allocation2 + $0x20] sm:$0xff] 0.0
      %394 = vst [vmem:[#allocation2 + $0x40] sm:$0xff] 0.0
      %395 = vst [vmem:[#allocation2 + $0x60] sm:$0xff] 0.0
      %396 = vst [vmem:[#allocation2 + $0x80] sm:$0xff] 0.0
      %397 = vst [vmem:[#allocation2 + $0xa0] sm:$0xff] 0.0
      %398 = vst [vmem:[#allocation2 + $0xc0] sm:$0xff] 0.0
      %399 = vst [vmem:[#allocation2 + $0xe0] sm:$0xff] 0.0
      %400 = vst [vmem:[#allocation2 + $0x100] sm:$0xff] 0.0
      %401 = vst [vmem:[#allocation2 + $0x120] sm:$0xff] 0.0
      %402 = vst [vmem:[#allocation2 + $0x140] sm:$0xff] 0.0
      %403 = vst [vmem:[#allocation2 + $0x160] sm:$0xff] 0.0
      %404 = vst [vmem:[#allocation2 + $0x180] sm:$0xff] 0.0
      %405 = vst [vmem:[#allocation2 + $0x1a0] sm:$0xff] 0.0
      %406 = vst [vmem:[#allocation2 + $0x1c0] sm:$0xff] 0.0
      %407 = vst [vmem:[#allocation2 + $0x1e0] sm:$0xff] 0.0
      %408 = vst [vmem:[#allocation2 + $0x200] sm:$0xff] 0.0
      %409 = vst [vmem:[#allocation2 + $0x220] sm:$0xff] 0.0
      %410 = vst [vmem:[#allocation2 + $0x18] sm:$0xff] 0.0
      %411 = vst [vmem:[#allocation2 + $0x38] sm:$0xff] 0.0
      %412 = vst [vmem:[#allocation2 + $0x58] sm:$0xff] 0.0
      %413 = vst [vmem:[#allocation2 + $0x78] sm:$0xff] 0.0
      %414 = vst [vmem:[#allocation2 + $0x98] sm:$0xff] 0.0
      %415 = vst [vmem:[#allocation2 + $0xb8] sm:$0xff] 0.0
      %416 = vst [vmem:[#allocation2 + $0xd8] sm:$0xff] 0.0
      %417 = vst [vmem:[#allocation2 + $0xf8] sm:$0xff] 0.0
      %418 = vst [vmem:[#allocation2 + $0x118] sm:$0xff] 0.0
      %419 = vst [vmem:[#allocation2 + $0x138] sm:$0xff] 0.0
      %420 = vst [vmem:[#allocation2 + $0x158] sm:$0xff] 0.0
      %421 = vst [vmem:[#allocation2 + $0x178] sm:$0xff] 0.0
      %422 = vst [vmem:[#allocation2 + $0x198] sm:$0xff] 0.0
      %423 = vst [vmem:[#allocation2 + $0x1b8] sm:$0xff] 0.0
      %424 = vst [vmem:[#allocation2 + $0x1d8] sm:$0xff] 0.0
      %425 = vst [vmem:[#allocation2 + $0x1f8] sm:$0xff] 0.0
      %426 = vst [vmem:[#allocation2 + $0x218] sm:$0xff] 0.0
      %427 = vst [vmem:[#allocation2 + $0x238] sm:$0xff] 0.0
      %v428 = vld [vmem:[%s345] sm:$0xf]
      %v429 = vld [vmem:[%s345 + $0x4] sm:$0xf]
      %v430 = vld [vmem:[%s345 + $0x8] sm:$0xf]
      %v431 = vld [vmem:[%s345 + $0xc] sm:$0xf]
      %v432 = vld [vmem:[%s345 + $0x10] sm:$0xf]
      %v433 = vld [vmem:[%s345 + $0x14] sm:$0xf]
      %v434 = vld [vmem:[%s345 + $0x18] sm:$0xf]
      %v435 = vld [vmem:[%s345 + $0x1c] sm:$0xf]
      %v436 = vld [vmem:[%s345 + $0x20] sm:$0xf]
      %v437 = vld [vmem:[%s345 + $0x24] sm:$0xf]
      %v438 = vld [vmem:[%s345 + $0x28] sm:$0xf]
      %v439 = vld [vmem:[%s345 + $0x2c] sm:$0xf]
      %v440 = vld [vmem:[%s345 + $0x30] sm:$0xf]
      %v441 = vld [vmem:[%s345 + $0x34] sm:$0xf]
      %v442 = vld [vmem:[%s345 + $0x38] sm:$0xf]
      %v443 = vld [vmem:[%s345 + $0x3c] sm:$0xf]
      %v444 = vld [vmem:[%s345 + $0x40] sm:$0xf]
      %v445 = vld [vmem:[%s345 + $0x44] sm:$0xf]
      %v446 = vld [vmem:[%s345 + $0x48] sm:$0xf]
      %v447 = vld [vmem:[%s345 + $0x4c] sm:$0xf]
      %v448 = vld [vmem:[%s345 + $0x50] sm:$0xf]
      %v449 = vld [vmem:[%s345 + $0x54] sm:$0xf]
      %v450 = vld [vmem:[%s345 + $0x58] sm:$0xf]
      %v451 = vld [vmem:[%s345 + $0x5c] sm:$0xf]
      %v452 = vld [vmem:[%s345 + $0x60] sm:$0xf]
      %v453 = vld [vmem:[%s345 + $0x64] sm:$0xf]
      %v454 = vld [vmem:[%s345 + $0x68] sm:$0xf]
      %v455 = vld [vmem:[%s345 + $0x6c] sm:$0xf]
      %v456 = vld [vmem:[%s345 + $0x70] sm:$0xf]
      %v457 = vld [vmem:[%s345 + $0x74] sm:$0xf]
      %v458 = vld [vmem:[%s345 + $0x78] sm:$0xf]
      %v459 = vld [vmem:[%s345 + $0x7c] sm:$0xf]
      %v460 = vunpack.c.l.bf16 %v428
      %v461 = vunpack.c.l.bf16 %v429
      %v462 = vunpack.c.l.bf16 %v430
      %v463 = vunpack.c.l.bf16 %v431
      %v464 = vunpack.c.l.bf16 %v432
      %v465 = vunpack.c.l.bf16 %v433
      %v466 = vunpack.c.l.bf16 %v434
      %v467 = vunpack.c.l.bf16 %v435
      %v468 = vunpack.c.l.bf16 %v436
      %v469 = vunpack.c.l.bf16 %v437
      %v470 = vunpack.c.l.bf16 %v438
      %v471 = vunpack.c.l.bf16 %v439
      %v472 = vunpack.c.l.bf16 %v440
      %v473 = vunpack.c.l.bf16 %v441
      %v474 = vunpack.c.l.bf16 %v442
      %v475 = vunpack.c.l.bf16 %v443
      %v476 = vunpack.c.l.bf16 %v444
      %v477 = vunpack.c.l.bf16 %v445
      %v478 = vunpack.c.l.bf16 %v446
      %v479 = vunpack.c.l.bf16 %v447
      %v480 = vunpack.c.l.bf16 %v448
      %v481 = vunpack.c.l.bf16 %v449
      %v482 = vunpack.c.l.bf16 %v450
      %v483 = vunpack.c.l.bf16 %v451
      %v484 = vunpack.c.l.bf16 %v452
      %v485 = vunpack.c.l.bf16 %v453
      %v486 = vunpack.c.l.bf16 %v454
      %v487 = vunpack.c.l.bf16 %v455
      %v488 = vunpack.c.l.bf16 %v456
      %v489 = vunpack.c.l.bf16 %v457
      %v490 = vunpack.c.l.bf16 %v458
      %v491 = vunpack.c.l.bf16 %v459
      %s492 = scalar_lea.vmem [#allocation2], 32
      %493 = vst [vmem:[%s492 + $0x8] sm:$0xff] %v460
      %494 = vst [vmem:[%s492 + $0x10] sm:$0xff] %v461
      %495 = vst [vmem:[%s492 + $0x28] sm:$0xff] %v462
      %496 = vst [vmem:[%s492 + $0x30] sm:$0xff] %v463
      %497 = vst [vmem:[%s492 + $0x48] sm:$0xff] %v464
      %498 = vst [vmem:[%s492 + $0x50] sm:$0xff] %v465
      %499 = vst [vmem:[%s492 + $0x68] sm:$0xff] %v466
      %500 = vst [vmem:[%s492 + $0x70] sm:$0xff] %v467
      %501 = vst [vmem:[%s492 + $0x88] sm:$0xff] %v468
      %502 = vst [vmem:[%s492 + $0x90] sm:$0xff] %v469
      %503 = vst [vmem:[%s492 + $0xa8] sm:$0xff] %v470
      %504 = vst [vmem:[%s492 + $0xb0] sm:$0xff] %v471
      %505 = vst [vmem:[%s492 + $0xc8] sm:$0xff] %v472
      %506 = vst [vmem:[%s492 + $0xd0] sm:$0xff] %v473
      %507 = vst [vmem:[%s492 + $0xe8] sm:$0xff] %v474
      %508 = vst [vmem:[%s492 + $0xf0] sm:$0xff] %v475
      %509 = vst [vmem:[%s492 + $0x108] sm:$0xff] %v476
      %510 = vst [vmem:[%s492 + $0x110] sm:$0xff] %v477
      %511 = vst [vmem:[%s492 + $0x128] sm:$0xff] %v478
      %512 = vst [vmem:[%s492 + $0x130] sm:$0xff] %v479
      %513 = vst [vmem:[%s492 + $0x148] sm:$0xff] %v480
      %514 = vst [vmem:[%s492 + $0x150] sm:$0xff] %v481
      %515 = vst [vmem:[%s492 + $0x168] sm:$0xff] %v482
      %516 = vst [vmem:[%s492 + $0x170] sm:$0xff] %v483
      %517 = vst [vmem:[%s492 + $0x188] sm:$0xff] %v484
      %518 = vst [vmem:[%s492 + $0x190] sm:$0xff] %v485
      %519 = vst [vmem:[%s492 + $0x1a8] sm:$0xff] %v486
      %520 = vst [vmem:[%s492 + $0x1b0] sm:$0xff] %v487
      %521 = vst [vmem:[%s492 + $0x1c8] sm:$0xff] %v488
      %522 = vst [vmem:[%s492 + $0x1d0] sm:$0xff] %v489
      %523 = vst [vmem:[%s492 + $0x1e8] sm:$0xff] %v490
      %524 = vst [vmem:[%s492 + $0x1f0] sm:$0xff] %v491
      %v525 = vld [vmem:[%s359] sm:$0xf]
      %v526 = vld [vmem:[%s359 + $0x4] sm:$0xf]
      %v527 = vunpack.c.l.bf16 %v525
      %v528 = vunpack.c.l.bf16 %v526
      %p529 = scmp.eq.s32.totalorder %s21, 0
      %s530 = scalar_select %p529, 1, 0
      %v531 = vstv %s530
      %vm532 = vcmp.eq.s32.totalorder %v531, 1
      %v533 = vsel %vm532, 0.0, %v527
      %v534 = vsel %vm532, 0.0, %v528
      %535 = vst [vmem:[#allocation2 + $0x8] sm:$0xff] %v533
      %536 = vst [vmem:[#allocation2 + $0x10] sm:$0xff] %v534
      %s537 = scalar_lea.vmem [#allocation2], 7
      %v538 = vld [vmem:[%s537] ss:$2 sm:$0xff]
      %s539 = scalar_lea.vmem [#allocation2], 71
      %v540 = vld [vmem:[%s539] ss:$2 sm:$0xff]
      %s541 = scalar_lea.vmem [#allocation2], 135
      %v542 = vld [vmem:[%s541] ss:$2 sm:$0xff]
      %s543 = scalar_lea.vmem [#allocation2], 199
      %v544 = vld [vmem:[%s543] ss:$2 sm:$0xff]
      %s545 = scalar_lea.vmem [#allocation2], 263
      %v546 = vld [vmem:[%s545] ss:$2 sm:$0xff]
      %s547 = scalar_lea.vmem [#allocation2], 327
      %v548 = vld [vmem:[%s547] ss:$2 sm:$0xff]
      %s549 = scalar_lea.vmem [#allocation2], 391
      %v550 = vld [vmem:[%s549] ss:$2 sm:$0xff]
      %s551 = scalar_lea.vmem [#allocation2], 455
      %v552 = vld [vmem:[%s551] ss:$2 sm:$0xff]
      %s553 = scalar_lea.vmem [#allocation2], 8
      %v554 = vld [vmem:[%s553] ss:$2 sm:$0xff]
      %s555 = scalar_lea.vmem [#allocation2], 72
      %v556 = vld [vmem:[%s555] ss:$2 sm:$0xff]
      %s557 = scalar_lea.vmem [#allocation2], 136
      %v558 = vld [vmem:[%s557] ss:$2 sm:$0xff]
      %s559 = scalar_lea.vmem [#allocation2], 200
      %v560 = vld [vmem:[%s559] ss:$2 sm:$0xff]
      %s561 = scalar_lea.vmem [#allocation2], 264
      %v562 = vld [vmem:[%s561] ss:$2 sm:$0xff]
      %s563 = scalar_lea.vmem [#allocation2], 328
      %v564 = vld [vmem:[%s563] ss:$2 sm:$0xff]
      %s565 = scalar_lea.vmem [#allocation2], 392
      %v566 = vld [vmem:[%s565] ss:$2 sm:$0xff]
      %s567 = scalar_lea.vmem [#allocation2], 456
      %v568 = vld [vmem:[%s567] ss:$2 sm:$0xff]
      %s569 = scalar_lea.vmem [#allocation2], 9
      %v570 = vld [vmem:[%s569] ss:$2 sm:$0xff]
      %s571 = scalar_lea.vmem [#allocation2], 73
      %v572 = vld [vmem:[%s571] ss:$2 sm:$0xff]
      %s573 = scalar_lea.vmem [#allocation2], 137
      %v574 = vld [vmem:[%s573] ss:$2 sm:$0xff]
      %s575 = scalar_lea.vmem [#allocation2], 201
      %v576 = vld [vmem:[%s575] ss:$2 sm:$0xff]
      %s577 = scalar_lea.vmem [#allocation2], 265
      %v578 = vld [vmem:[%s577] ss:$2 sm:$0xff]
      %s579 = scalar_lea.vmem [#allocation2], 329
      %v580 = vld [vmem:[%s579] ss:$2 sm:$0xff]
      %s581 = scalar_lea.vmem [#allocation2], 393
      %v582 = vld [vmem:[%s581] ss:$2 sm:$0xff]
      %s583 = scalar_lea.vmem [#allocation2], 457
      %v584 = vld [vmem:[%s583] ss:$2 sm:$0xff]
      %v585 = vpack.c.bf16 %v540, %v538
      %v586 = vpack.c.bf16 %v556, %v554
      %v587 = vpack.c.bf16 %v572, %v570
      %v588 = vpack.c.bf16 %v544, %v542
      %v589 = vpack.c.bf16 %v560, %v558
      %v590 = vpack.c.bf16 %v576, %v574
      %v591 = vpack.c.bf16 %v548, %v546
      %v592 = vpack.c.bf16 %v564, %v562
      %v593 = vpack.c.bf16 %v580, %v578
      %v594 = vpack.c.bf16 %v552, %v550
      %v595 = vpack.c.bf16 %v568, %v566
      %v596 = vpack.c.bf16 %v584, %v582
      %v597 = vld [vmem:[%s3] sm:$0xf]
      %v598 = vld [vmem:[%s3 + $0x4] sm:$0xf]
      %v599 = vld [vmem:[%s3 + $0x8] sm:$0xf]
      %v600 = vld [vmem:[%s3 + $0xc] sm:$0xf]
      %v601 = vld [vmem:[%s3 + $0x10] sm:$0xf]
      %v602 = vld [vmem:[%s3 + $0x14] sm:$0xf]
      %v603 = vld [vmem:[%s3 + $0x18] sm:$0xf]
      %v604 = vld [vmem:[%s3 + $0x1c] sm:$0xf]
      %v605 = vld [vmem:[%s3 + $0x20] sm:$0xf]
      %v606 = vld [vmem:[%s3 + $0x24] sm:$0xf]
      %v607 = vld [vmem:[%s3 + $0x28] sm:$0xf]
      %v608 = vld [vmem:[%s3 + $0x2c] sm:$0xf]
      %v609 = vld [vmem:[%s3 + $0x30] sm:$0xf]
      %v610 = vld [vmem:[%s3 + $0x34] sm:$0xf]
      %v611 = vld [vmem:[%s3 + $0x38] sm:$0xf]
      %v612 = vld [vmem:[%s3 + $0x3c] sm:$0xf]
      %v613 = vld [vmem:[%s3 + $0x40] sm:$0xf]
      %v614 = vld [vmem:[%s3 + $0x44] sm:$0xf]
      %v615 = vld [vmem:[%s3 + $0x48] sm:$0xf]
      %v616 = vld [vmem:[%s3 + $0x4c] sm:$0xf]
      %v617 = vld [vmem:[%s3 + $0x50] sm:$0xf]
      %v618 = vld [vmem:[%s3 + $0x54] sm:$0xf]
      %v619 = vld [vmem:[%s3 + $0x58] sm:$0xf]
      %v620 = vld [vmem:[%s3 + $0x5c] sm:$0xf]
      %v621 = vld [vmem:[%s3 + $0x60] sm:$0xf]
      %v622 = vld [vmem:[%s3 + $0x64] sm:$0xf]
      %v623 = vld [vmem:[%s3 + $0x68] sm:$0xf]
      %v624 = vld [vmem:[%s3 + $0x6c] sm:$0xf]
      %v625 = vld [vmem:[%s3 + $0x70] sm:$0xf]
      %v626 = vld [vmem:[%s3 + $0x74] sm:$0xf]
      %v627 = vld [vmem:[%s3 + $0x78] sm:$0xf]
      %v628 = vld [vmem:[%s3 + $0x7c] sm:$0xf]
      %v629 = vld [vmem:[%s3 + $0x80] sm:$0xf]
      %v630 = vld [vmem:[%s3 + $0x84] sm:$0xf]
      %v631 = vld [vmem:[%s3 + $0x88] sm:$0xf]
      %v632 = vld [vmem:[%s3 + $0x8c] sm:$0xf]
      %v633 = vld [vmem:[%s3 + $0x90] sm:$0xf]
      %v634 = vld [vmem:[%s3 + $0x94] sm:$0xf]
      %v635 = vld [vmem:[%s3 + $0x98] sm:$0xf]
      %v636 = vld [vmem:[%s3 + $0x9c] sm:$0xf]
      %v637 = vld [vmem:[%s3 + $0xa0] sm:$0xf]
      %v638 = vld [vmem:[%s3 + $0xa4] sm:$0xf]
      %v639 = vld [vmem:[%s3 + $0xa8] sm:$0xf]
      %v640 = vld [vmem:[%s3 + $0xac] sm:$0xf]
      %v641 = vld [vmem:[%s3 + $0xb0] sm:$0xf]
      %v642 = vld [vmem:[%s3 + $0xb4] sm:$0xf]
      %v643 = vld [vmem:[%s3 + $0xb8] sm:$0xf]
      %v644 = vld [vmem:[%s3 + $0xbc] sm:$0xf]
      %s645 = scalar_lea.vmem %s492, 7 [#allocation2]
      %v646 = vld [vmem:[%s645] ss:$2 sm:$0xff]
      %s647 = scalar_lea.vmem %s492, 71 [#allocation2]
      %v648 = vld [vmem:[%s647] ss:$2 sm:$0xff]
      %s649 = scalar_lea.vmem %s492, 135 [#allocation2]
      %v650 = vld [vmem:[%s649] ss:$2 sm:$0xff]
      %s651 = scalar_lea.vmem %s492, 199 [#allocation2]
      %v652 = vld [vmem:[%s651] ss:$2 sm:$0xff]
      %s653 = scalar_lea.vmem %s492, 263 [#allocation2]
      %v654 = vld [vmem:[%s653] ss:$2 sm:$0xff]
      %s655 = scalar_lea.vmem %s492, 327 [#allocation2]
      %v656 = vld [vmem:[%s655] ss:$2 sm:$0xff]
      %s657 = scalar_lea.vmem %s492, 391 [#allocation2]
      %v658 = vld [vmem:[%s657] ss:$2 sm:$0xff]
      %s659 = scalar_lea.vmem %s492, 455 [#allocation2]
      %v660 = vld [vmem:[%s659] ss:$2 sm:$0xff]
      %s661 = scalar_lea.vmem %s492, 8 [#allocation2]
      %v662 = vld [vmem:[%s661] ss:$2 sm:$0xff]
      %s663 = scalar_lea.vmem %s492, 72 [#allocation2]
      %v664 = vld [vmem:[%s663] ss:$2 sm:$0xff]
      %s665 = scalar_lea.vmem %s492, 136 [#allocation2]
      %v666 = vld [vmem:[%s665] ss:$2 sm:$0xff]
      %s667 = scalar_lea.vmem %s492, 200 [#allocation2]
      %v668 = vld [vmem:[%s667] ss:$2 sm:$0xff]
      %s669 = scalar_lea.vmem %s492, 264 [#allocation2]
      %v670 = vld [vmem:[%s669] ss:$2 sm:$0xff]
      %s671 = scalar_lea.vmem %s492, 328 [#allocation2]
      %v672 = vld [vmem:[%s671] ss:$2 sm:$0xff]
      %s673 = scalar_lea.vmem %s492, 392 [#allocation2]
      %v674 = vld [vmem:[%s673] ss:$2 sm:$0xff]
      %s675 = scalar_lea.vmem %s492, 456 [#allocation2]
      %v676 = vld [vmem:[%s675] ss:$2 sm:$0xff]
      %s677 = scalar_lea.vmem %s492, 9 [#allocation2]
      %v678 = vld [vmem:[%s677] ss:$2 sm:$0xff]
      %s679 = scalar_lea.vmem %s492, 73 [#allocation2]
      %v680 = vld [vmem:[%s679] ss:$2 sm:$0xff]
      %s681 = scalar_lea.vmem %s492, 137 [#allocation2]
      %v682 = vld [vmem:[%s681] ss:$2 sm:$0xff]
      %s683 = scalar_lea.vmem %s492, 201 [#allocation2]
      %v684 = vld [vmem:[%s683] ss:$2 sm:$0xff]
      %s685 = scalar_lea.vmem %s492, 265 [#allocation2]
      %v686 = vld [vmem:[%s685] ss:$2 sm:$0xff]
      %s687 = scalar_lea.vmem %s492, 329 [#allocation2]
      %v688 = vld [vmem:[%s687] ss:$2 sm:$0xff]
      %s689 = scalar_lea.vmem %s492, 393 [#allocation2]
      %v690 = vld [vmem:[%s689] ss:$2 sm:$0xff]
      %s691 = scalar_lea.vmem %s492, 457 [#allocation2]
      %v692 = vld [vmem:[%s691] ss:$2 sm:$0xff]
      %v693 = vpack.c.bf16 %v648, %v646
      %v694 = vpack.c.bf16 %v664, %v662
      %v695 = vpack.c.bf16 %v680, %v678
      %v696 = vpack.c.bf16 %v652, %v650
      %v697 = vpack.c.bf16 %v668, %v666
      %v698 = vpack.c.bf16 %v684, %v682
      %v699 = vpack.c.bf16 %v656, %v654
      %v700 = vpack.c.bf16 %v672, %v670
      %v701 = vpack.c.bf16 %v688, %v686
      %v702 = vpack.c.bf16 %v660, %v658
      %v703 = vpack.c.bf16 %v676, %v674
      %v704 = vpack.c.bf16 %v692, %v690
      %s705 = scalar_lea.vmem %s3, 192
      %v706 = vld [vmem:[%s705] sm:$0xf]
      %v707 = vld [vmem:[%s705 + $0x4] sm:$0xf]
      %v708 = vld [vmem:[%s705 + $0x8] sm:$0xf]
      %v709 = vld [vmem:[%s705 + $0xc] sm:$0xf]
      %v710 = vld [vmem:[%s705 + $0x10] sm:$0xf]
      %v711 = vld [vmem:[%s705 + $0x14] sm:$0xf]
      %v712 = vld [vmem:[%s705 + $0x18] sm:$0xf]
      %v713 = vld [vmem:[%s705 + $0x1c] sm:$0xf]
      %v714 = vld [vmem:[%s705 + $0x20] sm:$0xf]
      %v715 = vld [vmem:[%s705 + $0x24] sm:$0xf]
      %v716 = vld [vmem:[%s705 + $0x28] sm:$0xf]
      %v717 = vld [vmem:[%s705 + $0x2c] sm:$0xf]
      %v718 = vld [vmem:[%s705 + $0x30] sm:$0xf]
      %v719 = vld [vmem:[%s705 + $0x34] sm:$0xf]
      %v720 = vld [vmem:[%s705 + $0x38] sm:$0xf]
      %v721 = vld [vmem:[%s705 + $0x3c] sm:$0xf]
      %v722 = vld [vmem:[%s705 + $0x40] sm:$0xf]
      %v723 = vld [vmem:[%s705 + $0x44] sm:$0xf]
      %v724 = vld [vmem:[%s705 + $0x48] sm:$0xf]
      %v725 = vld [vmem:[%s705 + $0x4c] sm:$0xf]
      %v726 = vld [vmem:[%s705 + $0x50] sm:$0xf]
      %v727 = vld [vmem:[%s705 + $0x54] sm:$0xf]
      %v728 = vld [vmem:[%s705 + $0x58] sm:$0xf]
      %v729 = vld [vmem:[%s705 + $0x5c] sm:$0xf]
      %v730 = vld [vmem:[%s705 + $0x60] sm:$0xf]
      %v731 = vld [vmem:[%s705 + $0x64] sm:$0xf]
      %v732 = vld [vmem:[%s705 + $0x68] sm:$0xf]
      %v733 = vld [vmem:[%s705 + $0x6c] sm:$0xf]
      %v734 = vld [vmem:[%s705 + $0x70] sm:$0xf]
      %v735 = vld [vmem:[%s705 + $0x74] sm:$0xf]
      %v736 = vld [vmem:[%s705 + $0x78] sm:$0xf]
      %v737 = vld [vmem:[%s705 + $0x7c] sm:$0xf]
      %v738 = vld [vmem:[%s705 + $0x80] sm:$0xf]
      %v739 = vld [vmem:[%s705 + $0x84] sm:$0xf]
      %v740 = vld [vmem:[%s705 + $0x88] sm:$0xf]
      %v741 = vld [vmem:[%s705 + $0x8c] sm:$0xf]
      %v742 = vld [vmem:[%s705 + $0x90] sm:$0xf]
      %v743 = vld [vmem:[%s705 + $0x94] sm:$0xf]
      %v744 = vld [vmem:[%s705 + $0x98] sm:$0xf]
      %v745 = vld [vmem:[%s705 + $0x9c] sm:$0xf]
      %v746 = vld [vmem:[%s705 + $0xa0] sm:$0xf]
      %v747 = vld [vmem:[%s705 + $0xa4] sm:$0xf]
      %v748 = vld [vmem:[%s705 + $0xa8] sm:$0xf]
      %v749 = vld [vmem:[%s705 + $0xac] sm:$0xf]
      %v750 = vld [vmem:[%s705 + $0xb0] sm:$0xf]
      %v751 = vld [vmem:[%s705 + $0xb4] sm:$0xf]
      %v752 = vld [vmem:[%s705 + $0xb8] sm:$0xf]
      %v753 = vld [vmem:[%s705 + $0xbc] sm:$0xf]
      %v802 = vunpack.c.l.b16 %v706
      %v803 = vunpack.c.l.b16 %v707
      %v804 = vunpack.c.l.b16 %v708
      %v805 = vunpack.c.l.b16 %v709
      %v806 = vunpack.c.l.b16 %v710
      %v807 = vunpack.c.l.b16 %v711
      %v808 = vunpack.c.l.b16 %v712
      %v809 = vunpack.c.l.b16 %v713
      %v810 = vunpack.c.l.b16 %v714
      %v811 = vunpack.c.l.b16 %v715
      %v812 = vunpack.c.l.b16 %v716
      %v813 = vunpack.c.l.b16 %v717
      %v814 = vunpack.c.l.b16 %v718
      %v815 = vunpack.c.l.b16 %v719
      %v816 = vunpack.c.l.b16 %v720
      %v817 = vunpack.c.l.b16 %v721
      %v818 = vunpack.c.l.b16 %v722
      %v819 = vunpack.c.l.b16 %v723
      %v820 = vunpack.c.l.b16 %v724
      %v821 = vunpack.c.l.b16 %v725
      %v822 = vunpack.c.l.b16 %v726
      %v823 = vunpack.c.l.b16 %v727
      %v824 = vunpack.c.l.b16 %v728
      %v825 = vunpack.c.l.b16 %v729
      %v826 = vunpack.c.l.b16 %v730
      %v827 = vunpack.c.l.b16 %v731
      %v828 = vunpack.c.l.b16 %v732
      %v829 = vunpack.c.l.b16 %v733
      %v830 = vunpack.c.l.b16 %v734
      %v831 = vunpack.c.l.b16 %v735
      %v832 = vunpack.c.l.b16 %v736
      %v833 = vunpack.c.l.b16 %v737
      %v834 = vunpack.c.l.b16 %v738
      %v835 = vunpack.c.l.b16 %v739
      %v836 = vunpack.c.l.b16 %v740
      %v837 = vunpack.c.l.b16 %v741
      %v838 = vunpack.c.l.b16 %v742
      %v839 = vunpack.c.l.b16 %v743
      %v840 = vunpack.c.l.b16 %v744
      %v841 = vunpack.c.l.b16 %v745
      %v842 = vunpack.c.l.b16 %v746
      %v843 = vunpack.c.l.b16 %v747
      %v844 = vunpack.c.l.b16 %v748
      %v845 = vunpack.c.l.b16 %v749
      %v846 = vunpack.c.l.b16 %v750
      %v847 = vunpack.c.l.b16 %v751
      %v848 = vunpack.c.l.b16 %v752
      %v849 = vunpack.c.l.b16 %v753
      %v850 = vpack.c.b16 %v803, %v802
      %v851 = vpack.c.b16 %v805, %v804
      %v852 = vpack.c.b16 %v807, %v806
      %v853 = vpack.c.b16 %v809, %v808
      %v854 = vpack.c.b16 %v811, %v810
      %v855 = vpack.c.b16 %v813, %v812
      %v856 = vpack.c.b16 %v815, %v814
      %v857 = vpack.c.b16 %v817, %v816
      %v858 = vpack.c.b16 %v819, %v818
      %v859 = vpack.c.b16 %v821, %v820
      %v860 = vpack.c.b16 %v823, %v822
      %v861 = vpack.c.b16 %v825, %v824
      %v862 = vpack.c.b16 %v827, %v826
      %v863 = vpack.c.b16 %v829, %v828
      %v864 = vpack.c.b16 %v831, %v830
      %v865 = vpack.c.b16 %v833, %v832
      %v866 = vpack.c.b16 %v835, %v834
      %v867 = vpack.c.b16 %v837, %v836
      %v868 = vpack.c.b16 %v839, %v838
      %v869 = vpack.c.b16 %v841, %v840
      %v870 = vpack.c.b16 %v843, %v842
      %v871 = vpack.c.b16 %v845, %v844
      %v872 = vpack.c.b16 %v847, %v846
      %v873 = vpack.c.b16 %v849, %v848
      %898 = vmatprep.subr.bf16.mxu0 0
      %899 = vmatpush1.bf16.msra.mxu0 %v857
      %900 = vmatprep.subr.bf16.mxu0 0
      %901 = vmatpush1.bf16.msra.mxu0 %v856
      %902 = vmatprep.subr.bf16.mxu0 0
      %903 = vmatpush1.bf16.msra.mxu0 %v855
      %904 = vmatprep.subr.bf16.mxu0 0
      %905 = vmatpush1.bf16.msra.mxu0 %v854
      %906 = vmatprep.subr.bf16.mxu0 0
      %907 = vmatpush1.bf16.msra.mxu0 %v853
      %908 = vmatprep.subr.bf16.mxu0 0
      %909 = vmatpush1.bf16.msra.mxu0 %v852
      %910 = vmatprep.subr.bf16.mxu0 0
      %911 = vmatpush1.bf16.msra.mxu0 %v851
      %912 = vmatprep.subr.bf16.mxu0 0
      %913 = vmatpush1.bf16.msra.mxu0 %v850
      %914 = vmatprep.subr.bf16.mxu0 0
      %915 = vmatpush2.bf16.msra.mxu0 %v865
      %916 = vmatprep.subr.bf16.mxu0 0
      %917 = vmatpush2.bf16.msra.mxu0 %v864
      %918 = vmatprep.subr.bf16.mxu0 0
      %919 = vmatpush2.bf16.msra.mxu0 %v863
      %920 = vmatprep.subr.bf16.mxu0 0
      %921 = vmatpush2.bf16.msra.mxu0 %v862
      %922 = vmatprep.subr.bf16.mxu0 0
      %923 = vmatpush2.bf16.msra.mxu0 %v861
      %924 = vmatprep.subr.bf16.mxu0 0
      %925 = vmatpush2.bf16.msra.mxu0 %v860
      %926 = vmatprep.subr.bf16.mxu0 0
      %927 = vmatpush2.bf16.msra.mxu0 %v859
      %928 = vmatprep.subr.bf16.mxu0 0
      %929 = vmatpush2.bf16.msra.mxu0 %v858
      %930 = vmatprep.mubr.bf16.mxu0 %v694
      %931 = vmatmul.mubr.bf16.gmra.mxu0 %v693
      %v932 = vpop.f32.mrf.mxu0
      %v933 = vadd.f32 0.0, %v932
      %v934 = vpop.f32.mrf.mxu0
      %v935 = vpop.f32.mrf.mxu0
      %v936 = vadd.f32 0.0, %v935
      %v937 = vpop.f32.mrf.mxu0
      %938 = vmatprep.mubr.bf16.mxu0 %v697
      %939 = vmatmul.mubr.bf16.gmra.mxu0 %v696
      %v940 = vpop.f32.mrf.mxu0
      %v941 = vadd.f32 0.0, %v940
      %v942 = vpop.f32.mrf.mxu0
      %v943 = vpop.f32.mrf.mxu0
      %v944 = vadd.f32 0.0, %v943
      %v945 = vpop.f32.mrf.mxu0
      %946 = vmatprep.mubr.bf16.mxu0 %v700
      %947 = vmatmul.mubr.bf16.gmra.mxu0 %v699
      %v948 = vpop.f32.mrf.mxu0
      %v949 = vadd.f32 0.0, %v948
      %v950 = vpop.f32.mrf.mxu0
      %v951 = vpop.f32.mrf.mxu0
      %v952 = vadd.f32 0.0, %v951
      %v953 = vpop.f32.mrf.mxu0
      %954 = vmatprep.mubr.bf16.mxu0 %v703
      %955 = vmatmul.mubr.bf16.gmra.mxu0 %v702
      %v956 = vpop.f32.mrf.mxu0
      %v957 = vadd.f32 0.0, %v956
      %v958 = vpop.f32.mrf.mxu0
      %v959 = vpop.f32.mrf.mxu0
      %v960 = vadd.f32 0.0, %v959
      %v961 = vpop.f32.mrf.mxu0
      %962 = vdwg.mxu0
      %963 = vmatprep.subr.bf16.mxu0 0
      %964 = vmatpush1.bf16.msra.mxu0 %v873
      %965 = vmatprep.subr.bf16.mxu0 0
      %966 = vmatpush1.bf16.msra.mxu0 %v872
      %967 = vmatprep.subr.bf16.mxu0 0
      %968 = vmatpush1.bf16.msra.mxu0 %v871
      %969 = vmatprep.subr.bf16.mxu0 0
      %970 = vmatpush1.bf16.msra.mxu0 %v870
      %971 = vmatprep.subr.bf16.mxu0 0
      %972 = vmatpush1.bf16.msra.mxu0 %v869
      %973 = vmatprep.subr.bf16.mxu0 0
      %974 = vmatpush1.bf16.msra.mxu0 %v868
      %975 = vmatprep.subr.bf16.mxu0 0
      %976 = vmatpush1.bf16.msra.mxu0 %v867
      %977 = vmatprep.subr.bf16.mxu0 0
      %978 = vmatpush1.bf16.msra.mxu0 %v866
      %979 = vmatprep.subr.bf16.mxu0 0
      %980 = vmatpush2.bf16.msra.mxu0 0
      %981 = vmatprep.subr.bf16.mxu0 0
      %982 = vmatpush2.bf16.msra.mxu0 0
      %983 = vmatprep.subr.bf16.mxu0 0
      %984 = vmatpush2.bf16.msra.mxu0 0
      %985 = vmatprep.subr.bf16.mxu0 0
      %986 = vmatpush2.bf16.msra.mxu0 0
      %987 = vmatprep.subr.bf16.mxu0 0
      %988 = vmatpush2.bf16.msra.mxu0 0
      %989 = vmatprep.subr.bf16.mxu0 0
      %990 = vmatpush2.bf16.msra.mxu0 0
      %991 = vmatprep.subr.bf16.mxu0 0
      %992 = vmatpush2.bf16.msra.mxu0 0
      %993 = vmatprep.subr.bf16.mxu0 0
      %994 = vmatpush2.bf16.msra.mxu0 0
      %995 = vmatprep.mubr.bf16.mxu0 0
      %996 = vmatmul.mubr.bf16.gmra.mxu0 %v695
      %v997 = vpop.f32.mrf.mxu0
      %v998 = vadd.f32 %v933, %v997
      %v999 = vpop.f32.mrf.mxu0
      %v1000 = vpop.f32.mrf.mxu0
      %v1001 = vadd.f32 %v936, %v1000
      %v1002 = vpop.f32.mrf.mxu0
      %1003 = vmatprep.mubr.bf16.mxu0 0
      %1004 = vmatmul.mubr.bf16.gmra.mxu0 %v698
      %v1005 = vpop.f32.mrf.mxu0
      %v1006 = vadd.f32 %v941, %v1005
      %v1007 = vpop.f32.mrf.mxu0
      %v1008 = vpop.f32.mrf.mxu0
      %v1009 = vadd.f32 %v944, %v1008
      %v1010 = vpop.f32.mrf.mxu0
      %1011 = vmatprep.mubr.bf16.mxu0 0
      %1012 = vmatmul.mubr.bf16.gmra.mxu0 %v701
      %v1013 = vpop.f32.mrf.mxu0
      %v1014 = vadd.f32 %v949, %v1013
      %v1015 = vpop.f32.mrf.mxu0
      %v1016 = vpop.f32.mrf.mxu0
      %v1017 = vadd.f32 %v952, %v1016
      %v1018 = vpop.f32.mrf.mxu0
      %1019 = vmatprep.mubr.bf16.mxu0 0
      %1020 = vmatmul.mubr.bf16.gmra.mxu0 %v704
      %v1021 = vpop.f32.mrf.mxu0
      %v1022 = vadd.f32 %v957, %v1021
      %v1023 = vpop.f32.mrf.mxu0
      %v1024 = vpop.f32.mrf.mxu0
      %v1025 = vadd.f32 %v960, %v1024
      %v1026 = vpop.f32.mrf.mxu0
      %1027 = vdwg.mxu0
      %v1076 = vunpack.c.l.b16 %v597
      %v1077 = vunpack.c.l.b16 %v598
      %v1078 = vunpack.c.l.b16 %v599
      %v1079 = vunpack.c.l.b16 %v600
      %v1080 = vunpack.c.l.b16 %v601
      %v1081 = vunpack.c.l.b16 %v602
      %v1082 = vunpack.c.l.b16 %v603
      %v1083 = vunpack.c.l.b16 %v604
      %v1084 = vunpack.c.l.b16 %v605
      %v1085 = vunpack.c.l.b16 %v606
      %v1086 = vunpack.c.l.b16 %v607
      %v1087 = vunpack.c.l.b16 %v608
      %v1088 = vunpack.c.l.b16 %v609
      %v1089 = vunpack.c.l.b16 %v610
      %v1090 = vunpack.c.l.b16 %v611
      %v1091 = vunpack.c.l.b16 %v612
      %v1092 = vunpack.c.l.b16 %v613
      %v1093 = vunpack.c.l.b16 %v614
      %v1094 = vunpack.c.l.b16 %v615
      %v1095 = vunpack.c.l.b16 %v616
      %v1096 = vunpack.c.l.b16 %v617
      %v1097 = vunpack.c.l.b16 %v618
      %v1098 = vunpack.c.l.b16 %v619
      %v1099 = vunpack.c.l.b16 %v620
      %v1100 = vunpack.c.l.b16 %v621
      %v1101 = vunpack.c.l.b16 %v622
      %v1102 = vunpack.c.l.b16 %v623
      %v1103 = vunpack.c.l.b16 %v624
      %v1104 = vunpack.c.l.b16 %v625
      %v1105 = vunpack.c.l.b16 %v626
      %v1106 = vunpack.c.l.b16 %v627
      %v1107 = vunpack.c.l.b16 %v628
      %v1108 = vunpack.c.l.b16 %v629
      %v1109 = vunpack.c.l.b16 %v630
      %v1110 = vunpack.c.l.b16 %v631
      %v1111 = vunpack.c.l.b16 %v632
      %v1112 = vunpack.c.l.b16 %v633
      %v1113 = vunpack.c.l.b16 %v634
      %v1114 = vunpack.c.l.b16 %v635
      %v1115 = vunpack.c.l.b16 %v636
      %v1116 = vunpack.c.l.b16 %v637
      %v1117 = vunpack.c.l.b16 %v638
      %v1118 = vunpack.c.l.b16 %v639
      %v1119 = vunpack.c.l.b16 %v640
      %v1120 = vunpack.c.l.b16 %v641
      %v1121 = vunpack.c.l.b16 %v642
      %v1122 = vunpack.c.l.b16 %v643
      %v1123 = vunpack.c.l.b16 %v644
      %v1124 = vpack.c.b16 %v1077, %v1076
      %v1125 = vpack.c.b16 %v1079, %v1078
      %v1126 = vpack.c.b16 %v1081, %v1080
      %v1127 = vpack.c.b16 %v1083, %v1082
      %v1128 = vpack.c.b16 %v1085, %v1084
      %v1129 = vpack.c.b16 %v1087, %v1086
      %v1130 = vpack.c.b16 %v1089, %v1088
      %v1131 = vpack.c.b16 %v1091, %v1090
      %v1132 = vpack.c.b16 %v1093, %v1092
      %v1133 = vpack.c.b16 %v1095, %v1094
      %v1134 = vpack.c.b16 %v1097, %v1096
      %v1135 = vpack.c.b16 %v1099, %v1098
      %v1136 = vpack.c.b16 %v1101, %v1100
      %v1137 = vpack.c.b16 %v1103, %v1102
      %v1138 = vpack.c.b16 %v1105, %v1104
      %v1139 = vpack.c.b16 %v1107, %v1106
      %v1140 = vpack.c.b16 %v1109, %v1108
      %v1141 = vpack.c.b16 %v1111, %v1110
      %v1142 = vpack.c.b16 %v1113, %v1112
      %v1143 = vpack.c.b16 %v1115, %v1114
      %v1144 = vpack.c.b16 %v1117, %v1116
      %v1145 = vpack.c.b16 %v1119, %v1118
      %v1146 = vpack.c.b16 %v1121, %v1120
      %v1147 = vpack.c.b16 %v1123, %v1122
      %1172 = vmatprep.subr.bf16.mxu0 0
      %1173 = vmatpush1.bf16.msra.mxu0 %v1131
      %1174 = vmatprep.subr.bf16.mxu0 0
      %1175 = vmatpush1.bf16.msra.mxu0 %v1130
      %1176 = vmatprep.subr.bf16.mxu0 0
      %1177 = vmatpush1.bf16.msra.mxu0 %v1129
      %1178 = vmatprep.subr.bf16.mxu0 0
      %1179 = vmatpush1.bf16.msra.mxu0 %v1128
      %1180 = vmatprep.subr.bf16.mxu0 0
      %1181 = vmatpush1.bf16.msra.mxu0 %v1127
      %1182 = vmatprep.subr.bf16.mxu0 0
      %1183 = vmatpush1.bf16.msra.mxu0 %v1126
      %1184 = vmatprep.subr.bf16.mxu0 0
      %1185 = vmatpush1.bf16.msra.mxu0 %v1125
      %1186 = vmatprep.subr.bf16.mxu0 0
      %1187 = vmatpush1.bf16.msra.mxu0 %v1124
      %1188 = vmatprep.subr.bf16.mxu0 0
      %1189 = vmatpush2.bf16.msra.mxu0 %v1139
      %1190 = vmatprep.subr.bf16.mxu0 0
      %1191 = vmatpush2.bf16.msra.mxu0 %v1138
      %1192 = vmatprep.subr.bf16.mxu0 0
      %1193 = vmatpush2.bf16.msra.mxu0 %v1137
      %1194 = vmatprep.subr.bf16.mxu0 0
      %1195 = vmatpush2.bf16.msra.mxu0 %v1136
      %1196 = vmatprep.subr.bf16.mxu0 0
      %1197 = vmatpush2.bf16.msra.mxu0 %v1135
      %1198 = vmatprep.subr.bf16.mxu0 0
      %1199 = vmatpush2.bf16.msra.mxu0 %v1134
      %1200 = vmatprep.subr.bf16.mxu0 0
      %1201 = vmatpush2.bf16.msra.mxu0 %v1133
      %1202 = vmatprep.subr.bf16.mxu0 0
      %1203 = vmatpush2.bf16.msra.mxu0 %v1132
      %1204 = vmatprep.mubr.bf16.mxu0 %v586
      %1205 = vmatmul.mubr.bf16.gmra.mxu0 %v585
      %v1206 = vpop.f32.mrf.mxu0
      %v1207 = vadd.f32 %v998, %v1206
      %v1208 = vpop.f32.mrf.mxu0
      %v1209 = vpop.f32.mrf.mxu0
      %v1210 = vadd.f32 %v1001, %v1209
      %v1211 = vpop.f32.mrf.mxu0
      %1212 = vmatprep.mubr.bf16.mxu0 %v589
      %1213 = vmatmul.mubr.bf16.gmra.mxu0 %v588
      %v1214 = vpop.f32.mrf.mxu0
      %v1215 = vadd.f32 %v1006, %v1214
      %v1216 = vpop.f32.mrf.mxu0
      %v1217 = vpop.f32.mrf.mxu0
      %v1218 = vadd.f32 %v1009, %v1217
      %v1219 = vpop.f32.mrf.mxu0
      %1220 = vmatprep.mubr.bf16.mxu0 %v592
      %1221 = vmatmul.mubr.bf16.gmra.mxu0 %v591
      %v1222 = vpop.f32.mrf.mxu0
      %v1223 = vadd.f32 %v1014, %v1222
      %v1224 = vpop.f32.mrf.mxu0
      %v1225 = vpop.f32.mrf.mxu0
      %v1226 = vadd.f32 %v1017, %v1225
      %v1227 = vpop.f32.mrf.mxu0
      %1228 = vmatprep.mubr.bf16.mxu0 %v595
      %1229 = vmatmul.mubr.bf16.gmra.mxu0 %v594
      %v1230 = vpop.f32.mrf.mxu0
      %v1231 = vadd.f32 %v1022, %v1230
      %v1232 = vpop.f32.mrf.mxu0
      %v1233 = vpop.f32.mrf.mxu0
      %v1234 = vadd.f32 %v1025, %v1233
      %v1235 = vpop.f32.mrf.mxu0
      %1236 = vdwg.mxu0
      %1237 = vmatprep.subr.bf16.mxu0 0
      %1238 = vmatpush1.bf16.msra.mxu0 %v1147
      %1239 = vmatprep.subr.bf16.mxu0 0
      %1240 = vmatpush1.bf16.msra.mxu0 %v1146
      %1241 = vmatprep.subr.bf16.mxu0 0
      %1242 = vmatpush1.bf16.msra.mxu0 %v1145
      %1243 = vmatprep.subr.bf16.mxu0 0
      %1244 = vmatpush1.bf16.msra.mxu0 %v1144
      %1245 = vmatprep.subr.bf16.mxu0 0
      %1246 = vmatpush1.bf16.msra.mxu0 %v1143
      %1247 = vmatprep.subr.bf16.mxu0 0
      %1248 = vmatpush1.bf16.msra.mxu0 %v1142
      %1249 = vmatprep.subr.bf16.mxu0 0
      %1250 = vmatpush1.bf16.msra.mxu0 %v1141
      %1251 = vmatprep.subr.bf16.mxu0 0
      %1252 = vmatpush1.bf16.msra.mxu0 %v1140
      %1253 = vmatprep.subr.bf16.mxu0 0
      %1254 = vmatpush2.bf16.msra.mxu0 0
      %1255 = vmatprep.subr.bf16.mxu0 0
      %1256 = vmatpush2.bf16.msra.mxu0 0
      %1257 = vmatprep.subr.bf16.mxu0 0
      %1258 = vmatpush2.bf16.msra.mxu0 0
      %1259 = vmatprep.subr.bf16.mxu0 0
      %1260 = vmatpush2.bf16.msra.mxu0 0
      %1261 = vmatprep.subr.bf16.mxu0 0
      %1262 = vmatpush2.bf16.msra.mxu0 0
      %1263 = vmatprep.subr.bf16.mxu0 0
      %1264 = vmatpush2.bf16.msra.mxu0 0
      %1265 = vmatprep.subr.bf16.mxu0 0
      %1266 = vmatpush2.bf16.msra.mxu0 0
      %1267 = vmatprep.subr.bf16.mxu0 0
      %1268 = vmatpush2.bf16.msra.mxu0 0
      %1269 = vmatprep.mubr.bf16.mxu0 0
      %1270 = vmatmul.mubr.bf16.gmra.mxu0 %v587
      %v1271 = vpop.f32.mrf.mxu0
      %v1272 = vadd.f32 %v1207, %v1271
      %v1273 = vpop.f32.mrf.mxu0
      %v1274 = vpop.f32.mrf.mxu0
      %v1275 = vadd.f32 %v1210, %v1274
      %v1276 = vpop.f32.mrf.mxu0
      %1277 = vmatprep.mubr.bf16.mxu0 0
      %1278 = vmatmul.mubr.bf16.gmra.mxu0 %v590
      %v1279 = vpop.f32.mrf.mxu0
      %v1280 = vadd.f32 %v1215, %v1279
      %v1281 = vpop.f32.mrf.mxu0
      %v1282 = vpop.f32.mrf.mxu0
      %v1283 = vadd.f32 %v1218, %v1282
      %v1284 = vpop.f32.mrf.mxu0
      %1285 = vmatprep.mubr.bf16.mxu0 0
      %1286 = vmatmul.mubr.bf16.gmra.mxu0 %v593
      %v1287 = vpop.f32.mrf.mxu0
      %v1288 = vadd.f32 %v1223, %v1287
      %v1289 = vpop.f32.mrf.mxu0
      %v1290 = vpop.f32.mrf.mxu0
      %v1291 = vadd.f32 %v1226, %v1290
      %v1292 = vpop.f32.mrf.mxu0
      %1293 = vmatprep.mubr.bf16.mxu0 0
      %1294 = vmatmul.mubr.bf16.gmra.mxu0 %v596
      %v1295 = vpop.f32.mrf.mxu0
      %v1296 = vadd.f32 %v1231, %v1295
      %v1297 = vpop.f32.mrf.mxu0
      %v1298 = vpop.f32.mrf.mxu0
      %v1299 = vadd.f32 %v1234, %v1298
      %v1300 = vpop.f32.mrf.mxu0
      %1301 = vdwg.mxu0
      %s1302 = scalar_lea.vmem [#allocation2], 64
      %s1303 = scalar_lea.vmem %s1302, 7 [#allocation2]
      %v1304 = vld [vmem:[%s1303] ss:$2 sm:$0xff]
      %s1305 = scalar_lea.vmem %s1302, 71 [#allocation2]
      %v1306 = vld [vmem:[%s1305] ss:$2 sm:$0xff]
      %s1307 = scalar_lea.vmem %s1302, 135 [#allocation2]
      %v1308 = vld [vmem:[%s1307] ss:$2 sm:$0xff]
      %s1309 = scalar_lea.vmem %s1302, 199 [#allocation2]
      %v1310 = vld [vmem:[%s1309] ss:$2 sm:$0xff]
      %s1311 = scalar_lea.vmem %s1302, 263 [#allocation2]
      %v1312 = vld [vmem:[%s1311] ss:$2 sm:$0xff]
      %s1313 = scalar_lea.vmem %s1302, 327 [#allocation2]
      %v1314 = vld [vmem:[%s1313] ss:$2 sm:$0xff]
      %s1315 = scalar_lea.vmem %s1302, 391 [#allocation2]
      %v1316 = vld [vmem:[%s1315] ss:$2 sm:$0xff]
      %s1317 = scalar_lea.vmem %s1302, 455 [#allocation2]
      %v1318 = vld [vmem:[%s1317] ss:$2 sm:$0xff]
      %s1319 = scalar_lea.vmem %s1302, 8 [#allocation2]
      %v1320 = vld [vmem:[%s1319] ss:$2 sm:$0xff]
      %s1321 = scalar_lea.vmem %s1302, 72 [#allocation2]
      %v1322 = vld [vmem:[%s1321] ss:$2 sm:$0xff]
      %s1323 = scalar_lea.vmem %s1302, 136 [#allocation2]
      %v1324 = vld [vmem:[%s1323] ss:$2 sm:$0xff]
      %s1325 = scalar_lea.vmem %s1302, 200 [#allocation2]
      %v1326 = vld [vmem:[%s1325] ss:$2 sm:$0xff]
      %s1327 = scalar_lea.vmem %s1302, 264 [#allocation2]
      %v1328 = vld [vmem:[%s1327] ss:$2 sm:$0xff]
      %s1329 = scalar_lea.vmem %s1302, 328 [#allocation2]
      %v1330 = vld [vmem:[%s1329] ss:$2 sm:$0xff]
      %s1331 = scalar_lea.vmem %s1302, 392 [#allocation2]
      %v1332 = vld [vmem:[%s1331] ss:$2 sm:$0xff]
      %s1333 = scalar_lea.vmem %s1302, 456 [#allocation2]
      %v1334 = vld [vmem:[%s1333] ss:$2 sm:$0xff]
      %s1335 = scalar_lea.vmem %s1302, 9 [#allocation2]
      %v1336 = vld [vmem:[%s1335] ss:$2 sm:$0xff]
      %s1337 = scalar_lea.vmem %s1302, 73 [#allocation2]
      %v1338 = vld [vmem:[%s1337] ss:$2 sm:$0xff]
      %s1339 = scalar_lea.vmem %s1302, 137 [#allocation2]
      %v1340 = vld [vmem:[%s1339] ss:$2 sm:$0xff]
      %s1341 = scalar_lea.vmem %s1302, 201 [#allocation2]
      %v1342 = vld [vmem:[%s1341] ss:$2 sm:$0xff]
      %s1343 = scalar_lea.vmem %s1302, 265 [#allocation2]
      %v1344 = vld [vmem:[%s1343] ss:$2 sm:$0xff]
      %s1345 = scalar_lea.vmem %s1302, 329 [#allocation2]
      %v1346 = vld [vmem:[%s1345] ss:$2 sm:$0xff]
      %s1347 = scalar_lea.vmem %s1302, 393 [#allocation2]
      %v1348 = vld [vmem:[%s1347] ss:$2 sm:$0xff]
      %s1349 = scalar_lea.vmem %s1302, 457 [#allocation2]
      %v1350 = vld [vmem:[%s1349] ss:$2 sm:$0xff]
      %v1351 = vpack.c.bf16 %v1306, %v1304
      %v1352 = vpack.c.bf16 %v1322, %v1320
      %v1353 = vpack.c.bf16 %v1338, %v1336
      %v1354 = vpack.c.bf16 %v1310, %v1308
      %v1355 = vpack.c.bf16 %v1326, %v1324
      %v1356 = vpack.c.bf16 %v1342, %v1340
      %v1357 = vpack.c.bf16 %v1314, %v1312
      %v1358 = vpack.c.bf16 %v1330, %v1328
      %v1359 = vpack.c.bf16 %v1346, %v1344
      %v1360 = vpack.c.bf16 %v1318, %v1316
      %v1361 = vpack.c.bf16 %v1334, %v1332
      %v1362 = vpack.c.bf16 %v1350, %v1348
      %s1363 = scalar_lea.vmem %s3, 384
      %v1364 = vld [vmem:[%s1363] sm:$0xf]
      %v1365 = vld [vmem:[%s1363 + $0x4] sm:$0xf]
      %v1366 = vld [vmem:[%s1363 + $0x8] sm:$0xf]
      %v1367 = vld [vmem:[%s1363 + $0xc] sm:$0xf]
      %v1368 = vld [vmem:[%s1363 + $0x10] sm:$0xf]
      %v1369 = vld [vmem:[%s1363 + $0x14] sm:$0xf]
      %v1370 = vld [vmem:[%s1363 + $0x18] sm:$0xf]
      %v1371 = vld [vmem:[%s1363 + $0x1c] sm:$0xf]
      %v1372 = vld [vmem:[%s1363 + $0x20] sm:$0xf]
      %v1373 = vld [vmem:[%s1363 + $0x24] sm:$0xf]
      %v1374 = vld [vmem:[%s1363 + $0x28] sm:$0xf]
      %v1375 = vld [vmem:[%s1363 + $0x2c] sm:$0xf]
      %v1376 = vld [vmem:[%s1363 + $0x30] sm:$0xf]
      %v1377 = vld [vmem:[%s1363 + $0x34] sm:$0xf]
      %v1378 = vld [vmem:[%s1363 + $0x38] sm:$0xf]
      %v1379 = vld [vmem:[%s1363 + $0x3c] sm:$0xf]
      %v1380 = vld [vmem:[%s1363 + $0x40] sm:$0xf]
      %v1381 = vld [vmem:[%s1363 + $0x44] sm:$0xf]
      %v1382 = vld [vmem:[%s1363 + $0x48] sm:$0xf]
      %v1383 = vld [vmem:[%s1363 + $0x4c] sm:$0xf]
      %v1384 = vld [vmem:[%s1363 + $0x50] sm:$0xf]
      %v1385 = vld [vmem:[%s1363 + $0x54] sm:$0xf]
      %v1386 = vld [vmem:[%s1363 + $0x58] sm:$0xf]
      %v1387 = vld [vmem:[%s1363 + $0x5c] sm:$0xf]
      %v1388 = vld [vmem:[%s1363 + $0x60] sm:$0xf]
      %v1389 = vld [vmem:[%s1363 + $0x64] sm:$0xf]
      %v1390 = vld [vmem:[%s1363 + $0x68] sm:$0xf]
      %v1391 = vld [vmem:[%s1363 + $0x6c] sm:$0xf]
      %v1392 = vld [vmem:[%s1363 + $0x70] sm:$0xf]
      %v1393 = vld [vmem:[%s1363 + $0x74] sm:$0xf]
      %v1394 = vld [vmem:[%s1363 + $0x78] sm:$0xf]
      %v1395 = vld [vmem:[%s1363 + $0x7c] sm:$0xf]
      %v1396 = vld [vmem:[%s1363 + $0x80] sm:$0xf]
      %v1397 = vld [vmem:[%s1363 + $0x84] sm:$0xf]
      %v1398 = vld [vmem:[%s1363 + $0x88] sm:$0xf]
      %v1399 = vld [vmem:[%s1363 + $0x8c] sm:$0xf]
      %v1400 = vld [vmem:[%s1363 + $0x90] sm:$0xf]
      %v1401 = vld [vmem:[%s1363 + $0x94] sm:$0xf]
      %v1402 = vld [vmem:[%s1363 + $0x98] sm:$0xf]
      %v1403 = vld [vmem:[%s1363 + $0x9c] sm:$0xf]
      %v1404 = vld [vmem:[%s1363 + $0xa0] sm:$0xf]
      %v1405 = vld [vmem:[%s1363 + $0xa4] sm:$0xf]
      %v1406 = vld [vmem:[%s1363 + $0xa8] sm:$0xf]
      %v1407 = vld [vmem:[%s1363 + $0xac] sm:$0xf]
      %v1408 = vld [vmem:[%s1363 + $0xb0] sm:$0xf]
      %v1409 = vld [vmem:[%s1363 + $0xb4] sm:$0xf]
      %v1410 = vld [vmem:[%s1363 + $0xb8] sm:$0xf]
      %v1411 = vld [vmem:[%s1363 + $0xbc] sm:$0xf]
      %v1460 = vunpack.c.l.b16 %v1364
      %v1461 = vunpack.c.l.b16 %v1365
      %v1462 = vunpack.c.l.b16 %v1366
      %v1463 = vunpack.c.l.b16 %v1367
      %v1464 = vunpack.c.l.b16 %v1368
      %v1465 = vunpack.c.l.b16 %v1369
      %v1466 = vunpack.c.l.b16 %v1370
      %v1467 = vunpack.c.l.b16 %v1371
      %v1468 = vunpack.c.l.b16 %v1372
      %v1469 = vunpack.c.l.b16 %v1373
      %v1470 = vunpack.c.l.b16 %v1374
      %v1471 = vunpack.c.l.b16 %v1375
      %v1472 = vunpack.c.l.b16 %v1376
      %v1473 = vunpack.c.l.b16 %v1377
      %v1474 = vunpack.c.l.b16 %v1378
      %v1475 = vunpack.c.l.b16 %v1379
      %v1476 = vunpack.c.l.b16 %v1380
      %v1477 = vunpack.c.l.b16 %v1381
      %v1478 = vunpack.c.l.b16 %v1382
      %v1479 = vunpack.c.l.b16 %v1383
      %v1480 = vunpack.c.l.b16 %v1384
      %v1481 = vunpack.c.l.b16 %v1385
      %v1482 = vunpack.c.l.b16 %v1386
      %v1483 = vunpack.c.l.b16 %v1387
      %v1484 = vunpack.c.l.b16 %v1388
      %v1485 = vunpack.c.l.b16 %v1389
      %v1486 = vunpack.c.l.b16 %v1390
      %v1487 = vunpack.c.l.b16 %v1391
      %v1488 = vunpack.c.l.b16 %v1392
      %v1489 = vunpack.c.l.b16 %v1393
      %v1490 = vunpack.c.l.b16 %v1394
      %v1491 = vunpack.c.l.b16 %v1395
      %v1492 = vunpack.c.l.b16 %v1396
      %v1493 = vunpack.c.l.b16 %v1397
      %v1494 = vunpack.c.l.b16 %v1398
      %v1495 = vunpack.c.l.b16 %v1399
      %v1496 = vunpack.c.l.b16 %v1400
      %v1497 = vunpack.c.l.b16 %v1401
      %v1498 = vunpack.c.l.b16 %v1402
      %v1499 = vunpack.c.l.b16 %v1403
      %v1500 = vunpack.c.l.b16 %v1404
      %v1501 = vunpack.c.l.b16 %v1405
      %v1502 = vunpack.c.l.b16 %v1406
      %v1503 = vunpack.c.l.b16 %v1407
      %v1504 = vunpack.c.l.b16 %v1408
      %v1505 = vunpack.c.l.b16 %v1409
      %v1506 = vunpack.c.l.b16 %v1410
      %v1507 = vunpack.c.l.b16 %v1411
      %v1508 = vpack.c.b16 %v1461, %v1460
      %v1509 = vpack.c.b16 %v1463, %v1462
      %v1510 = vpack.c.b16 %v1465, %v1464
      %v1511 = vpack.c.b16 %v1467, %v1466
      %v1512 = vpack.c.b16 %v1469, %v1468
      %v1513 = vpack.c.b16 %v1471, %v1470
      %v1514 = vpack.c.b16 %v1473, %v1472
      %v1515 = vpack.c.b16 %v1475, %v1474
      %v1516 = vpack.c.b16 %v1477, %v1476
      %v1517 = vpack.c.b16 %v1479, %v1478
      %v1518 = vpack.c.b16 %v1481, %v1480
      %v1519 = vpack.c.b16 %v1483, %v1482
      %v1520 = vpack.c.b16 %v1485, %v1484
      %v1521 = vpack.c.b16 %v1487, %v1486
      %v1522 = vpack.c.b16 %v1489, %v1488
      %v1523 = vpack.c.b16 %v1491, %v1490
      %v1524 = vpack.c.b16 %v1493, %v1492
      %v1525 = vpack.c.b16 %v1495, %v1494
      %v1526 = vpack.c.b16 %v1497, %v1496
      %v1527 = vpack.c.b16 %v1499, %v1498
      %v1528 = vpack.c.b16 %v1501, %v1500
      %v1529 = vpack.c.b16 %v1503, %v1502
      %v1530 = vpack.c.b16 %v1505, %v1504
      %v1531 = vpack.c.b16 %v1507, %v1506
      %1556 = vmatprep.subr.bf16.mxu0 0
      %1557 = vmatpush1.bf16.msra.mxu0 %v1515
      %1558 = vmatprep.subr.bf16.mxu0 0
      %1559 = vmatpush1.bf16.msra.mxu0 %v1514
      %1560 = vmatprep.subr.bf16.mxu0 0
      %1561 = vmatpush1.bf16.msra.mxu0 %v1513
      %1562 = vmatprep.subr.bf16.mxu0 0
      %1563 = vmatpush1.bf16.msra.mxu0 %v1512
      %1564 = vmatprep.subr.bf16.mxu0 0
      %1565 = vmatpush1.bf16.msra.mxu0 %v1511
      %1566 = vmatprep.subr.bf16.mxu0 0
      %1567 = vmatpush1.bf16.msra.mxu0 %v1510
      %1568 = vmatprep.subr.bf16.mxu0 0
      %1569 = vmatpush1.bf16.msra.mxu0 %v1509
      %1570 = vmatprep.subr.bf16.mxu0 0
      %1571 = vmatpush1.bf16.msra.mxu0 %v1508
      %1572 = vmatprep.subr.bf16.mxu0 0
      %1573 = vmatpush2.bf16.msra.mxu0 %v1523
      %1574 = vmatprep.subr.bf16.mxu0 0
      %1575 = vmatpush2.bf16.msra.mxu0 %v1522
      %1576 = vmatprep.subr.bf16.mxu0 0
      %1577 = vmatpush2.bf16.msra.mxu0 %v1521
      %1578 = vmatprep.subr.bf16.mxu0 0
      %1579 = vmatpush2.bf16.msra.mxu0 %v1520
      %1580 = vmatprep.subr.bf16.mxu0 0
      %1581 = vmatpush2.bf16.msra.mxu0 %v1519
      %1582 = vmatprep.subr.bf16.mxu0 0
      %1583 = vmatpush2.bf16.msra.mxu0 %v1518
      %1584 = vmatprep.subr.bf16.mxu0 0
      %1585 = vmatpush2.bf16.msra.mxu0 %v1517
      %1586 = vmatprep.subr.bf16.mxu0 0
      %1587 = vmatpush2.bf16.msra.mxu0 %v1516
      %1588 = vmatprep.mubr.bf16.mxu0 %v1352
      %1589 = vmatmul.mubr.bf16.gmra.mxu0 %v1351
      %v1590 = vpop.f32.mrf.mxu0
      %v1591 = vadd.f32 0.0, %v1590
      %v1592 = vpop.f32.mrf.mxu0
      %v1593 = vpop.f32.mrf.mxu0
      %v1594 = vadd.f32 0.0, %v1593
      %v1595 = vpop.f32.mrf.mxu0
      %1596 = vmatprep.mubr.bf16.mxu0 %v1355
      %1597 = vmatmul.mubr.bf16.gmra.mxu0 %v1354
      %v1598 = vpop.f32.mrf.mxu0
      %v1599 = vadd.f32 0.0, %v1598
      %v1600 = vpop.f32.mrf.mxu0
      %v1601 = vpop.f32.mrf.mxu0
      %v1602 = vadd.f32 0.0, %v1601
      %v1603 = vpop.f32.mrf.mxu0
      %1604 = vmatprep.mubr.bf16.mxu0 %v1358
      %1605 = vmatmul.mubr.bf16.gmra.mxu0 %v1357
      %v1606 = vpop.f32.mrf.mxu0
      %v1607 = vadd.f32 0.0, %v1606
      %v1608 = vpop.f32.mrf.mxu0
      %v1609 = vpop.f32.mrf.mxu0
      %v1610 = vadd.f32 0.0, %v1609
      %v1611 = vpop.f32.mrf.mxu0
      %1612 = vmatprep.mubr.bf16.mxu0 %v1361
      %1613 = vmatmul.mubr.bf16.gmra.mxu0 %v1360
      %v1614 = vpop.f32.mrf.mxu0
      %v1615 = vadd.f32 0.0, %v1614
      %v1616 = vpop.f32.mrf.mxu0
      %v1617 = vpop.f32.mrf.mxu0
      %v1618 = vadd.f32 0.0, %v1617
      %v1619 = vpop.f32.mrf.mxu0
      %1620 = vdwg.mxu0
      %1621 = vmatprep.subr.bf16.mxu0 0
      %1622 = vmatpush1.bf16.msra.mxu0 %v1531
      %1623 = vmatprep.subr.bf16.mxu0 0
      %1624 = vmatpush1.bf16.msra.mxu0 %v1530
      %1625 = vmatprep.subr.bf16.mxu0 0
      %1626 = vmatpush1.bf16.msra.mxu0 %v1529
      %1627 = vmatprep.subr.bf16.mxu0 0
      %1628 = vmatpush1.bf16.msra.mxu0 %v1528
      %1629 = vmatprep.subr.bf16.mxu0 0
      %1630 = vmatpush1.bf16.msra.mxu0 %v1527
      %1631 = vmatprep.subr.bf16.mxu0 0
      %1632 = vmatpush1.bf16.msra.mxu0 %v1526
      %1633 = vmatprep.subr.bf16.mxu0 0
      %1634 = vmatpush1.bf16.msra.mxu0 %v1525
      %1635 = vmatprep.subr.bf16.mxu0 0
      %1636 = vmatpush1.bf16.msra.mxu0 %v1524
      %1637 = vmatprep.subr.bf16.mxu0 0
      %1638 = vmatpush2.bf16.msra.mxu0 0
      %1639 = vmatprep.subr.bf16.mxu0 0
      %1640 = vmatpush2.bf16.msra.mxu0 0
      %1641 = vmatprep.subr.bf16.mxu0 0
      %1642 = vmatpush2.bf16.msra.mxu0 0
      %1643 = vmatprep.subr.bf16.mxu0 0
      %1644 = vmatpush2.bf16.msra.mxu0 0
      %1645 = vmatprep.subr.bf16.mxu0 0
      %1646 = vmatpush2.bf16.msra.mxu0 0
      %1647 = vmatprep.subr.bf16.mxu0 0
      %1648 = vmatpush2.bf16.msra.mxu0 0
      %1649 = vmatprep.subr.bf16.mxu0 0
      %1650 = vmatpush2.bf16.msra.mxu0 0
      %1651 = vmatprep.subr.bf16.mxu0 0
      %1652 = vmatpush2.bf16.msra.mxu0 0
      %1653 = vmatprep.mubr.bf16.mxu0 0
      %1654 = vmatmul.mubr.bf16.gmra.mxu0 %v1353
      %v1655 = vpop.f32.mrf.mxu0
      %v1656 = vadd.f32 %v1591, %v1655
      %v1657 = vpop.f32.mrf.mxu0
      %v1658 = vpop.f32.mrf.mxu0
      %v1659 = vadd.f32 %v1594, %v1658
      %v1660 = vpop.f32.mrf.mxu0
      %1661 = vmatprep.mubr.bf16.mxu0 0
      %1662 = vmatmul.mubr.bf16.gmra.mxu0 %v1356
      %v1663 = vpop.f32.mrf.mxu0
      %v1664 = vadd.f32 %v1599, %v1663
      %v1665 = vpop.f32.mrf.mxu0
      %v1666 = vpop.f32.mrf.mxu0
      %v1667 = vadd.f32 %v1602, %v1666
      %v1668 = vpop.f32.mrf.mxu0
      %1669 = vmatprep.mubr.bf16.mxu0 0
      %1670 = vmatmul.mubr.bf16.gmra.mxu0 %v1359
      %v1671 = vpop.f32.mrf.mxu0
      %v1672 = vadd.f32 %v1607, %v1671
      %v1673 = vpop.f32.mrf.mxu0
      %v1674 = vpop.f32.mrf.mxu0
      %v1675 = vadd.f32 %v1610, %v1674
      %v1676 = vpop.f32.mrf.mxu0
      %1677 = vmatprep.mubr.bf16.mxu0 0
      %1678 = vmatmul.mubr.bf16.gmra.mxu0 %v1362
      %v1679 = vpop.f32.mrf.mxu0
      %v1680 = vadd.f32 %v1615, %v1679
      %v1681 = vpop.f32.mrf.mxu0
      %v1682 = vpop.f32.mrf.mxu0
      %v1683 = vadd.f32 %v1618, %v1682
      %v1684 = vpop.f32.mrf.mxu0
      %1685 = vdwg.mxu0
      %v1686 = vadd.f32 %v1272, %v1656
      %v1687 = vadd.f32 %v1275, %v1659
      %v1688 = vadd.f32 %v1280, %v1664
      %v1689 = vadd.f32 %v1283, %v1667
      %v1690 = vadd.f32 %v1288, %v1672
      %v1691 = vadd.f32 %v1291, %v1675
      %v1692 = vadd.f32 %v1296, %v1680
      %v1693 = vadd.f32 %v1299, %v1683
      %v1694 = vld [vmem:[%s4] sm:$0x1]
      %v1696 = vlaneseq
      %v1697 = vshrl.u32 %v1696, 7
      %v1698 = vsub.s32 0, %v1697
      %v1699 = vrot.slane %v1694, %v1698
      %v1701 = vadd.f32 %v1686, %v1699
      %v1702 = vadd.f32 %v1687, %v1699
      %v1703 = vadd.f32 %v1688, %v1699
      %v1704 = vadd.f32 %v1689, %v1699
      %v1705 = vadd.f32 %v1690, %v1699
      %v1706 = vadd.f32 %v1691, %v1699
      %v1707 = vadd.f32 %v1692, %v1699
      %v1708 = vadd.f32 %v1693, %v1699
      %v1709 = vmax.f32 %v1701, 0.0
      %v1710 = vmax.f32 %v1702, 0.0
      %v1711 = vmax.f32 %v1703, 0.0
      %v1712 = vmax.f32 %v1704, 0.0
      %v1713 = vmax.f32 %v1705, 0.0
      %v1714 = vmax.f32 %v1706, 0.0
      %v1715 = vmax.f32 %v1707, 0.0
      %v1716 = vmax.f32 %v1708, 0.0
      %v1717 = vpack.c.bf16 %v1709, %v1709
      %v1718 = vpack.c.bf16 %v1710, %v1710
      %v1719 = vpack.c.bf16 %v1711, %v1711
      %v1720 = vpack.c.bf16 %v1712, %v1712
      %v1721 = vpack.c.bf16 %v1713, %v1713
      %v1722 = vpack.c.bf16 %v1714, %v1714
      %v1723 = vpack.c.bf16 %v1715, %v1715
      %v1724 = vpack.c.bf16 %v1716, %v1716
      %1725 = vst [vmem:[%s389] sm:$0xf] %v1717
      %1726 = vst [vmem:[%s389 + $0x4] sm:$0xf] %v1718
      %1727 = vst [vmem:[%s389 + $0x8] sm:$0xf] %v1719
      %1728 = vst [vmem:[%s389 + $0xc] sm:$0xf] %v1720
      %1729 = vst [vmem:[%s389 + $0x10] sm:$0xf] %v1721
      %1730 = vst [vmem:[%s389 + $0x14] sm:$0xf] %v1722
      %1731 = vst [vmem:[%s389 + $0x18] sm:$0xf] %v1723
      %1732 = vst [vmem:[%s389 + $0x1c] sm:$0xf] %v1724
      %s1733 = smul.u32 8, %s21
      %p1734 = scmp.lt.s32.totalorder %s20, 1
      %s1735 = scalar_select %p1734, %s20, 1
      %p1736 = scmp.lt.s32.totalorder %s1733, 7
      %s1737 = scalar_select %p1736, %s1733, 7
      %s1738 = smul.addr %s1735, 8
      %s1739 = sadd.s32 %s1737, %s1738
      %s1740 = smul.addr %s1739, 4
      %s1741 = scalar_lea.vmem %s5, %s1740
      // Predicated region
      $region41: #{fwd.7} parent=39 // pred_check
        %p1742 = pneg %p190
      $region42: #{fwd.7} parent=39 // pred_check_branch
        %1744 = sbr.rel (%p1742) target = $region44
      $region43: #{fwd.7} parent=39 // pred_region
        %s1745 = smul.u32 8, %s21
      $region44: #{fwd.7} parent=39 // pred_fallthru
        _
    $region40: #{fwd.7} parent=5 // pred_fallthru
      _
    %p1746 = scmp.le.s32.totalorder 2, %s11
    // Predicated region
    $region45: #{fwd.7} parent=5 // pred_check
      %p1747 = pneg %p1746
    $region46: #{fwd.7} parent=5 // pred_check_branch
      %1749 = sbr.rel (%p1747) target = $region48
    $region47: #{fwd.7} parent=5 // pred_region
      %s1750 = ssub.s32 %s11, 2
      // Predicated region
      $region49: #{fwd.7} parent=47 // pred_check
        %p1751 = pneg %p196
      $region50: #{fwd.7} parent=47 // pred_check_branch
        %1753 = sbr.rel (%p1751) target = $region52
      $region51: #{fwd.7} parent=47 // pred_region
        %s1754 = smul.u32 8, %s23
        %p1755 = scmp.lt.s32.totalorder %s22, 1
        %s1756 = scalar_select %p1755, %s22, 1
        %p1757 = scmp.lt.s32.totalorder %s1754, 7
        %s1758 = scalar_select %p1757, %s1754, 7
        %s1759 = smul.addr %s1756, 8
        %s1760 = sadd.s32 %s1758, %s1759
        %s1761 = smul.addr %s1760, 4
        %s1762 = scalar_lea.vmem %s5, %s1761
      $region52: #{fwd.7} parent=47 // pred_fallthru
        _
    $region48: #{fwd.7} parent=5 // pred_fallthru
      _
  $region6: #{fwd.7} parent=0 // loop_footer
    %s15 = sadd.s32 1, %s11
  $region7: #{fwd.7} parent=0 // loop_footer_branch
    %10 = sbr.rel target = $region3
  $region8: #{fwd.7} parent=0 // loop_exit
    _

// kernel: fwd.9
$region0: #{fwd.9}
  #allocation0 [shape = 'u32[]', space=smem, size = 0x4, offset = 0x4, fixed_abs, tag = 'smem constant byte address 0x4 - core index']
  #allocation1 [shape = 'u32[144,128]{1,0:T(1,128)}', space=vmem, size = 0x12000, scoped, tag = 'internal scratch']
  %s0 = inlined_call_operand.vmem [shape: bf16[128,128], index: 0, kind: input, shape index: {}]
  %s1 = inlined_call_operand.vmem [shape: bf16[128,128], index: 1, kind: input, shape index: {}]
  %s2 = inlined_call_operand.vmem [shape: f32[1,128], index: 2, kind: input, shape index: {}]
  %s3 = inlined_call_operand.vmem [shape: bf16[128,128], index: 3, kind: output, shape index: {}]
  %s4 = sld [smem:[#allocation0]]
  $region22: #{fwd.9} parent=0
    _
  %s6 = ssub.s32 1, %s4
  %s7 = scalar_select 0, %s6, %s4
  // Predicated region
  $region2: #{fwd.9} parent=0 // pred_check
    _
  $region3: #{fwd.9} parent=0 // pred_check_branch
    %9 = sbr.rel (0) target = $region5
  $region4: #{fwd.9} parent=0 // pred_region
    _
  $region5: #{fwd.9} parent=0 // pred_fallthru
    _
  // Predicated region
  $region6: #{fwd.9} parent=0 // pred_check
    _
  $region7: #{fwd.9} parent=0 // pred_check_branch
    %11 = sbr.rel (0) target = $region9
  $region8: #{fwd.9} parent=0 // pred_region
    _
  $region9: #{fwd.9} parent=0 // pred_fallthru
    _
  // Predicated region
  $region10: #{fwd.9} parent=0 // pred_check
    _
  $region11: #{fwd.9} parent=0 // pred_check_branch
    %13 = sbr.rel (0) target = $region13
  $region12: #{fwd.9} parent=0 // pred_region
    _
  $region13: #{fwd.9} parent=0 // pred_fallthru
    _
  %v15 = vld [vmem:[%s0] sm:$0xf]
  %v16 = vld [vmem:[%s0 + $0x4] sm:$0xf]
  %v17 = vld [vmem:[%s0 + $0x8] sm:$0xf]
  %v18 = vld [vmem:[%s0 + $0xc] sm:$0xf]
  %v19 = vld [vmem:[%s0 + $0x10] sm:$0xf]
  %v20 = vld [vmem:[%s0 + $0x14] sm:$0xf]
  %v21 = vld [vmem:[%s0 + $0x18] sm:$0xf]
  %v22 = vld [vmem:[%s0 + $0x1c] sm:$0xf]
  %v23 = vld [vmem:[%s0 + $0x20] sm:$0xf]
  %v24 = vld [vmem:[%s0 + $0x24] sm:$0xf]
  %v25 = vld [vmem:[%s0 + $0x28] sm:$0xf]
  %v26 = vld [vmem:[%s0 + $0x2c] sm:$0xf]
  %v27 = vld [vmem:[%s0 + $0x30] sm:$0xf]
  %v28 = vld [vmem:[%s0 + $0x34] sm:$0xf]
  %v29 = vld [vmem:[%s0 + $0x38] sm:$0xf]
  %v30 = vld [vmem:[%s0 + $0x3c] sm:$0xf]
  %v31 = vld [vmem:[%s1] sm:$0xf]
  %v32 = vld [vmem:[%s1 + $0x4] sm:$0xf]
  %v33 = vld [vmem:[%s1 + $0x8] sm:$0xf]
  %v34 = vld [vmem:[%s1 + $0xc] sm:$0xf]
  %v35 = vld [vmem:[%s1 + $0x10] sm:$0xf]
  %v36 = vld [vmem:[%s1 + $0x14] sm:$0xf]
  %v37 = vld [vmem:[%s1 + $0x18] sm:$0xf]
  %v38 = vld [vmem:[%s1 + $0x1c] sm:$0xf]
  %v39 = vld [vmem:[%s1 + $0x20] sm:$0xf]
  %v40 = vld [vmem:[%s1 + $0x24] sm:$0xf]
  %v41 = vld [vmem:[%s1 + $0x28] sm:$0xf]
  %v42 = vld [vmem:[%s1 + $0x2c] sm:$0xf]
  %v43 = vld [vmem:[%s1 + $0x30] sm:$0xf]
  %v44 = vld [vmem:[%s1 + $0x34] sm:$0xf]
  %v45 = vld [vmem:[%s1 + $0x38] sm:$0xf]
  %v46 = vld [vmem:[%s1 + $0x3c] sm:$0xf]
  %v47 = vld [vmem:[%s2] sm:$0x1]
  %v49 = vlaneseq
  %v50 = vshrl.u32 %v49, 7
  %v51 = vsub.s32 0, %v50
  %v52 = vrot.slane %v47, %v51
  %v70 = vunpack.c.l.b16 %v15
  %v71 = vunpack.c.l.b16 %v16
  %v72 = vunpack.c.l.b16 %v17
  %v73 = vunpack.c.l.b16 %v18
  %v74 = vunpack.c.l.b16 %v19
  %v75 = vunpack.c.l.b16 %v20
  %v76 = vunpack.c.l.b16 %v21
  %v77 = vunpack.c.l.b16 %v22
  %v78 = vunpack.c.l.b16 %v23
  %v79 = vunpack.c.l.b16 %v24
  %v80 = vunpack.c.l.b16 %v25
  %v81 = vunpack.c.l.b16 %v26
  %v82 = vunpack.c.l.b16 %v27
  %v83 = vunpack.c.l.b16 %v28
  %v84 = vunpack.c.l.b16 %v29
  %v85 = vunpack.c.l.b16 %v30
  %v86 = vpack.c.b16 %v71, %v70
  %v87 = vpack.c.b16 %v73, %v72
  %v88 = vpack.c.b16 %v75, %v74
  %v89 = vpack.c.b16 %v77, %v76
  %v90 = vpack.c.b16 %v79, %v78
  %v91 = vpack.c.b16 %v81, %v80
  %v92 = vpack.c.b16 %v83, %v82
  %v93 = vpack.c.b16 %v85, %v84
  %v118 = vunpack.c.l.b16 %v31
  %v119 = vunpack.c.l.b16 %v32
  %v120 = vunpack.c.l.b16 %v33
  %v121 = vunpack.c.l.b16 %v34
  %v122 = vunpack.c.l.b16 %v35
  %v123 = vunpack.c.l.b16 %v36
  %v124 = vunpack.c.l.b16 %v37
  %v125 = vunpack.c.l.b16 %v38
  %v126 = vunpack.c.l.b16 %v39
  %v127 = vunpack.c.l.b16 %v40
  %v128 = vunpack.c.l.b16 %v41
  %v129 = vunpack.c.l.b16 %v42
  %v130 = vunpack.c.l.b16 %v43
  %v131 = vunpack.c.l.b16 %v44
  %v132 = vunpack.c.l.b16 %v45
  %v133 = vunpack.c.l.b16 %v46
  %v134 = vpack.c.b16 %v119, %v118
  %v135 = vpack.c.b16 %v121, %v120
  %v136 = vpack.c.b16 %v123, %v122
  %v137 = vpack.c.b16 %v125, %v124
  %v138 = vpack.c.b16 %v127, %v126
  %v139 = vpack.c.b16 %v129, %v128
  %v140 = vpack.c.b16 %v131, %v130
  %v141 = vpack.c.b16 %v133, %v132
  %150 = vmatprep.subr.bf16.mxu0 0
  %151 = vmatpush1.bf16.msra.mxu0 %v141
  %152 = vmatprep.subr.bf16.mxu0 0
  %153 = vmatpush1.bf16.msra.mxu0 %v140
  %154 = vmatprep.subr.bf16.mxu0 0
  %155 = vmatpush1.bf16.msra.mxu0 %v139
  %156 = vmatprep.subr.bf16.mxu0 0
  %157 = vmatpush1.bf16.msra.mxu0 %v138
  %158 = vmatprep.subr.bf16.mxu0 0
  %159 = vmatpush1.bf16.msra.mxu0 %v137
  %160 = vmatprep.subr.bf16.mxu0 0
  %161 = vmatpush1.bf16.msra.mxu0 %v136
  %162 = vmatprep.subr.bf16.mxu0 0
  %163 = vmatpush1.bf16.msra.mxu0 %v135
  %164 = vmatprep.subr.bf16.mxu0 0
  %165 = vmatpush1.bf16.msra.mxu0 %v134
  %166 = vmatprep.subr.bf16.mxu0 0
  %167 = vmatpush2.bf16.msra.mxu0 0
  %168 = vmatprep.subr.bf16.mxu0 0
  %169 = vmatpush2.bf16.msra.mxu0 0
  %170 = vmatprep.subr.bf16.mxu0 0
  %171 = vmatpush2.bf16.msra.mxu0 0
  %172 = vmatprep.subr.bf16.mxu0 0
  %173 = vmatpush2.bf16.msra.mxu0 0
  %174 = vmatprep.subr.bf16.mxu0 0
  %175 = vmatpush2.bf16.msra.mxu0 0
  %176 = vmatprep.subr.bf16.mxu0 0
  %177 = vmatpush2.bf16.msra.mxu0 0
  %178 = vmatprep.subr.bf16.mxu0 0
  %179 = vmatpush2.bf16.msra.mxu0 0
  %180 = vmatprep.subr.bf16.mxu0 0
  %181 = vmatpush2.bf16.msra.mxu0 0
  %182 = vmatprep.mubr.bf16.mxu0 0
  %183 = vmatmul.mubr.bf16.gmra.mxu0 %v86
  %v184 = vpop.f32.mrf.mxu0
  %v185 = vadd.f32 %v52, %v184
  %v186 = vpop.f32.mrf.mxu0
  %v187 = vpop.f32.mrf.mxu0
  %v188 = vadd.f32 %v52, %v187
  %v189 = vpop.f32.mrf.mxu0
  %190 = vmatprep.mubr.bf16.mxu0 0
  %191 = vmatmul.mubr.bf16.gmra.mxu0 %v87
  %v192 = vpop.f32.mrf.mxu0
  %v193 = vadd.f32 %v52, %v192
  %v194 = vpop.f32.mrf.mxu0
  %v195 = vpop.f32.mrf.mxu0
  %v196 = vadd.f32 %v52, %v195
  %v197 = vpop.f32.mrf.mxu0
  %198 = vmatprep.mubr.bf16.mxu0 0
  %199 = vmatmul.mubr.bf16.gmra.mxu0 %v88
  %v200 = vpop.f32.mrf.mxu0
  %v201 = vadd.f32 %v52, %v200
  %v202 = vpop.f32.mrf.mxu0
  %v203 = vpop.f32.mrf.mxu0
  %v204 = vadd.f32 %v52, %v203
  %v205 = vpop.f32.mrf.mxu0
  %206 = vmatprep.mubr.bf16.mxu0 0
  %207 = vmatmul.mubr.bf16.gmra.mxu0 %v89
  %v208 = vpop.f32.mrf.mxu0
  %v209 = vadd.f32 %v52, %v208
  %v210 = vpop.f32.mrf.mxu0
  %v211 = vpop.f32.mrf.mxu0
  %v212 = vadd.f32 %v52, %v211
  %v213 = vpop.f32.mrf.mxu0
  %214 = vmatprep.mubr.bf16.mxu0 0
  %215 = vmatmul.mubr.bf16.gmra.mxu0 %v90
  %v216 = vpop.f32.mrf.mxu0
  %v217 = vadd.f32 %v52, %v216
  %v218 = vpop.f32.mrf.mxu0
  %v219 = vpop.f32.mrf.mxu0
  %v220 = vadd.f32 %v52, %v219
  %v221 = vpop.f32.mrf.mxu0
  %222 = vmatprep.mubr.bf16.mxu0 0
  %223 = vmatmul.mubr.bf16.gmra.mxu0 %v91
  %v224 = vpop.f32.mrf.mxu0
  %v225 = vadd.f32 %v52, %v224
  %v226 = vpop.f32.mrf.mxu0
  %v227 = vpop.f32.mrf.mxu0
  %v228 = vadd.f32 %v52, %v227
  %v229 = vpop.f32.mrf.mxu0
  %230 = vmatprep.mubr.bf16.mxu0 0
  %231 = vmatmul.mubr.bf16.gmra.mxu0 %v92
  %v232 = vpop.f32.mrf.mxu0
  %v233 = vadd.f32 %v52, %v232
  %v234 = vpop.f32.mrf.mxu0
  %v235 = vpop.f32.mrf.mxu0
  %v236 = vadd.f32 %v52, %v235
  %v237 = vpop.f32.mrf.mxu0
  %238 = vmatprep.mubr.bf16.mxu0 0
  %239 = vmatmul.mubr.bf16.gmra.mxu0 %v93
  %v240 = vpop.f32.mrf.mxu0
  %v241 = vadd.f32 %v52, %v240
  %v242 = vpop.f32.mrf.mxu0
  %v243 = vpop.f32.mrf.mxu0
  %v244 = vadd.f32 %v52, %v243
  %v245 = vpop.f32.mrf.mxu0
  %246 = vdwg.mxu0
  %v247 = vmax.f32 %v185, 0.0
  %v248 = vmax.f32 %v188, 0.0
  %v249 = vmax.f32 %v193, 0.0
  %v250 = vmax.f32 %v196, 0.0
  %v251 = vmax.f32 %v201, 0.0
  %v252 = vmax.f32 %v204, 0.0
  %v253 = vmax.f32 %v209, 0.0
  %v254 = vmax.f32 %v212, 0.0
  %v255 = vmax.f32 %v217, 0.0
  %v256 = vmax.f32 %v220, 0.0
  %v257 = vmax.f32 %v225, 0.0
  %v258 = vmax.f32 %v228, 0.0
  %v259 = vmax.f32 %v233, 0.0
  %v260 = vmax.f32 %v236, 0.0
  %v261 = vmax.f32 %v241, 0.0
  %v262 = vmax.f32 %v244, 0.0
  %v263 = vpack.c.bf16 %v248, %v247
  %v264 = vpack.c.bf16 %v250, %v249
  %v265 = vpack.c.bf16 %v252, %v251
  %v266 = vpack.c.bf16 %v254, %v253
  %v267 = vpack.c.bf16 %v256, %v255
  %v268 = vpack.c.bf16 %v258, %v257
  %v269 = vpack.c.bf16 %v260, %v259
  %v270 = vpack.c.bf16 %v262, %v261
  %v279 = vunpack.c.l.b16 %v263
  %v280 = vunpack.c.h.b16 %v263
  %v281 = vunpack.c.l.b16 %v264
  %v282 = vunpack.c.h.b16 %v264
  %v283 = vunpack.c.l.b16 %v265
  %v284 = vunpack.c.h.b16 %v265
  %v285 = vunpack.c.l.b16 %v266
  %v286 = vunpack.c.h.b16 %v266
  %v287 = vunpack.c.l.b16 %v267
  %v288 = vunpack.c.h.b16 %v267
  %v289 = vunpack.c.l.b16 %v268
  %v290 = vunpack.c.h.b16 %v268
  %v291 = vunpack.c.l.b16 %v269
  %v292 = vunpack.c.h.b16 %v269
  %v293 = vunpack.c.l.b16 %v270
  %v294 = vunpack.c.h.b16 %v270
  %v295 = vpack.c.b16 %v279, %v279
  %v296 = vpack.c.b16 %v280, %v280
  %v297 = vpack.c.b16 %v281, %v281
  %v298 = vpack.c.b16 %v282, %v282
  %v299 = vpack.c.b16 %v283, %v283
  %v300 = vpack.c.b16 %v284, %v284
  %v301 = vpack.c.b16 %v285, %v285
  %v302 = vpack.c.b16 %v286, %v286
  %v303 = vpack.c.b16 %v287, %v287
  %v304 = vpack.c.b16 %v288, %v288
  %v305 = vpack.c.b16 %v289, %v289
  %v306 = vpack.c.b16 %v290, %v290
  %v307 = vpack.c.b16 %v291, %v291
  %v308 = vpack.c.b16 %v292, %v292
  %v309 = vpack.c.b16 %v293, %v293
  %v310 = vpack.c.b16 %v294, %v294
  %327 = vst [vmem:[%s3] sm:$0xf] %v295
  %328 = vst [vmem:[%s3 + $0x4] sm:$0xf] %v296
  %329 = vst [vmem:[%s3 + $0x8] sm:$0xf] %v297
  %330 = vst [vmem:[%s3 + $0xc] sm:$0xf] %v298
  %331 = vst [vmem:[%s3 + $0x10] sm:$0xf] %v299
  %332 = vst [vmem:[%s3 + $0x14] sm:$0xf] %v300
  %333 = vst [vmem:[%s3 + $0x18] sm:$0xf] %v301
  %334 = vst [vmem:[%s3 + $0x1c] sm:$0xf] %v302
  %335 = vst [vmem:[%s3 + $0x20] sm:$0xf] %v303
  %336 = vst [vmem:[%s3 + $0x24] sm:$0xf] %v304
  %337 = vst [vmem:[%s3 + $0x28] sm:$0xf] %v305
  %338 = vst [vmem:[%s3 + $0x2c] sm:$0xf] %v306
  %339 = vst [vmem:[%s3 + $0x30] sm:$0xf] %v307
  %340 = vst [vmem:[%s3 + $0x34] sm:$0xf] %v308
  %341 = vst [vmem:[%s3 + $0x38] sm:$0xf] %v309
  %342 = vst [vmem:[%s3 + $0x3c] sm:$0xf] %v310
  // Predicated region
  $region14: #{fwd.9} parent=0 // pred_check
    _
  $region15: #{fwd.9} parent=0 // pred_check_branch
    %344 = sbr.rel (0) target = $region17
  $region16: #{fwd.9} parent=0 // pred_region
    _
  $region17: #{fwd.9} parent=0 // pred_fallthru
    _
  // Predicated region
  $region18: #{fwd.9} parent=0 // pred_check
    _
  $region19: #{fwd.9} parent=0 // pred_check_branch
    %346 = sbr.rel (0) target = $region21
  $region20: #{fwd.9} parent=0 // pred_region
    _
  $region21: #{fwd.9} parent=0 // pred_fallthru
    _

// kernel: fwd.11
$region0: #{fwd.11}
  #allocation0 [shape = 'u32[]', space=smem, size = 0x4, offset = 0x4, fixed_abs, tag = 'smem constant byte address 0x4 - core index']
  #allocation1 [shape = 'u32[144,128]{1,0:T(1,128)}', space=vmem, size = 0x12000, scoped, tag = 'internal scratch']
  %s0 = inlined_call_operand.vmem [shape: bf16[128,128], index: 0, kind: input, shape index: {}]
  %s1 = inlined_call_operand.vmem [shape: bf16[128,128], index: 1, kind: input, shape index: {}]
  %s2 = inlined_call_operand.vmem [shape: bf16[128,128], index: 2, kind: input, shape index: {}]
  %s3 = inlined_call_operand.vmem [shape: f32[1,128], index: 3, kind: input, shape index: {}]
  %s4 = inlined_call_operand.vmem [shape: bf16[128,128], index: 4, kind: output, shape index: {}]
  %s5 = sld [smem:[#allocation0]]
  $region26: #{fwd.11} parent=0
    _
  %s7 = ssub.s32 1, %s5
  %s8 = scalar_select 0, %s7, %s5
  // Predicated region
  $region2: #{fwd.11} parent=0 // pred_check
    _
  $region3: #{fwd.11} parent=0 // pred_check_branch
    %10 = sbr.rel (0) target = $region5
  $region4: #{fwd.11} parent=0 // pred_region
    _
  $region5: #{fwd.11} parent=0 // pred_fallthru
    _
  // Predicated region
  $region6: #{fwd.11} parent=0 // pred_check
    _
  $region7: #{fwd.11} parent=0 // pred_check_branch
    %12 = sbr.rel (0) target = $region9
  $region8: #{fwd.11} parent=0 // pred_region
    _
  $region9: #{fwd.11} parent=0 // pred_fallthru
    _
  // Predicated region
  $region10: #{fwd.11} parent=0 // pred_check
    _
  $region11: #{fwd.11} parent=0 // pred_check_branch
    %14 = sbr.rel (0) target = $region13
  $region12: #{fwd.11} parent=0 // pred_region
    _
  $region13: #{fwd.11} parent=0 // pred_fallthru
    _
  // Predicated region
  $region14: #{fwd.11} parent=0 // pred_check
    _
  $region15: #{fwd.11} parent=0 // pred_check_branch
    %16 = sbr.rel (0) target = $region17
  $region16: #{fwd.11} parent=0 // pred_region
    _
  $region17: #{fwd.11} parent=0 // pred_fallthru
    _
  %v18 = vld [vmem:[%s0] sm:$0xf]
  %v19 = vld [vmem:[%s0 + $0x4] sm:$0xf]
  %v20 = vld [vmem:[%s0 + $0x8] sm:$0xf]
  %v21 = vld [vmem:[%s0 + $0xc] sm:$0xf]
  %v22 = vld [vmem:[%s0 + $0x10] sm:$0xf]
  %v23 = vld [vmem:[%s0 + $0x14] sm:$0xf]
  %v24 = vld [vmem:[%s0 + $0x18] sm:$0xf]
  %v25 = vld [vmem:[%s0 + $0x1c] sm:$0xf]
  %v26 = vld [vmem:[%s0 + $0x20] sm:$0xf]
  %v27 = vld [vmem:[%s0 + $0x24] sm:$0xf]
  %v28 = vld [vmem:[%s0 + $0x28] sm:$0xf]
  %v29 = vld [vmem:[%s0 + $0x2c] sm:$0xf]
  %v30 = vld [vmem:[%s0 + $0x30] sm:$0xf]
  %v31 = vld [vmem:[%s0 + $0x34] sm:$0xf]
  %v32 = vld [vmem:[%s0 + $0x38] sm:$0xf]
  %v33 = vld [vmem:[%s0 + $0x3c] sm:$0xf]
  %v34 = vld [vmem:[%s2] sm:$0xf]
  %v35 = vld [vmem:[%s2 + $0x4] sm:$0xf]
  %v36 = vld [vmem:[%s2 + $0x8] sm:$0xf]
  %v37 = vld [vmem:[%s2 + $0xc] sm:$0xf]
  %v38 = vld [vmem:[%s2 + $0x10] sm:$0xf]
  %v39 = vld [vmem:[%s2 + $0x14] sm:$0xf]
  %v40 = vld [vmem:[%s2 + $0x18] sm:$0xf]
  %v41 = vld [vmem:[%s2 + $0x1c] sm:$0xf]
  %v42 = vld [vmem:[%s2 + $0x20] sm:$0xf]
  %v43 = vld [vmem:[%s2 + $0x24] sm:$0xf]
  %v44 = vld [vmem:[%s2 + $0x28] sm:$0xf]
  %v45 = vld [vmem:[%s2 + $0x2c] sm:$0xf]
  %v46 = vld [vmem:[%s2 + $0x30] sm:$0xf]
  %v47 = vld [vmem:[%s2 + $0x34] sm:$0xf]
  %v48 = vld [vmem:[%s2 + $0x38] sm:$0xf]
  %v49 = vld [vmem:[%s2 + $0x3c] sm:$0xf]
  %v50 = vld [vmem:[%s3] sm:$0x1]
  %v52 = vlaneseq
  %v53 = vshrl.u32 %v52, 7
  %v54 = vsub.s32 0, %v53
  %v55 = vrot.slane %v50, %v54
  %v73 = vunpack.c.l.b16 %v18
  %v74 = vunpack.c.l.b16 %v19
  %v75 = vunpack.c.l.b16 %v20
  %v76 = vunpack.c.l.b16 %v21
  %v77 = vunpack.c.l.b16 %v22
  %v78 = vunpack.c.l.b16 %v23
  %v79 = vunpack.c.l.b16 %v24
  %v80 = vunpack.c.l.b16 %v25
  %v81 = vunpack.c.l.b16 %v26
  %v82 = vunpack.c.l.b16 %v27
  %v83 = vunpack.c.l.b16 %v28
  %v84 = vunpack.c.l.b16 %v29
  %v85 = vunpack.c.l.b16 %v30
  %v86 = vunpack.c.l.b16 %v31
  %v87 = vunpack.c.l.b16 %v32
  %v88 = vunpack.c.l.b16 %v33
  %v89 = vpack.c.b16 %v74, %v73
  %v90 = vpack.c.b16 %v76, %v75
  %v91 = vpack.c.b16 %v78, %v77
  %v92 = vpack.c.b16 %v80, %v79
  %v93 = vpack.c.b16 %v82, %v81
  %v94 = vpack.c.b16 %v84, %v83
  %v95 = vpack.c.b16 %v86, %v85
  %v96 = vpack.c.b16 %v88, %v87
  %v121 = vunpack.c.l.b16 %v34
  %v122 = vunpack.c.l.b16 %v35
  %v123 = vunpack.c.l.b16 %v36
  %v124 = vunpack.c.l.b16 %v37
  %v125 = vunpack.c.l.b16 %v38
  %v126 = vunpack.c.l.b16 %v39
  %v127 = vunpack.c.l.b16 %v40
  %v128 = vunpack.c.l.b16 %v41
  %v129 = vunpack.c.l.b16 %v42
  %v130 = vunpack.c.l.b16 %v43
  %v131 = vunpack.c.l.b16 %v44
  %v132 = vunpack.c.l.b16 %v45
  %v133 = vunpack.c.l.b16 %v46
  %v134 = vunpack.c.l.b16 %v47
  %v135 = vunpack.c.l.b16 %v48
  %v136 = vunpack.c.l.b16 %v49
  %v137 = vpack.c.b16 %v122, %v121
  %v138 = vpack.c.b16 %v124, %v123
  %v139 = vpack.c.b16 %v126, %v125
  %v140 = vpack.c.b16 %v128, %v127
  %v141 = vpack.c.b16 %v130, %v129
  %v142 = vpack.c.b16 %v132, %v131
  %v143 = vpack.c.b16 %v134, %v133
  %v144 = vpack.c.b16 %v136, %v135
  %153 = vmatprep.subr.bf16.mxu0 0
  %154 = vmatpush1.bf16.msra.mxu0 %v144
  %155 = vmatprep.subr.bf16.mxu0 0
  %156 = vmatpush1.bf16.msra.mxu0 %v143
  %157 = vmatprep.subr.bf16.mxu0 0
  %158 = vmatpush1.bf16.msra.mxu0 %v142
  %159 = vmatprep.subr.bf16.mxu0 0
  %160 = vmatpush1.bf16.msra.mxu0 %v141
  %161 = vmatprep.subr.bf16.mxu0 0
  %162 = vmatpush1.bf16.msra.mxu0 %v140
  %163 = vmatprep.subr.bf16.mxu0 0
  %164 = vmatpush1.bf16.msra.mxu0 %v139
  %165 = vmatprep.subr.bf16.mxu0 0
  %166 = vmatpush1.bf16.msra.mxu0 %v138
  %167 = vmatprep.subr.bf16.mxu0 0
  %168 = vmatpush1.bf16.msra.mxu0 %v137
  %169 = vmatprep.subr.bf16.mxu0 0
  %170 = vmatpush2.bf16.msra.mxu0 0
  %171 = vmatprep.subr.bf16.mxu0 0
  %172 = vmatpush2.bf16.msra.mxu0 0
  %173 = vmatprep.subr.bf16.mxu0 0
  %174 = vmatpush2.bf16.msra.mxu0 0
  %175 = vmatprep.subr.bf16.mxu0 0
  %176 = vmatpush2.bf16.msra.mxu0 0
  %177 = vmatprep.subr.bf16.mxu0 0
  %178 = vmatpush2.bf16.msra.mxu0 0
  %179 = vmatprep.subr.bf16.mxu0 0
  %180 = vmatpush2.bf16.msra.mxu0 0
  %181 = vmatprep.subr.bf16.mxu0 0
  %182 = vmatpush2.bf16.msra.mxu0 0
  %183 = vmatprep.subr.bf16.mxu0 0
  %184 = vmatpush2.bf16.msra.mxu0 0
  %185 = vmatprep.mubr.bf16.mxu0 0
  %186 = vmatmul.mubr.bf16.gmra.mxu0 %v89
  %v187 = vpop.f32.mrf.mxu0
  %v188 = vadd.f32 %v55, %v187
  %v189 = vpop.f32.mrf.mxu0
  %v190 = vpop.f32.mrf.mxu0
  %v191 = vadd.f32 %v55, %v190
  %v192 = vpop.f32.mrf.mxu0
  %193 = vmatprep.mubr.bf16.mxu0 0
  %194 = vmatmul.mubr.bf16.gmra.mxu0 %v90
  %v195 = vpop.f32.mrf.mxu0
  %v196 = vadd.f32 %v55, %v195
  %v197 = vpop.f32.mrf.mxu0
  %v198 = vpop.f32.mrf.mxu0
  %v199 = vadd.f32 %v55, %v198
  %v200 = vpop.f32.mrf.mxu0
  %201 = vmatprep.mubr.bf16.mxu0 0
  %202 = vmatmul.mubr.bf16.gmra.mxu0 %v91
  %v203 = vpop.f32.mrf.mxu0
  %v204 = vadd.f32 %v55, %v203
  %v205 = vpop.f32.mrf.mxu0
  %v206 = vpop.f32.mrf.mxu0
  %v207 = vadd.f32 %v55, %v206
  %v208 = vpop.f32.mrf.mxu0
  %209 = vmatprep.mubr.bf16.mxu0 0
  %210 = vmatmul.mubr.bf16.gmra.mxu0 %v92
  %v211 = vpop.f32.mrf.mxu0
  %v212 = vadd.f32 %v55, %v211
  %v213 = vpop.f32.mrf.mxu0
  %v214 = vpop.f32.mrf.mxu0
  %v215 = vadd.f32 %v55, %v214
  %v216 = vpop.f32.mrf.mxu0
  %217 = vmatprep.mubr.bf16.mxu0 0
  %218 = vmatmul.mubr.bf16.gmra.mxu0 %v93
  %v219 = vpop.f32.mrf.mxu0
  %v220 = vadd.f32 %v55, %v219
  %v221 = vpop.f32.mrf.mxu0
  %v222 = vpop.f32.mrf.mxu0
  %v223 = vadd.f32 %v55, %v222
  %v224 = vpop.f32.mrf.mxu0
  %225 = vmatprep.mubr.bf16.mxu0 0
  %226 = vmatmul.mubr.bf16.gmra.mxu0 %v94
  %v227 = vpop.f32.mrf.mxu0
  %v228 = vadd.f32 %v55, %v227
  %v229 = vpop.f32.mrf.mxu0
  %v230 = vpop.f32.mrf.mxu0
  %v231 = vadd.f32 %v55, %v230
  %v232 = vpop.f32.mrf.mxu0
  %233 = vmatprep.mubr.bf16.mxu0 0
  %234 = vmatmul.mubr.bf16.gmra.mxu0 %v95
  %v235 = vpop.f32.mrf.mxu0
  %v236 = vadd.f32 %v55, %v235
  %v237 = vpop.f32.mrf.mxu0
  %v238 = vpop.f32.mrf.mxu0
  %v239 = vadd.f32 %v55, %v238
  %v240 = vpop.f32.mrf.mxu0
  %241 = vmatprep.mubr.bf16.mxu0 0
  %242 = vmatmul.mubr.bf16.gmra.mxu0 %v96
  %v243 = vpop.f32.mrf.mxu0
  %v244 = vadd.f32 %v55, %v243
  %v245 = vpop.f32.mrf.mxu0
  %v246 = vpop.f32.mrf.mxu0
  %v247 = vadd.f32 %v55, %v246
  %v248 = vpop.f32.mrf.mxu0
  %249 = vdwg.mxu0
  %v250 = vld [vmem:[%s1] sm:$0xf]
  %v251 = vld [vmem:[%s1 + $0x4] sm:$0xf]
  %v252 = vld [vmem:[%s1 + $0x8] sm:$0xf]
  %v253 = vld [vmem:[%s1 + $0xc] sm:$0xf]
  %v254 = vld [vmem:[%s1 + $0x10] sm:$0xf]
  %v255 = vld [vmem:[%s1 + $0x14] sm:$0xf]
  %v256 = vld [vmem:[%s1 + $0x18] sm:$0xf]
  %v257 = vld [vmem:[%s1 + $0x1c] sm:$0xf]
  %v258 = vld [vmem:[%s1 + $0x20] sm:$0xf]
  %v259 = vld [vmem:[%s1 + $0x24] sm:$0xf]
  %v260 = vld [vmem:[%s1 + $0x28] sm:$0xf]
  %v261 = vld [vmem:[%s1 + $0x2c] sm:$0xf]
  %v262 = vld [vmem:[%s1 + $0x30] sm:$0xf]
  %v263 = vld [vmem:[%s1 + $0x34] sm:$0xf]
  %v264 = vld [vmem:[%s1 + $0x38] sm:$0xf]
  %v265 = vld [vmem:[%s1 + $0x3c] sm:$0xf]
  %v266 = vunpack.c.l.bf16 %v250
  %v267 = vunpack.c.l.bf16 %v251
  %v268 = vunpack.c.l.bf16 %v252
  %v269 = vunpack.c.l.bf16 %v253
  %v270 = vunpack.c.l.bf16 %v254
  %v271 = vunpack.c.l.bf16 %v255
  %v272 = vunpack.c.l.bf16 %v256
  %v273 = vunpack.c.l.bf16 %v257
  %v274 = vunpack.c.l.bf16 %v258
  %v275 = vunpack.c.l.bf16 %v259
  %v276 = vunpack.c.l.bf16 %v260
  %v277 = vunpack.c.l.bf16 %v261
  %v278 = vunpack.c.l.bf16 %v262
  %v279 = vunpack.c.l.bf16 %v263
  %v280 = vunpack.c.l.bf16 %v264
  %v281 = vunpack.c.l.bf16 %v265
  %v282 = vadd.f32 %v188, %v266
  %v283 = vadd.f32 %v191, %v267
  %v284 = vadd.f32 %v196, %v268
  %v285 = vadd.f32 %v199, %v269
  %v286 = vadd.f32 %v204, %v270
  %v287 = vadd.f32 %v207, %v271
  %v288 = vadd.f32 %v212, %v272
  %v289 = vadd.f32 %v215, %v273
  %v290 = vadd.f32 %v220, %v274
  %v291 = vadd.f32 %v223, %v275
  %v292 = vadd.f32 %v228, %v276
  %v293 = vadd.f32 %v231, %v277
  %v294 = vadd.f32 %v236, %v278
  %v295 = vadd.f32 %v239, %v279
  %v296 = vadd.f32 %v244, %v280
  %v297 = vadd.f32 %v247, %v281
  %v298 = vmax.f32 %v282, 0.0
  %v299 = vmax.f32 %v283, 0.0
  %v300 = vmax.f32 %v284, 0.0
  %v301 = vmax.f32 %v285, 0.0
  %v302 = vmax.f32 %v286, 0.0
  %v303 = vmax.f32 %v287, 0.0
  %v304 = vmax.f32 %v288, 0.0
  %v305 = vmax.f32 %v289, 0.0
  %v306 = vmax.f32 %v290, 0.0
  %v307 = vmax.f32 %v291, 0.0
  %v308 = vmax.f32 %v292, 0.0
  %v309 = vmax.f32 %v293, 0.0
  %v310 = vmax.f32 %v294, 0.0
  %v311 = vmax.f32 %v295, 0.0
  %v312 = vmax.f32 %v296, 0.0
  %v313 = vmax.f32 %v297, 0.0
  %v314 = vpack.c.bf16 %v299, %v298
  %v315 = vpack.c.bf16 %v301, %v300
  %v316 = vpack.c.bf16 %v303, %v302
  %v317 = vpack.c.bf16 %v305, %v304
  %v318 = vpack.c.bf16 %v307, %v306
  %v319 = vpack.c.bf16 %v309, %v308
  %v320 = vpack.c.bf16 %v311, %v310
  %v321 = vpack.c.bf16 %v313, %v312
  %v330 = vunpack.c.l.b16 %v314
  %v331 = vunpack.c.h.b16 %v314
  %v332 = vunpack.c.l.b16 %v315
  %v333 = vunpack.c.h.b16 %v315
  %v334 = vunpack.c.l.b16 %v316
  %v335 = vunpack.c.h.b16 %v316
  %v336 = vunpack.c.l.b16 %v317
  %v337 = vunpack.c.h.b16 %v317
  %v338 = vunpack.c.l.b16 %v318
  %v339 = vunpack.c.h.b16 %v318
  %v340 = vunpack.c.l.b16 %v319
  %v341 = vunpack.c.h.b16 %v319
  %v342 = vunpack.c.l.b16 %v320
  %v343 = vunpack.c.h.b16 %v320
  %v344 = vunpack.c.l.b16 %v321
  %v345 = vunpack.c.h.b16 %v321
  %v346 = vpack.c.b16 %v330, %v330
  %v347 = vpack.c.b16 %v331, %v331
  %v348 = vpack.c.b16 %v332, %v332
  %v349 = vpack.c.b16 %v333, %v333
  %v350 = vpack.c.b16 %v334, %v334
  %v351 = vpack.c.b16 %v335, %v335
  %v352 = vpack.c.b16 %v336, %v336
  %v353 = vpack.c.b16 %v337, %v337
  %v354 = vpack.c.b16 %v338, %v338
  %v355 = vpack.c.b16 %v339, %v339
  %v356 = vpack.c.b16 %v340, %v340
  %v357 = vpack.c.b16 %v341, %v341
  %v358 = vpack.c.b16 %v342, %v342
  %v359 = vpack.c.b16 %v343, %v343
  %v360 = vpack.c.b16 %v344, %v344
  %v361 = vpack.c.b16 %v345, %v345
  %378 = vst [vmem:[%s4] sm:$0xf] %v346
  %379 = vst [vmem:[%s4 + $0x4] sm:$0xf] %v347
  %380 = vst [vmem:[%s4 + $0x8] sm:$0xf] %v348
  %381 = vst [vmem:[%s4 + $0xc] sm:$0xf] %v349
  %382 = vst [vmem:[%s4 + $0x10] sm:$0xf] %v350
  %383 = vst [vmem:[%s4 + $0x14] sm:$0xf] %v351
  %384 = vst [vmem:[%s4 + $0x18] sm:$0xf] %v352
  %385 = vst [vmem:[%s4 + $0x1c] sm:$0xf] %v353
  %386 = vst [vmem:[%s4 + $0x20] sm:$0xf] %v354
  %387 = vst [vmem:[%s4 + $0x24] sm:$0xf] %v355
  %388 = vst [vmem:[%s4 + $0x28] sm:$0xf] %v356
  %389 = vst [vmem:[%s4 + $0x2c] sm:$0xf] %v357
  %390 = vst [vmem:[%s4 + $0x30] sm:$0xf] %v358
  %391 = vst [vmem:[%s4 + $0x34] sm:$0xf] %v359
  %392 = vst [vmem:[%s4 + $0x38] sm:$0xf] %v360
  %393 = vst [vmem:[%s4 + $0x3c] sm:$0xf] %v361
  // Predicated region
  $region18: #{fwd.11} parent=0 // pred_check
    _
  $region19: #{fwd.11} parent=0 // pred_check_branch
    %395 = sbr.rel (0) target = $region21
  $region20: #{fwd.11} parent=0 // pred_region
    _
  $region21: #{fwd.11} parent=0 // pred_fallthru
    _
  // Predicated region
  $region22: #{fwd.11} parent=0 // pred_check
    _
  $region23: #{fwd.11} parent=0 // pred_check_branch
    %397 = sbr.rel (0) target = $region25
  $region24: #{fwd.11} parent=0 // pred_region
    _
  $region25: #{fwd.11} parent=0 // pred_fallthru
    _

// kernel: fwd.10
$region0: #{fwd.10}
  #allocation0 [shape = 'u32[]', space=smem, size = 0x4, offset = 0x4, fixed_abs, tag = 'smem constant byte address 0x4 - core index']
  #allocation1 [shape = 'u32[144,128]{1,0:T(1,128)}', space=vmem, size = 0x12000, scoped, tag = 'internal scratch']
  #allocation2 [shape = 'f32[10,24,128]{2,1,0:T(8,128)}', space=vmem, size = 0x1e000, scoped, tag = 'scratch operand']
  %s0 = inlined_call_operand.vmem [shape: bf16[2,8,8,128], index: 0, kind: input, shape index: {}, may-alias: {0,1,2}]
  %s1 = inlined_call_operand.vmem [shape: bf16[2,8,8,128], index: 1, kind: input, shape index: {}, may-alias: {0,1,2}]
  %s2 = inlined_call_operand.vmem [shape: bf16[2,8,8,128], index: 2, kind: input, shape index: {}, may-alias: {0,1,2}]
  %s3 = inlined_call_operand.vmem [shape: bf16[3,384,128], index: 3, kind: input, shape index: {}]
  %s4 = inlined_call_operand.vmem [shape: f32[1,128], index: 4, kind: input, shape index: {}]
  %s5 = inlined_call_operand.vmem [shape: bf16[2,8,8,128], index: 5, kind: output, shape index: {}]
  %s6 = sld [smem:[#allocation0]]
  $region53: #{fwd.10} parent=0
    _
  %s8 = ssub.s32 1, %s6
  %s9 = scalar_select 0, %s8, %s6
  loop: start=0, step=1, limit=4
  $region2: #{fwd.10} parent=0 // loop_pre_header
    _
  $region3: #{fwd.10} parent=0 // loop_header
    %s11 = sphi 0, %s15
    %p12 = scmp.ge.s32.totalorder %s11, 4
    %s18 = sphi 0, %s30
    %s19 = sphi 0, %s26
    %s20 = sphi 0, %s18
    %s21 = sphi 0, %s19
    %s22 = sphi 0, %s20
    %s23 = sphi 0, %s21
    %s35 = sphi 0, %s37
    %s38 = sphi 0, %s35
    %s39 = sphi 0, %s38
    %s55 = sphi 0, %s39
    %s71 = sphi 0, %s73
    %s74 = sphi 0, %s71
    %s75 = sphi 0, %s74
    %s91 = sphi 0, %s75
    %s107 = sphi 0, %s109
    %s110 = sphi 0, %s107
    %s111 = sphi 0, %s110
    %s127 = sphi 0, %s111
    %s131 = sphi 0, %s131
    %s133 = sphi 0, %s131
    %s134 = sphi 0, %s133
    %s148 = sphi 0, %s134
    %s152 = sphi 0, %s152
    %s154 = sphi 0, %s152
    %s155 = sphi 0, %s154
    %s169 = sphi 0, %s155
    %s177 = sphi 0, %s179
    %s180 = sphi 0, %s177
    %s181 = sphi 0, %s180
    %s197 = sphi 0, %s181
  $region4: #{fwd.10} parent=0 // loop_header_branch
    %14 = sbr.rel (%p12) target = $region8
  $region5: #{fwd.10} parent=0 // loop_body
    %s16 = ssub.s32 %s11, 1
    %s17 = ssub.s32 %s11, 2
    %s24 = sadd.s32 1, %s19
    %p25 = scmp.ge.s32.totalorder %s24, 1
    %s26 = scalar_select %p25, 0, %s24
    %s27 = sadd.s32 1, %s18
    %s28 = scalar_select %p25, %s27, %s18
    %p29 = scmp.ge.s32.totalorder %s28, 2
    %s30 = scalar_select %p29, 0, %s28
    %s31 = ssub.s32 %s18, %s30
    %s32 = ssub.s32 %s19, %s26
    %s33 = sor.u32 %s31, %s32
    %p34 = scmp.eq.s32.totalorder %s33, 0
    %s36 = sadd.s32 %s35, 1
    %s37 = scalar_select %p34, %s35, %s36
    %p40 = pneg %p34
    %p41 = scmp.eq.s32.totalorder %s11, 1
    %p42 = por %p40, %p41
    %p43 = scmp.ne.s32.totalorder %s35, %s38
    %p44 = scmp.eq.s32.totalorder %s11, 0
    %p45 = por %p43, %p44
    %p46 = scmp.ne.s32.totalorder %s35, %s38
    %p47 = scmp.eq.s32.totalorder %s16, 1
    %p48 = por %p46, %p47
    %p49 = scmp.ne.s32.totalorder %s38, %s39
    %p50 = scmp.eq.s32.totalorder %s16, 0
    %p51 = por %p49, %p50
    %p52 = scmp.ne.s32.totalorder %s38, %s39
    %p53 = scmp.eq.s32.totalorder %s17, 1
    %p54 = por %p52, %p53
    %p56 = scmp.ne.s32.totalorder %s39, %s55
    %p57 = scmp.eq.s32.totalorder %s17, 0
    %p58 = por %p56, %p57
    %s59 = smul.u32 %s19, 8
    %s60 = ssub.s32 %s59, 1
    %p61 = scmp.gt.s32.totalorder %s60, 0
    %s62 = scalar_select %p61, %s60, 0
    %s63 = smul.u32 %s26, 8
    %s64 = ssub.s32 %s63, 1
    %p65 = scmp.gt.s32.totalorder %s64, 0
    %s66 = scalar_select %p65, %s64, 0
    %s67 = ssub.s32 %s18, %s30
    %s68 = ssub.s32 %s62, %s66
    %s69 = sor.u32 %s67, %s68
    %p70 = scmp.eq.s32.totalorder %s69, 0
    %s72 = sadd.s32 %s71, 1
    %s73 = scalar_select %p70, %s71, %s72
    %p76 = pneg %p70
    %p77 = scmp.eq.s32.totalorder %s11, 1
    %p78 = por %p76, %p77
    %p79 = scmp.ne.s32.totalorder %s71, %s74
    %p80 = scmp.eq.s32.totalorder %s11, 0
    %p81 = por %p79, %p80
    %p82 = scmp.ne.s32.totalorder %s71, %s74
    %p83 = scmp.eq.s32.totalorder %s16, 1
    %p84 = por %p82, %p83
    %p85 = scmp.ne.s32.totalorder %s74, %s75
    %p86 = scmp.eq.s32.totalorder %s16, 0
    %p87 = por %p85, %p86
    %p88 = scmp.ne.s32.totalorder %s74, %s75
    %p89 = scmp.eq.s32.totalorder %s17, 1
    %p90 = por %p88, %p89
    %p92 = scmp.ne.s32.totalorder %s75, %s91
    %p93 = scmp.eq.s32.totalorder %s17, 0
    %p94 = por %p92, %p93
    %s95 = sadd.s32 %s19, 1
    %s96 = smul.u32 %s95, 8
    %p97 = scmp.lt.s32.totalorder %s96, 7
    %s98 = scalar_select %p97, %s96, 7
    %s99 = sadd.s32 %s26, 1
    %s100 = smul.u32 %s99, 8
    %p101 = scmp.lt.s32.totalorder %s100, 7
    %s102 = scalar_select %p101, %s100, 7
    %s103 = ssub.s32 %s18, %s30
    %s104 = ssub.s32 %s98, %s102
    %s105 = sor.u32 %s103, %s104
    %p106 = scmp.eq.s32.totalorder %s105, 0
    %s108 = sadd.s32 %s107, 1
    %s109 = scalar_select %p106, %s107, %s108
    %p112 = pneg %p106
    %p113 = scmp.eq.s32.totalorder %s11, 1
    %p114 = por %p112, %p113
    %p115 = scmp.ne.s32.totalorder %s107, %s110
    %p116 = scmp.eq.s32.totalorder %s11, 0
    %p117 = por %p115, %p116
    %p118 = scmp.ne.s32.totalorder %s107, %s110
    %p119 = scmp.eq.s32.totalorder %s16, 1
    %p120 = por %p118, %p119
    %p121 = scmp.ne.s32.totalorder %s110, %s111
    %p122 = scmp.eq.s32.totalorder %s16, 0
    %p123 = por %p121, %p122
    %p124 = scmp.ne.s32.totalorder %s110, %s111
    %p125 = scmp.eq.s32.totalorder %s17, 1
    %p126 = por %p124, %p125
    %p128 = scmp.ne.s32.totalorder %s111, %s127
    %p129 = scmp.eq.s32.totalorder %s17, 0
    %p130 = por %p128, %p129
    %s132 = sadd.s32 %s131, 1
    %p135 = scmp.eq.s32.totalorder %s11, 1
    %p136 = scmp.ne.s32.totalorder %s131, %s133
    %p137 = scmp.eq.s32.totalorder %s11, 0
    %p138 = por %p136, %p137
    %p139 = scmp.ne.s32.totalorder %s131, %s133
    %p140 = scmp.eq.s32.totalorder %s16, 1
    %p141 = por %p139, %p140
    %p142 = scmp.ne.s32.totalorder %s133, %s134
    %p143 = scmp.eq.s32.totalorder %s16, 0
    %p144 = por %p142, %p143
    %p145 = scmp.ne.s32.totalorder %s133, %s134
    %p146 = scmp.eq.s32.totalorder %s17, 1
    %p147 = por %p145, %p146
    %p149 = scmp.ne.s32.totalorder %s134, %s148
    %p150 = scmp.eq.s32.totalorder %s17, 0
    %p151 = por %p149, %p150
    %s153 = sadd.s32 %s152, 1
    %p156 = scmp.eq.s32.totalorder %s11, 1
    %p157 = scmp.ne.s32.totalorder %s152, %s154
    %p158 = scmp.eq.s32.totalorder %s11, 0
    %p159 = por %p157, %p158
    %p160 = scmp.ne.s32.totalorder %s152, %s154
    %p161 = scmp.eq.s32.totalorder %s16, 1
    %p162 = por %p160, %p161
    %p163 = scmp.ne.s32.totalorder %s154, %s155
    %p164 = scmp.eq.s32.totalorder %s16, 0
    %p165 = por %p163, %p164
    %p166 = scmp.ne.s32.totalorder %s154, %s155
    %p167 = scmp.eq.s32.totalorder %s17, 1
    %p168 = por %p166, %p167
    %p170 = scmp.ne.s32.totalorder %s155, %s169
    %p171 = scmp.eq.s32.totalorder %s17, 0
    %p172 = por %p170, %p171
    %s173 = ssub.s32 %s18, %s30
    %s174 = ssub.s32 %s19, %s26
    %s175 = sor.u32 %s173, %s174
    %p176 = scmp.eq.s32.totalorder %s175, 0
    %s178 = sadd.s32 %s177, 1
    %s179 = scalar_select %p176, %s177, %s178
    %p182 = pneg %p176
    %p183 = scmp.eq.s32.totalorder %s11, 1
    %p184 = por %p182, %p183
    %p185 = scmp.ne.s32.totalorder %s177, %s180
    %p186 = scmp.eq.s32.totalorder %s11, 0
    %p187 = por %p185, %p186
    %p188 = scmp.ne.s32.totalorder %s177, %s180
    %p189 = scmp.eq.s32.totalorder %s16, 1
    %p190 = por %p188, %p189
    %p191 = scmp.ne.s32.totalorder %s180, %s181
    %p192 = scmp.eq.s32.totalorder %s16, 0
    %p193 = por %p191, %p192
    %p194 = scmp.ne.s32.totalorder %s180, %s181
    %p195 = scmp.eq.s32.totalorder %s17, 1
    %p196 = por %p194, %p195
    %p198 = scmp.ne.s32.totalorder %s181, %s197
    %p199 = scmp.eq.s32.totalorder %s17, 0
    %p200 = por %p198, %p199
    %p201 = scmp.le.s32.totalorder 1, %s11
    %p202 = scmp.lt.s32.totalorder %s11, 3
    %p203 = pnand %p201, %p202
    %p204 = pneg %p203
    // Predicated region
    $region9: #{fwd.10} parent=5 // pred_check
      _
    $region10: #{fwd.10} parent=5 // pred_check_branch
      %206 = sbr.rel (%p203) target = $region12
    $region11: #{fwd.10} parent=5 // pred_region
      %s207 = ssub.s32 %s11, 1
      // Predicated region
      $region13: #{fwd.10} parent=11 // pred_check
        %p208 = pneg %p144
      $region14: #{fwd.10} parent=11 // pred_check_branch
        %210 = sbr.rel (%p208) target = $region16
      $region15: #{fwd.10} parent=11 // pred_region
        _
      $region16: #{fwd.10} parent=11 // pred_fallthru
        _
      // Predicated region
      $region17: #{fwd.10} parent=11 // pred_check
        %p211 = pneg %p165
      $region18: #{fwd.10} parent=11 // pred_check_branch
        %213 = sbr.rel (%p211) target = $region20
      $region19: #{fwd.10} parent=11 // pred_region
        _
      $region20: #{fwd.10} parent=11 // pred_fallthru
        _
    $region12: #{fwd.10} parent=5 // pred_fallthru
      _
    %p214 = scmp.lt.s32.totalorder %s11, 2
    // Predicated region
    $region21: #{fwd.10} parent=5 // pred_check
      %p215 = pneg %p214
    $region22: #{fwd.10} parent=5 // pred_check_branch
      %217 = sbr.rel (%p215) target = $region24
    $region23: #{fwd.10} parent=5 // pred_region
      // Predicated region
      $region25: #{fwd.10} parent=23 // pred_check
        %p218 = pneg %p45
      $region26: #{fwd.10} parent=23 // pred_check_branch
        %220 = sbr.rel (%p218) target = $region28
      $region27: #{fwd.10} parent=23 // pred_region
        %s221 = smul.u32 8, %s19
        %p222 = scmp.lt.s32.totalorder %s18, 1
        %s223 = scalar_select %p222, %s18, 1
        %p224 = scmp.lt.s32.totalorder %s221, 7
        %s225 = scalar_select %p224, %s221, 7
        %s226 = smul.addr %s223, 8
        %s227 = sadd.s32 %s225, %s226
        %s228 = smul.addr %s227, 4
        %s229 = scalar_lea.vmem %s0, %s228
        %s230 = smul.u32 8, %s19
      $region28: #{fwd.10} parent=23 // pred_fallthru
        _
      // Predicated region
      $region29: #{fwd.10} parent=23 // pred_check
        %p231 = pneg %p81
      $region30: #{fwd.10} parent=23 // pred_check_branch
        %233 = sbr.rel (%p231) target = $region32
      $region31: #{fwd.10} parent=23 // pred_region
        %s234 = smul.u32 %s19, 8
        %s235 = ssub.s32 %s234, 1
        %p236 = scmp.gt.s32.totalorder %s235, 0
        %s237 = scalar_select %p236, %s235, 0
        %p238 = scmp.lt.s32.totalorder %s18, 1
        %s239 = scalar_select %p238, %s18, 1
        %p240 = scmp.lt.s32.totalorder %s237, 7
        %s241 = scalar_select %p240, %s237, 7
        %s242 = smul.addr %s239, 8
        %s243 = sadd.s32 %s241, %s242
        %s244 = smul.addr %s243, 4
        %s245 = scalar_lea.vmem %s1, %s244
        %s246 = smul.u32 %s19, 8
        %s247 = ssub.s32 %s246, 1
        %p248 = scmp.gt.s32.totalorder %s247, 0
        %s249 = scalar_select %p248, %s247, 0
      $region32: #{fwd.10} parent=23 // pred_fallthru
        _
      // Predicated region
      $region33: #{fwd.10} parent=23 // pred_check
        %p250 = pneg %p117
      $region34: #{fwd.10} parent=23 // pred_check_branch
        %252 = sbr.rel (%p250) target = $region36
      $region35: #{fwd.10} parent=23 // pred_region
        %s253 = sadd.s32 %s19, 1
        %s254 = smul.u32 %s253, 8
        %p255 = scmp.lt.s32.totalorder %s254, 7
        %s256 = scalar_select %p255, %s254, 7
        %p257 = scmp.lt.s32.totalorder %s18, 1
        %s258 = scalar_select %p257, %s18, 1
        %p259 = scmp.lt.s32.totalorder %s256, 7
        %s260 = scalar_select %p259, %s256, 7
        %s261 = smul.addr %s258, 8
        %s262 = sadd.s32 %s260, %s261
        %s263 = smul.addr %s262, 4
        %s264 = scalar_lea.vmem %s2, %s263
        %s265 = sadd.s32 %s19, 1
        %s266 = smul.u32 %s265, 8
        %p267 = scmp.lt.s32.totalorder %s266, 7
        %s268 = scalar_select %p267, %s266, 7
      $region36: #{fwd.10} parent=23 // pred_fallthru
        _
    $region24: #{fwd.10} parent=5 // pred_fallthru
      _
    %p269 = scmp.le.s32.totalorder 1, %s11
    %p270 = scmp.lt.s32.totalorder %s11, 3
    %p271 = pnand %p269, %p270
    %p272 = pneg %p271
    // Predicated region
    $region37: #{fwd.10} parent=5 // pred_check
      _
    $region38: #{fwd.10} parent=5 // pred_check_branch
      %274 = sbr.rel (%p271) target = $region40
    $region39: #{fwd.10} parent=5 // pred_region
      %s275 = ssub.s32 %s11, 1
      %s276 = smul.u32 8, %s21
      %p277 = scmp.lt.s32.totalorder %s20, 1
      %s278 = scalar_select %p277, %s20, 1
      %p279 = scmp.lt.s32.totalorder %s276, 7
      %s280 = scalar_select %p279, %s276, 7
      %s281 = smul.addr %s278, 8
      %s282 = sadd.s32 %s280, %s281
      %s283 = smul.addr %s282, 4
      %s284 = scalar_lea.vmem %s0, %s283
      %p285 = pneg %p51
      %p286 = pneg %p48
      %s287 = smul.u32 %s21, 8
      %s288 = ssub.s32 %s287, 1
      %p289 = scmp.gt.s32.totalorder %s288, 0
      %s290 = scalar_select %p289, %s288, 0
      %p291 = scmp.lt.s32.totalorder %s20, 1
      %s292 = scalar_select %p291, %s20, 1
      %p293 = scmp.lt.s32.totalorder %s290, 7
      %s294 = scalar_select %p293, %s290, 7
      %s295 = smul.addr %s292, 8
      %s296 = sadd.s32 %s294, %s295
      %s297 = smul.addr %s296, 4
      %s298 = scalar_lea.vmem %s1, %s297
      %p299 = pneg %p87
      %p300 = pneg %p84
      %s301 = sadd.s32 %s21, 1
      %s302 = smul.u32 %s301, 8
      %p303 = scmp.lt.s32.totalorder %s302, 7
      %s304 = scalar_select %p303, %s302, 7
      %p305 = scmp.lt.s32.totalorder %s20, 1
      %s306 = scalar_select %p305, %s20, 1
      %p307 = scmp.lt.s32.totalorder %s304, 7
      %s308 = scalar_select %p307, %s304, 7
      %s309 = smul.addr %s306, 8
      %s310 = sadd.s32 %s308, %s309
      %s311 = smul.addr %s310, 4
      %s312 = scalar_lea.vmem %s2, %s311
      %p313 = pneg %p123
      %p314 = pneg %p120
      %p315 = pneg %p144
      %p316 = pneg %p141
      %p317 = pneg %p165
      %p318 = pneg %p162
      %p319 = pneg %p193
      %p320 = pneg %p190
      %s321 = smul.u32 8, %s21
      %p322 = scmp.lt.s32.totalorder %s20, 1
      %s323 = scalar_select %p322, %s20, 1
      %p324 = scmp.lt.s32.totalorder %s321, 7
      %s325 = scalar_select %p324, %s321, 7
      %s326 = smul.addr %s323, 8
      %s327 = sadd.s32 %s325, %s326
      %s328 = smul.addr %s327, 4
      %s329 = scalar_lea.vmem %s5, %s328
      %s330 = smul.u32 8, %s21
      %p331 = scmp.lt.s32.totalorder %s20, 1
      %s332 = scalar_select %p331, %s20, 1
      %p333 = scmp.lt.s32.totalorder %s330, 7
      %s334 = scalar_select %p333, %s330, 7
      %s335 = smul.addr %s332, 8
      %s336 = sadd.s32 %s334, %s335
      %s337 = smul.addr %s336, 4
      %s338 = scalar_lea.vmem %s0, %s337
      %s339 = smul.u32 8, %s21
      %s340 = smul.u32 %s21, 8
      %s341 = ssub.s32 %s340, 1
      %p342 = scmp.gt.s32.totalorder %s341, 0
      %s343 = scalar_select %p342, %s341, 0
      %p344 = scmp.lt.s32.totalorder %s20, 1
      %s345 = scalar_select %p344, %s20, 1
      %p346 = scmp.lt.s32.totalorder %s343, 7
      %s347 = scalar_select %p346, %s343, 7
      %s348 = smul.addr %s345, 8
      %s349 = sadd.s32 %s347, %s348
      %s350 = smul.addr %s349, 4
      %s351 = scalar_lea.vmem %s1, %s350
      %s352 = smul.u32 %s21, 8
      %s353 = ssub.s32 %s352, 1
      %p354 = scmp.gt.s32.totalorder %s353, 0
      %s355 = scalar_select %p354, %s353, 0
      %s356 = sadd.s32 %s21, 1
      %s357 = smul.u32 %s356, 8
      %p358 = scmp.lt.s32.totalorder %s357, 7
      %s359 = scalar_select %p358, %s357, 7
      %p360 = scmp.lt.s32.totalorder %s20, 1
      %s361 = scalar_select %p360, %s20, 1
      %p362 = scmp.lt.s32.totalorder %s359, 7
      %s363 = scalar_select %p362, %s359, 7
      %s364 = smul.addr %s361, 8
      %s365 = sadd.s32 %s363, %s364
      %s366 = smul.addr %s365, 4
      %s367 = scalar_lea.vmem %s2, %s366
      %s368 = sadd.s32 %s21, 1
      %s369 = smul.u32 %s368, 8
      %p370 = scmp.lt.s32.totalorder %s369, 7
      %s371 = scalar_select %p370, %s369, 7
      %s372 = smul.u32 8, %s21
      %p373 = scmp.lt.s32.totalorder %s20, 1
      %s374 = scalar_select %p373, %s20, 1
      %p375 = scmp.lt.s32.totalorder %s372, 7
      %s376 = scalar_select %p375, %s372, 7
      %s377 = smul.addr %s374, 8
      %s378 = sadd.s32 %s376, %s377
      %s379 = smul.addr %s378, 4
      %s380 = scalar_lea.vmem %s5, %s379
      %s381 = smul.u32 8, %s21
      %383 = vst [vmem:[#allocation2] sm:$0xff] 0.0
      %384 = vst [vmem:[#allocation2 + $0x18] sm:$0xff] 0.0
      %385 = vst [vmem:[#allocation2 + $0x30] sm:$0xff] 0.0
      %386 = vst [vmem:[#allocation2 + $0x48] sm:$0xff] 0.0
      %387 = vst [vmem:[#allocation2 + $0x60] sm:$0xff] 0.0
      %388 = vst [vmem:[#allocation2 + $0x78] sm:$0xff] 0.0
      %389 = vst [vmem:[#allocation2 + $0x90] sm:$0xff] 0.0
      %390 = vst [vmem:[#allocation2 + $0xa8] sm:$0xff] 0.0
      %391 = vst [vmem:[#allocation2 + $0xc0] sm:$0xff] 0.0
      %392 = vst [vmem:[#allocation2 + $0xd8] sm:$0xff] 0.0
      %393 = vst [vmem:[#allocation2 + $0x10] sm:$0xff] 0.0
      %394 = vst [vmem:[#allocation2 + $0x28] sm:$0xff] 0.0
      %395 = vst [vmem:[#allocation2 + $0x40] sm:$0xff] 0.0
      %396 = vst [vmem:[#allocation2 + $0x58] sm:$0xff] 0.0
      %397 = vst [vmem:[#allocation2 + $0x70] sm:$0xff] 0.0
      %398 = vst [vmem:[#allocation2 + $0x88] sm:$0xff] 0.0
      %399 = vst [vmem:[#allocation2 + $0xa0] sm:$0xff] 0.0
      %400 = vst [vmem:[#allocation2 + $0xb8] sm:$0xff] 0.0
      %401 = vst [vmem:[#allocation2 + $0xd0] sm:$0xff] 0.0
      %402 = vst [vmem:[#allocation2 + $0xe8] sm:$0xff] 0.0
      %v403 = vld [vmem:[%s338] sm:$0xf]
      %v404 = vld [vmem:[%s338 + $0x4] sm:$0xf]
      %v405 = vld [vmem:[%s338 + $0x8] sm:$0xf]
      %v406 = vld [vmem:[%s338 + $0xc] sm:$0xf]
      %v407 = vld [vmem:[%s338 + $0x10] sm:$0xf]
      %v408 = vld [vmem:[%s338 + $0x14] sm:$0xf]
      %v409 = vld [vmem:[%s338 + $0x18] sm:$0xf]
      %v410 = vld [vmem:[%s338 + $0x1c] sm:$0xf]
      %v411 = vunpack.c.l.bf16 %v403
      %v412 = vunpack.c.l.bf16 %v404
      %v413 = vunpack.c.l.bf16 %v405
      %v414 = vunpack.c.l.bf16 %v406
      %v415 = vunpack.c.l.bf16 %v407
      %v416 = vunpack.c.l.bf16 %v408
      %v417 = vunpack.c.l.bf16 %v409
      %v418 = vunpack.c.l.bf16 %v410
      %s419 = scalar_lea.vmem [#allocation2], 24
      %420 = vst [vmem:[%s419 + $0x8] sm:$0xff] %v411
      %421 = vst [vmem:[%s419 + $0x20] sm:$0xff] %v412
      %422 = vst [vmem:[%s419 + $0x38] sm:$0xff] %v413
      %423 = vst [vmem:[%s419 + $0x50] sm:$0xff] %v414
      %424 = vst [vmem:[%s419 + $0x68] sm:$0xff] %v415
      %425 = vst [vmem:[%s419 + $0x80] sm:$0xff] %v416
      %426 = vst [vmem:[%s419 + $0x98] sm:$0xff] %v417
      %427 = vst [vmem:[%s419 + $0xb0] sm:$0xff] %v418
      %v428 = vld [vmem:[%s351] sm:$0xf]
      %v429 = vunpack.c.l.bf16 %v428
      %p430 = scmp.eq.s32.totalorder %s21, 0
      %s431 = scalar_select %p430, 1, 0
      %v432 = vstv %s431
      %vm433 = vcmp.eq.s32.totalorder %v432, 1
      %v434 = vsel %vm433, 0.0, %v429
      %435 = vst [vmem:[#allocation2 + $0x8] sm:$0xff] %v434
      %v436 = vld [vmem:[%s367] sm:$0xf]
      %v437 = vunpack.c.l.bf16 %v436
      %v438 = vsel %vm433, 0.0, %v437
      %s439 = scalar_lea.vmem [#allocation2], 216
      %440 = vst [vmem:[%s439 + $0x8] sm:$0xff] %v438
      %v441 = vld [vmem:[#allocation2 + $0x7] sm:$0xff]
      %v442 = vld [vmem:[#allocation2 + $0x1f] sm:$0xff]
      %v443 = vld [vmem:[#allocation2 + $0x37] sm:$0xff]
      %v444 = vld [vmem:[#allocation2 + $0x4f] sm:$0xff]
      %v445 = vld [vmem:[#allocation2 + $0x67] sm:$0xff]
      %v446 = vld [vmem:[#allocation2 + $0x7f] sm:$0xff]
      %v447 = vld [vmem:[#allocation2 + $0x97] sm:$0xff]
      %v448 = vld [vmem:[#allocation2 + $0xaf] sm:$0xff]
      %v449 = vld [vmem:[#allocation2 + $0x8] sm:$0xff]
      %v450 = vld [vmem:[#allocation2 + $0x20] sm:$0xff]
      %v451 = vld [vmem:[#allocation2 + $0x38] sm:$0xff]
      %v452 = vld [vmem:[#allocation2 + $0x50] sm:$0xff]
      %v453 = vld [vmem:[#allocation2 + $0x68] sm:$0xff]
      %v454 = vld [vmem:[#allocation2 + $0x80] sm:$0xff]
      %v455 = vld [vmem:[#allocation2 + $0x98] sm:$0xff]
      %v456 = vld [vmem:[#allocation2 + $0xb0] sm:$0xff]
      %v457 = vld [vmem:[#allocation2 + $0x9] sm:$0xff]
      %v458 = vld [vmem:[#allocation2 + $0x21] sm:$0xff]
      %v459 = vld [vmem:[#allocation2 + $0x39] sm:$0xff]
      %v460 = vld [vmem:[#allocation2 + $0x51] sm:$0xff]
      %v461 = vld [vmem:[#allocation2 + $0x69] sm:$0xff]
      %v462 = vld [vmem:[#allocation2 + $0x81] sm:$0xff]
      %v463 = vld [vmem:[#allocation2 + $0x99] sm:$0xff]
      %v464 = vld [vmem:[#allocation2 + $0xb1] sm:$0xff]
      %v465 = vpack.c.bf16 %v442, %v441
      %v466 = vpack.c.bf16 %v450, %v449
      %v467 = vpack.c.bf16 %v458, %v457
      %v468 = vpack.c.bf16 %v444, %v443
      %v469 = vpack.c.bf16 %v452, %v451
      %v470 = vpack.c.bf16 %v460, %v459
      %v471 = vpack.c.bf16 %v446, %v445
      %v472 = vpack.c.bf16 %v454, %v453
      %v473 = vpack.c.bf16 %v462, %v461
      %v474 = vpack.c.bf16 %v448, %v447
      %v475 = vpack.c.bf16 %v456, %v455
      %v476 = vpack.c.bf16 %v464, %v463
      %v477 = vld [vmem:[%s3] sm:$0xf]
      %v478 = vld [vmem:[%s3 + $0x4] sm:$0xf]
      %v479 = vld [vmem:[%s3 + $0x8] sm:$0xf]
      %v480 = vld [vmem:[%s3 + $0xc] sm:$0xf]
      %v481 = vld [vmem:[%s3 + $0x10] sm:$0xf]
      %v482 = vld [vmem:[%s3 + $0x14] sm:$0xf]
      %v483 = vld [vmem:[%s3 + $0x18] sm:$0xf]
      %v484 = vld [vmem:[%s3 + $0x1c] sm:$0xf]
      %v485 = vld [vmem:[%s3 + $0x20] sm:$0xf]
      %v486 = vld [vmem:[%s3 + $0x24] sm:$0xf]
      %v487 = vld [vmem:[%s3 + $0x28] sm:$0xf]
      %v488 = vld [vmem:[%s3 + $0x2c] sm:$0xf]
      %v489 = vld [vmem:[%s3 + $0x30] sm:$0xf]
      %v490 = vld [vmem:[%s3 + $0x34] sm:$0xf]
      %v491 = vld [vmem:[%s3 + $0x38] sm:$0xf]
      %v492 = vld [vmem:[%s3 + $0x3c] sm:$0xf]
      %v493 = vld [vmem:[%s3 + $0x40] sm:$0xf]
      %v494 = vld [vmem:[%s3 + $0x44] sm:$0xf]
      %v495 = vld [vmem:[%s3 + $0x48] sm:$0xf]
      %v496 = vld [vmem:[%s3 + $0x4c] sm:$0xf]
      %v497 = vld [vmem:[%s3 + $0x50] sm:$0xf]
      %v498 = vld [vmem:[%s3 + $0x54] sm:$0xf]
      %v499 = vld [vmem:[%s3 + $0x58] sm:$0xf]
      %v500 = vld [vmem:[%s3 + $0x5c] sm:$0xf]
      %v501 = vld [vmem:[%s3 + $0x60] sm:$0xf]
      %v502 = vld [vmem:[%s3 + $0x64] sm:$0xf]
      %v503 = vld [vmem:[%s3 + $0x68] sm:$0xf]
      %v504 = vld [vmem:[%s3 + $0x6c] sm:$0xf]
      %v505 = vld [vmem:[%s3 + $0x70] sm:$0xf]
      %v506 = vld [vmem:[%s3 + $0x74] sm:$0xf]
      %v507 = vld [vmem:[%s3 + $0x78] sm:$0xf]
      %v508 = vld [vmem:[%s3 + $0x7c] sm:$0xf]
      %v509 = vld [vmem:[%s3 + $0x80] sm:$0xf]
      %v510 = vld [vmem:[%s3 + $0x84] sm:$0xf]
      %v511 = vld [vmem:[%s3 + $0x88] sm:$0xf]
      %v512 = vld [vmem:[%s3 + $0x8c] sm:$0xf]
      %v513 = vld [vmem:[%s3 + $0x90] sm:$0xf]
      %v514 = vld [vmem:[%s3 + $0x94] sm:$0xf]
      %v515 = vld [vmem:[%s3 + $0x98] sm:$0xf]
      %v516 = vld [vmem:[%s3 + $0x9c] sm:$0xf]
      %v517 = vld [vmem:[%s3 + $0xa0] sm:$0xf]
      %v518 = vld [vmem:[%s3 + $0xa4] sm:$0xf]
      %v519 = vld [vmem:[%s3 + $0xa8] sm:$0xf]
      %v520 = vld [vmem:[%s3 + $0xac] sm:$0xf]
      %v521 = vld [vmem:[%s3 + $0xb0] sm:$0xf]
      %v522 = vld [vmem:[%s3 + $0xb4] sm:$0xf]
      %v523 = vld [vmem:[%s3 + $0xb8] sm:$0xf]
      %v524 = vld [vmem:[%s3 + $0xbc] sm:$0xf]
      %v525 = vld [vmem:[%s419 + $0x7] sm:$0xff]
      %v526 = vld [vmem:[%s419 + $0x1f] sm:$0xff]
      %v527 = vld [vmem:[%s419 + $0x37] sm:$0xff]
      %v528 = vld [vmem:[%s419 + $0x4f] sm:$0xff]
      %v529 = vld [vmem:[%s419 + $0x67] sm:$0xff]
      %v530 = vld [vmem:[%s419 + $0x7f] sm:$0xff]
      %v531 = vld [vmem:[%s419 + $0x97] sm:$0xff]
      %v532 = vld [vmem:[%s419 + $0xaf] sm:$0xff]
      %v533 = vld [vmem:[%s419 + $0x8] sm:$0xff]
      %v534 = vld [vmem:[%s419 + $0x20] sm:$0xff]
      %v535 = vld [vmem:[%s419 + $0x38] sm:$0xff]
      %v536 = vld [vmem:[%s419 + $0x50] sm:$0xff]
      %v537 = vld [vmem:[%s419 + $0x68] sm:$0xff]
      %v538 = vld [vmem:[%s419 + $0x80] sm:$0xff]
      %v539 = vld [vmem:[%s419 + $0x98] sm:$0xff]
      %v540 = vld [vmem:[%s419 + $0xb0] sm:$0xff]
      %v541 = vld [vmem:[%s419 + $0x9] sm:$0xff]
      %v542 = vld [vmem:[%s419 + $0x21] sm:$0xff]
      %v543 = vld [vmem:[%s419 + $0x39] sm:$0xff]
      %v544 = vld [vmem:[%s419 + $0x51] sm:$0xff]
      %v545 = vld [vmem:[%s419 + $0x69] sm:$0xff]
      %v546 = vld [vmem:[%s419 + $0x81] sm:$0xff]
      %v547 = vld [vmem:[%s419 + $0x99] sm:$0xff]
      %v548 = vld [vmem:[%s419 + $0xb1] sm:$0xff]
      %v549 = vpack.c.bf16 %v526, %v525
      %v550 = vpack.c.bf16 %v534, %v533
      %v551 = vpack.c.bf16 %v542, %v541
      %v552 = vpack.c.bf16 %v528, %v527
      %v553 = vpack.c.bf16 %v536, %v535
      %v554 = vpack.c.bf16 %v544, %v543
      %v555 = vpack.c.bf16 %v530, %v529
      %v556 = vpack.c.bf16 %v538, %v537
      %v557 = vpack.c.bf16 %v546, %v545
      %v558 = vpack.c.bf16 %v532, %v531
      %v559 = vpack.c.bf16 %v540, %v539
      %v560 = vpack.c.bf16 %v548, %v547
      %s561 = scalar_lea.vmem %s3, 192
      %v562 = vld [vmem:[%s561] sm:$0xf]
      %v563 = vld [vmem:[%s561 + $0x4] sm:$0xf]
      %v564 = vld [vmem:[%s561 + $0x8] sm:$0xf]
      %v565 = vld [vmem:[%s561 + $0xc] sm:$0xf]
      %v566 = vld [vmem:[%s561 + $0x10] sm:$0xf]
      %v567 = vld [vmem:[%s561 + $0x14] sm:$0xf]
      %v568 = vld [vmem:[%s561 + $0x18] sm:$0xf]
      %v569 = vld [vmem:[%s561 + $0x1c] sm:$0xf]
      %v570 = vld [vmem:[%s561 + $0x20] sm:$0xf]
      %v571 = vld [vmem:[%s561 + $0x24] sm:$0xf]
      %v572 = vld [vmem:[%s561 + $0x28] sm:$0xf]
      %v573 = vld [vmem:[%s561 + $0x2c] sm:$0xf]
      %v574 = vld [vmem:[%s561 + $0x30] sm:$0xf]
      %v575 = vld [vmem:[%s561 + $0x34] sm:$0xf]
      %v576 = vld [vmem:[%s561 + $0x38] sm:$0xf]
      %v577 = vld [vmem:[%s561 + $0x3c] sm:$0xf]
      %v578 = vld [vmem:[%s561 + $0x40] sm:$0xf]
      %v579 = vld [vmem:[%s561 + $0x44] sm:$0xf]
      %v580 = vld [vmem:[%s561 + $0x48] sm:$0xf]
      %v581 = vld [vmem:[%s561 + $0x4c] sm:$0xf]
      %v582 = vld [vmem:[%s561 + $0x50] sm:$0xf]
      %v583 = vld [vmem:[%s561 + $0x54] sm:$0xf]
      %v584 = vld [vmem:[%s561 + $0x58] sm:$0xf]
      %v585 = vld [vmem:[%s561 + $0x5c] sm:$0xf]
      %v586 = vld [vmem:[%s561 + $0x60] sm:$0xf]
      %v587 = vld [vmem:[%s561 + $0x64] sm:$0xf]
      %v588 = vld [vmem:[%s561 + $0x68] sm:$0xf]
      %v589 = vld [vmem:[%s561 + $0x6c] sm:$0xf]
      %v590 = vld [vmem:[%s561 + $0x70] sm:$0xf]
      %v591 = vld [vmem:[%s561 + $0x74] sm:$0xf]
      %v592 = vld [vmem:[%s561 + $0x78] sm:$0xf]
      %v593 = vld [vmem:[%s561 + $0x7c] sm:$0xf]
      %v594 = vld [vmem:[%s561 + $0x80] sm:$0xf]
      %v595 = vld [vmem:[%s561 + $0x84] sm:$0xf]
      %v596 = vld [vmem:[%s561 + $0x88] sm:$0xf]
      %v597 = vld [vmem:[%s561 + $0x8c] sm:$0xf]
      %v598 = vld [vmem:[%s561 + $0x90] sm:$0xf]
      %v599 = vld [vmem:[%s561 + $0x94] sm:$0xf]
      %v600 = vld [vmem:[%s561 + $0x98] sm:$0xf]
      %v601 = vld [vmem:[%s561 + $0x9c] sm:$0xf]
      %v602 = vld [vmem:[%s561 + $0xa0] sm:$0xf]
      %v603 = vld [vmem:[%s561 + $0xa4] sm:$0xf]
      %v604 = vld [vmem:[%s561 + $0xa8] sm:$0xf]
      %v605 = vld [vmem:[%s561 + $0xac] sm:$0xf]
      %v606 = vld [vmem:[%s561 + $0xb0] sm:$0xf]
      %v607 = vld [vmem:[%s561 + $0xb4] sm:$0xf]
      %v608 = vld [vmem:[%s561 + $0xb8] sm:$0xf]
      %v609 = vld [vmem:[%s561 + $0xbc] sm:$0xf]
      %v658 = vunpack.c.l.b16 %v562
      %v659 = vunpack.c.l.b16 %v563
      %v660 = vunpack.c.l.b16 %v564
      %v661 = vunpack.c.l.b16 %v565
      %v662 = vunpack.c.l.b16 %v566
      %v663 = vunpack.c.l.b16 %v567
      %v664 = vunpack.c.l.b16 %v568
      %v665 = vunpack.c.l.b16 %v569
      %v666 = vunpack.c.l.b16 %v570
      %v667 = vunpack.c.l.b16 %v571
      %v668 = vunpack.c.l.b16 %v572
      %v669 = vunpack.c.l.b16 %v573
      %v670 = vunpack.c.l.b16 %v574
      %v671 = vunpack.c.l.b16 %v575
      %v672 = vunpack.c.l.b16 %v576
      %v673 = vunpack.c.l.b16 %v577
      %v674 = vunpack.c.l.b16 %v578
      %v675 = vunpack.c.l.b16 %v579
      %v676 = vunpack.c.l.b16 %v580
      %v677 = vunpack.c.l.b16 %v581
      %v678 = vunpack.c.l.b16 %v582
      %v679 = vunpack.c.l.b16 %v583
      %v680 = vunpack.c.l.b16 %v584
      %v681 = vunpack.c.l.b16 %v585
      %v682 = vunpack.c.l.b16 %v586
      %v683 = vunpack.c.l.b16 %v587
      %v684 = vunpack.c.l.b16 %v588
      %v685 = vunpack.c.l.b16 %v589
      %v686 = vunpack.c.l.b16 %v590
      %v687 = vunpack.c.l.b16 %v591
      %v688 = vunpack.c.l.b16 %v592
      %v689 = vunpack.c.l.b16 %v593
      %v690 = vunpack.c.l.b16 %v594
      %v691 = vunpack.c.l.b16 %v595
      %v692 = vunpack.c.l.b16 %v596
      %v693 = vunpack.c.l.b16 %v597
      %v694 = vunpack.c.l.b16 %v598
      %v695 = vunpack.c.l.b16 %v599
      %v696 = vunpack.c.l.b16 %v600
      %v697 = vunpack.c.l.b16 %v601
      %v698 = vunpack.c.l.b16 %v602
      %v699 = vunpack.c.l.b16 %v603
      %v700 = vunpack.c.l.b16 %v604
      %v701 = vunpack.c.l.b16 %v605
      %v702 = vunpack.c.l.b16 %v606
      %v703 = vunpack.c.l.b16 %v607
      %v704 = vunpack.c.l.b16 %v608
      %v705 = vunpack.c.l.b16 %v609
      %v706 = vpack.c.b16 %v659, %v658
      %v707 = vpack.c.b16 %v661, %v660
      %v708 = vpack.c.b16 %v663, %v662
      %v709 = vpack.c.b16 %v665, %v664
      %v710 = vpack.c.b16 %v667, %v666
      %v711 = vpack.c.b16 %v669, %v668
      %v712 = vpack.c.b16 %v671, %v670
      %v713 = vpack.c.b16 %v673, %v672
      %v714 = vpack.c.b16 %v675, %v674
      %v715 = vpack.c.b16 %v677, %v676
      %v716 = vpack.c.b16 %v679, %v678
      %v717 = vpack.c.b16 %v681, %v680
      %v718 = vpack.c.b16 %v683, %v682
      %v719 = vpack.c.b16 %v685, %v684
      %v720 = vpack.c.b16 %v687, %v686
      %v721 = vpack.c.b16 %v689, %v688
      %v722 = vpack.c.b16 %v691, %v690
      %v723 = vpack.c.b16 %v693, %v692
      %v724 = vpack.c.b16 %v695, %v694
      %v725 = vpack.c.b16 %v697, %v696
      %v726 = vpack.c.b16 %v699, %v698
      %v727 = vpack.c.b16 %v701, %v700
      %v728 = vpack.c.b16 %v703, %v702
      %v729 = vpack.c.b16 %v705, %v704
      %754 = vmatprep.subr.bf16.mxu0 0
      %755 = vmatpush1.bf16.msra.mxu0 %v713
      %756 = vmatprep.subr.bf16.mxu0 0
      %757 = vmatpush1.bf16.msra.mxu0 %v712
      %758 = vmatprep.subr.bf16.mxu0 0
      %759 = vmatpush1.bf16.msra.mxu0 %v711
      %760 = vmatprep.subr.bf16.mxu0 0
      %761 = vmatpush1.bf16.msra.mxu0 %v710
      %762 = vmatprep.subr.bf16.mxu0 0
      %763 = vmatpush1.bf16.msra.mxu0 %v709
      %764 = vmatprep.subr.bf16.mxu0 0
      %765 = vmatpush1.bf16.msra.mxu0 %v708
      %766 = vmatprep.subr.bf16.mxu0 0
      %767 = vmatpush1.bf16.msra.mxu0 %v707
      %768 = vmatprep.subr.bf16.mxu0 0
      %769 = vmatpush1.bf16.msra.mxu0 %v706
      %770 = vmatprep.subr.bf16.mxu0 0
      %771 = vmatpush2.bf16.msra.mxu0 %v721
      %772 = vmatprep.subr.bf16.mxu0 0
      %773 = vmatpush2.bf16.msra.mxu0 %v720
      %774 = vmatprep.subr.bf16.mxu0 0
      %775 = vmatpush2.bf16.msra.mxu0 %v719
      %776 = vmatprep.subr.bf16.mxu0 0
      %777 = vmatpush2.bf16.msra.mxu0 %v718
      %778 = vmatprep.subr.bf16.mxu0 0
      %779 = vmatpush2.bf16.msra.mxu0 %v717
      %780 = vmatprep.subr.bf16.mxu0 0
      %781 = vmatpush2.bf16.msra.mxu0 %v716
      %782 = vmatprep.subr.bf16.mxu0 0
      %783 = vmatpush2.bf16.msra.mxu0 %v715
      %784 = vmatprep.subr.bf16.mxu0 0
      %785 = vmatpush2.bf16.msra.mxu0 %v714
      %786 = vmatprep.mubr.bf16.mxu0 %v550
      %787 = vmatmul.mubr.bf16.gmra.mxu0 %v549
      %v788 = vpop.f32.mrf.mxu0
      %v789 = vadd.f32 0.0, %v788
      %v790 = vpop.f32.mrf.mxu0
      %v791 = vpop.f32.mrf.mxu0
      %v792 = vadd.f32 0.0, %v791
      %v793 = vpop.f32.mrf.mxu0
      %794 = vmatprep.mubr.bf16.mxu0 %v553
      %795 = vmatmul.mubr.bf16.gmra.mxu0 %v552
      %v796 = vpop.f32.mrf.mxu0
      %v797 = vadd.f32 0.0, %v796
      %v798 = vpop.f32.mrf.mxu0
      %v799 = vpop.f32.mrf.mxu0
      %v800 = vadd.f32 0.0, %v799
      %v801 = vpop.f32.mrf.mxu0
      %802 = vmatprep.mubr.bf16.mxu0 %v556
      %803 = vmatmul.mubr.bf16.gmra.mxu0 %v555
      %v804 = vpop.f32.mrf.mxu0
      %v805 = vadd.f32 0.0, %v804
      %v806 = vpop.f32.mrf.mxu0
      %v807 = vpop.f32.mrf.mxu0
      %v808 = vadd.f32 0.0, %v807
      %v809 = vpop.f32.mrf.mxu0
      %810 = vmatprep.mubr.bf16.mxu0 %v559
      %811 = vmatmul.mubr.bf16.gmra.mxu0 %v558
      %v812 = vpop.f32.mrf.mxu0
      %v813 = vadd.f32 0.0, %v812
      %v814 = vpop.f32.mrf.mxu0
      %v815 = vpop.f32.mrf.mxu0
      %v816 = vadd.f32 0.0, %v815
      %v817 = vpop.f32.mrf.mxu0
      %818 = vdwg.mxu0
      %819 = vmatprep.subr.bf16.mxu0 0
      %820 = vmatpush1.bf16.msra.mxu0 %v729
      %821 = vmatprep.subr.bf16.mxu0 0
      %822 = vmatpush1.bf16.msra.mxu0 %v728
      %823 = vmatprep.subr.bf16.mxu0 0
      %824 = vmatpush1.bf16.msra.mxu0 %v727
      %825 = vmatprep.subr.bf16.mxu0 0
      %826 = vmatpush1.bf16.msra.mxu0 %v726
      %827 = vmatprep.subr.bf16.mxu0 0
      %828 = vmatpush1.bf16.msra.mxu0 %v725
      %829 = vmatprep.subr.bf16.mxu0 0
      %830 = vmatpush1.bf16.msra.mxu0 %v724
      %831 = vmatprep.subr.bf16.mxu0 0
      %832 = vmatpush1.bf16.msra.mxu0 %v723
      %833 = vmatprep.subr.bf16.mxu0 0
      %834 = vmatpush1.bf16.msra.mxu0 %v722
      %835 = vmatprep.subr.bf16.mxu0 0
      %836 = vmatpush2.bf16.msra.mxu0 0
      %837 = vmatprep.subr.bf16.mxu0 0
      %838 = vmatpush2.bf16.msra.mxu0 0
      %839 = vmatprep.subr.bf16.mxu0 0
      %840 = vmatpush2.bf16.msra.mxu0 0
      %841 = vmatprep.subr.bf16.mxu0 0
      %842 = vmatpush2.bf16.msra.mxu0 0
      %843 = vmatprep.subr.bf16.mxu0 0
      %844 = vmatpush2.bf16.msra.mxu0 0
      %845 = vmatprep.subr.bf16.mxu0 0
      %846 = vmatpush2.bf16.msra.mxu0 0
      %847 = vmatprep.subr.bf16.mxu0 0
      %848 = vmatpush2.bf16.msra.mxu0 0
      %849 = vmatprep.subr.bf16.mxu0 0
      %850 = vmatpush2.bf16.msra.mxu0 0
      %851 = vmatprep.mubr.bf16.mxu0 0
      %852 = vmatmul.mubr.bf16.gmra.mxu0 %v551
      %v853 = vpop.f32.mrf.mxu0
      %v854 = vadd.f32 %v789, %v853
      %v855 = vpop.f32.mrf.mxu0
      %v856 = vpop.f32.mrf.mxu0
      %v857 = vadd.f32 %v792, %v856
      %v858 = vpop.f32.mrf.mxu0
      %859 = vmatprep.mubr.bf16.mxu0 0
      %860 = vmatmul.mubr.bf16.gmra.mxu0 %v554
      %v861 = vpop.f32.mrf.mxu0
      %v862 = vadd.f32 %v797, %v861
      %v863 = vpop.f32.mrf.mxu0
      %v864 = vpop.f32.mrf.mxu0
      %v865 = vadd.f32 %v800, %v864
      %v866 = vpop.f32.mrf.mxu0
      %867 = vmatprep.mubr.bf16.mxu0 0
      %868 = vmatmul.mubr.bf16.gmra.mxu0 %v557
      %v869 = vpop.f32.mrf.mxu0
      %v870 = vadd.f32 %v805, %v869
      %v871 = vpop.f32.mrf.mxu0
      %v872 = vpop.f32.mrf.mxu0
      %v873 = vadd.f32 %v808, %v872
      %v874 = vpop.f32.mrf.mxu0
      %875 = vmatprep.mubr.bf16.mxu0 0
      %876 = vmatmul.mubr.bf16.gmra.mxu0 %v560
      %v877 = vpop.f32.mrf.mxu0
      %v878 = vadd.f32 %v813, %v877
      %v879 = vpop.f32.mrf.mxu0
      %v880 = vpop.f32.mrf.mxu0
      %v881 = vadd.f32 %v816, %v880
      %v882 = vpop.f32.mrf.mxu0
      %883 = vdwg.mxu0
      %v932 = vunpack.c.l.b16 %v477
      %v933 = vunpack.c.l.b16 %v478
      %v934 = vunpack.c.l.b16 %v479
      %v935 = vunpack.c.l.b16 %v480
      %v936 = vunpack.c.l.b16 %v481
      %v937 = vunpack.c.l.b16 %v482
      %v938 = vunpack.c.l.b16 %v483
      %v939 = vunpack.c.l.b16 %v484
      %v940 = vunpack.c.l.b16 %v485
      %v941 = vunpack.c.l.b16 %v486
      %v942 = vunpack.c.l.b16 %v487
      %v943 = vunpack.c.l.b16 %v488
      %v944 = vunpack.c.l.b16 %v489
      %v945 = vunpack.c.l.b16 %v490
      %v946 = vunpack.c.l.b16 %v491
      %v947 = vunpack.c.l.b16 %v492
      %v948 = vunpack.c.l.b16 %v493
      %v949 = vunpack.c.l.b16 %v494
      %v950 = vunpack.c.l.b16 %v495
      %v951 = vunpack.c.l.b16 %v496
      %v952 = vunpack.c.l.b16 %v497
      %v953 = vunpack.c.l.b16 %v498
      %v954 = vunpack.c.l.b16 %v499
      %v955 = vunpack.c.l.b16 %v500
      %v956 = vunpack.c.l.b16 %v501
      %v957 = vunpack.c.l.b16 %v502
      %v958 = vunpack.c.l.b16 %v503
      %v959 = vunpack.c.l.b16 %v504
      %v960 = vunpack.c.l.b16 %v505
      %v961 = vunpack.c.l.b16 %v506
      %v962 = vunpack.c.l.b16 %v507
      %v963 = vunpack.c.l.b16 %v508
      %v964 = vunpack.c.l.b16 %v509
      %v965 = vunpack.c.l.b16 %v510
      %v966 = vunpack.c.l.b16 %v511
      %v967 = vunpack.c.l.b16 %v512
      %v968 = vunpack.c.l.b16 %v513
      %v969 = vunpack.c.l.b16 %v514
      %v970 = vunpack.c.l.b16 %v515
      %v971 = vunpack.c.l.b16 %v516
      %v972 = vunpack.c.l.b16 %v517
      %v973 = vunpack.c.l.b16 %v518
      %v974 = vunpack.c.l.b16 %v519
      %v975 = vunpack.c.l.b16 %v520
      %v976 = vunpack.c.l.b16 %v521
      %v977 = vunpack.c.l.b16 %v522
      %v978 = vunpack.c.l.b16 %v523
      %v979 = vunpack.c.l.b16 %v524
      %v980 = vpack.c.b16 %v933, %v932
      %v981 = vpack.c.b16 %v935, %v934
      %v982 = vpack.c.b16 %v937, %v936
      %v983 = vpack.c.b16 %v939, %v938
      %v984 = vpack.c.b16 %v941, %v940
      %v985 = vpack.c.b16 %v943, %v942
      %v986 = vpack.c.b16 %v945, %v944
      %v987 = vpack.c.b16 %v947, %v946
      %v988 = vpack.c.b16 %v949, %v948
      %v989 = vpack.c.b16 %v951, %v950
      %v990 = vpack.c.b16 %v953, %v952
      %v991 = vpack.c.b16 %v955, %v954
      %v992 = vpack.c.b16 %v957, %v956
      %v993 = vpack.c.b16 %v959, %v958
      %v994 = vpack.c.b16 %v961, %v960
      %v995 = vpack.c.b16 %v963, %v962
      %v996 = vpack.c.b16 %v965, %v964
      %v997 = vpack.c.b16 %v967, %v966
      %v998 = vpack.c.b16 %v969, %v968
      %v999 = vpack.c.b16 %v971, %v970
      %v1000 = vpack.c.b16 %v973, %v972
      %v1001 = vpack.c.b16 %v975, %v974
      %v1002 = vpack.c.b16 %v977, %v976
      %v1003 = vpack.c.b16 %v979, %v978
      %1028 = vmatprep.subr.bf16.mxu0 0
      %1029 = vmatpush1.bf16.msra.mxu0 %v987
      %1030 = vmatprep.subr.bf16.mxu0 0
      %1031 = vmatpush1.bf16.msra.mxu0 %v986
      %1032 = vmatprep.subr.bf16.mxu0 0
      %1033 = vmatpush1.bf16.msra.mxu0 %v985
      %1034 = vmatprep.subr.bf16.mxu0 0
      %1035 = vmatpush1.bf16.msra.mxu0 %v984
      %1036 = vmatprep.subr.bf16.mxu0 0
      %1037 = vmatpush1.bf16.msra.mxu0 %v983
      %1038 = vmatprep.subr.bf16.mxu0 0
      %1039 = vmatpush1.bf16.msra.mxu0 %v982
      %1040 = vmatprep.subr.bf16.mxu0 0
      %1041 = vmatpush1.bf16.msra.mxu0 %v981
      %1042 = vmatprep.subr.bf16.mxu0 0
      %1043 = vmatpush1.bf16.msra.mxu0 %v980
      %1044 = vmatprep.subr.bf16.mxu0 0
      %1045 = vmatpush2.bf16.msra.mxu0 %v995
      %1046 = vmatprep.subr.bf16.mxu0 0
      %1047 = vmatpush2.bf16.msra.mxu0 %v994
      %1048 = vmatprep.subr.bf16.mxu0 0
      %1049 = vmatpush2.bf16.msra.mxu0 %v993
      %1050 = vmatprep.subr.bf16.mxu0 0
      %1051 = vmatpush2.bf16.msra.mxu0 %v992
      %1052 = vmatprep.subr.bf16.mxu0 0
      %1053 = vmatpush2.bf16.msra.mxu0 %v991
      %1054 = vmatprep.subr.bf16.mxu0 0
      %1055 = vmatpush2.bf16.msra.mxu0 %v990
      %1056 = vmatprep.subr.bf16.mxu0 0
      %1057 = vmatpush2.bf16.msra.mxu0 %v989
      %1058 = vmatprep.subr.bf16.mxu0 0
      %1059 = vmatpush2.bf16.msra.mxu0 %v988
      %1060 = vmatprep.mubr.bf16.mxu0 %v466
      %1061 = vmatmul.mubr.bf16.gmra.mxu0 %v465
      %v1062 = vpop.f32.mrf.mxu0
      %v1063 = vadd.f32 %v854, %v1062
      %v1064 = vpop.f32.mrf.mxu0
      %v1065 = vpop.f32.mrf.mxu0
      %v1066 = vadd.f32 %v857, %v1065
      %v1067 = vpop.f32.mrf.mxu0
      %1068 = vmatprep.mubr.bf16.mxu0 %v469
      %1069 = vmatmul.mubr.bf16.gmra.mxu0 %v468
      %v1070 = vpop.f32.mrf.mxu0
      %v1071 = vadd.f32 %v862, %v1070
      %v1072 = vpop.f32.mrf.mxu0
      %v1073 = vpop.f32.mrf.mxu0
      %v1074 = vadd.f32 %v865, %v1073
      %v1075 = vpop.f32.mrf.mxu0
      %1076 = vmatprep.mubr.bf16.mxu0 %v472
      %1077 = vmatmul.mubr.bf16.gmra.mxu0 %v471
      %v1078 = vpop.f32.mrf.mxu0
      %v1079 = vadd.f32 %v870, %v1078
      %v1080 = vpop.f32.mrf.mxu0
      %v1081 = vpop.f32.mrf.mxu0
      %v1082 = vadd.f32 %v873, %v1081
      %v1083 = vpop.f32.mrf.mxu0
      %1084 = vmatprep.mubr.bf16.mxu0 %v475
      %1085 = vmatmul.mubr.bf16.gmra.mxu0 %v474
      %v1086 = vpop.f32.mrf.mxu0
      %v1087 = vadd.f32 %v878, %v1086
      %v1088 = vpop.f32.mrf.mxu0
      %v1089 = vpop.f32.mrf.mxu0
      %v1090 = vadd.f32 %v881, %v1089
      %v1091 = vpop.f32.mrf.mxu0
      %1092 = vdwg.mxu0
      %1093 = vmatprep.subr.bf16.mxu0 0
      %1094 = vmatpush1.bf16.msra.mxu0 %v1003
      %1095 = vmatprep.subr.bf16.mxu0 0
      %1096 = vmatpush1.bf16.msra.mxu0 %v1002
      %1097 = vmatprep.subr.bf16.mxu0 0
      %1098 = vmatpush1.bf16.msra.mxu0 %v1001
      %1099 = vmatprep.subr.bf16.mxu0 0
      %1100 = vmatpush1.bf16.msra.mxu0 %v1000
      %1101 = vmatprep.subr.bf16.mxu0 0
      %1102 = vmatpush1.bf16.msra.mxu0 %v999
      %1103 = vmatprep.subr.bf16.mxu0 0
      %1104 = vmatpush1.bf16.msra.mxu0 %v998
      %1105 = vmatprep.subr.bf16.mxu0 0
      %1106 = vmatpush1.bf16.msra.mxu0 %v997
      %1107 = vmatprep.subr.bf16.mxu0 0
      %1108 = vmatpush1.bf16.msra.mxu0 %v996
      %1109 = vmatprep.subr.bf16.mxu0 0
      %1110 = vmatpush2.bf16.msra.mxu0 0
      %1111 = vmatprep.subr.bf16.mxu0 0
      %1112 = vmatpush2.bf16.msra.mxu0 0
      %1113 = vmatprep.subr.bf16.mxu0 0
      %1114 = vmatpush2.bf16.msra.mxu0 0
      %1115 = vmatprep.subr.bf16.mxu0 0
      %1116 = vmatpush2.bf16.msra.mxu0 0
      %1117 = vmatprep.subr.bf16.mxu0 0
      %1118 = vmatpush2.bf16.msra.mxu0 0
      %1119 = vmatprep.subr.bf16.mxu0 0
      %1120 = vmatpush2.bf16.msra.mxu0 0
      %1121 = vmatprep.subr.bf16.mxu0 0
      %1122 = vmatpush2.bf16.msra.mxu0 0
      %1123 = vmatprep.subr.bf16.mxu0 0
      %1124 = vmatpush2.bf16.msra.mxu0 0
      %1125 = vmatprep.mubr.bf16.mxu0 0
      %1126 = vmatmul.mubr.bf16.gmra.mxu0 %v467
      %v1127 = vpop.f32.mrf.mxu0
      %v1128 = vadd.f32 %v1063, %v1127
      %v1129 = vpop.f32.mrf.mxu0
      %v1130 = vpop.f32.mrf.mxu0
      %v1131 = vadd.f32 %v1066, %v1130
      %v1132 = vpop.f32.mrf.mxu0
      %1133 = vmatprep.mubr.bf16.mxu0 0
      %1134 = vmatmul.mubr.bf16.gmra.mxu0 %v470
      %v1135 = vpop.f32.mrf.mxu0
      %v1136 = vadd.f32 %v1071, %v1135
      %v1137 = vpop.f32.mrf.mxu0
      %v1138 = vpop.f32.mrf.mxu0
      %v1139 = vadd.f32 %v1074, %v1138
      %v1140 = vpop.f32.mrf.mxu0
      %1141 = vmatprep.mubr.bf16.mxu0 0
      %1142 = vmatmul.mubr.bf16.gmra.mxu0 %v473
      %v1143 = vpop.f32.mrf.mxu0
      %v1144 = vadd.f32 %v1079, %v1143
      %v1145 = vpop.f32.mrf.mxu0
      %v1146 = vpop.f32.mrf.mxu0
      %v1147 = vadd.f32 %v1082, %v1146
      %v1148 = vpop.f32.mrf.mxu0
      %1149 = vmatprep.mubr.bf16.mxu0 0
      %1150 = vmatmul.mubr.bf16.gmra.mxu0 %v476
      %v1151 = vpop.f32.mrf.mxu0
      %v1152 = vadd.f32 %v1087, %v1151
      %v1153 = vpop.f32.mrf.mxu0
      %v1154 = vpop.f32.mrf.mxu0
      %v1155 = vadd.f32 %v1090, %v1154
      %v1156 = vpop.f32.mrf.mxu0
      %1157 = vdwg.mxu0
      %s1158 = scalar_lea.vmem [#allocation2], 48
      %v1159 = vld [vmem:[%s1158 + $0x7] sm:$0xff]
      %v1160 = vld [vmem:[%s1158 + $0x1f] sm:$0xff]
      %v1161 = vld [vmem:[%s1158 + $0x37] sm:$0xff]
      %v1162 = vld [vmem:[%s1158 + $0x4f] sm:$0xff]
      %v1163 = vld [vmem:[%s1158 + $0x67] sm:$0xff]
      %v1164 = vld [vmem:[%s1158 + $0x7f] sm:$0xff]
      %v1165 = vld [vmem:[%s1158 + $0x97] sm:$0xff]
      %v1166 = vld [vmem:[%s1158 + $0xaf] sm:$0xff]
      %v1167 = vld [vmem:[%s1158 + $0x8] sm:$0xff]
      %v1168 = vld [vmem:[%s1158 + $0x20] sm:$0xff]
      %v1169 = vld [vmem:[%s1158 + $0x38] sm:$0xff]
      %v1170 = vld [vmem:[%s1158 + $0x50] sm:$0xff]
      %v1171 = vld [vmem:[%s1158 + $0x68] sm:$0xff]
      %v1172 = vld [vmem:[%s1158 + $0x80] sm:$0xff]
      %v1173 = vld [vmem:[%s1158 + $0x98] sm:$0xff]
      %v1174 = vld [vmem:[%s1158 + $0xb0] sm:$0xff]
      %v1175 = vld [vmem:[%s1158 + $0x9] sm:$0xff]
      %v1176 = vld [vmem:[%s1158 + $0x21] sm:$0xff]
      %v1177 = vld [vmem:[%s1158 + $0x39] sm:$0xff]
      %v1178 = vld [vmem:[%s1158 + $0x51] sm:$0xff]
      %v1179 = vld [vmem:[%s1158 + $0x69] sm:$0xff]
      %v1180 = vld [vmem:[%s1158 + $0x81] sm:$0xff]
      %v1181 = vld [vmem:[%s1158 + $0x99] sm:$0xff]
      %v1182 = vld [vmem:[%s1158 + $0xb1] sm:$0xff]
      %v1183 = vpack.c.bf16 %v1160, %v1159
      %v1184 = vpack.c.bf16 %v1168, %v1167
      %v1185 = vpack.c.bf16 %v1176, %v1175
      %v1186 = vpack.c.bf16 %v1162, %v1161
      %v1187 = vpack.c.bf16 %v1170, %v1169
      %v1188 = vpack.c.bf16 %v1178, %v1177
      %v1189 = vpack.c.bf16 %v1164, %v1163
      %v1190 = vpack.c.bf16 %v1172, %v1171
      %v1191 = vpack.c.bf16 %v1180, %v1179
      %v1192 = vpack.c.bf16 %v1166, %v1165
      %v1193 = vpack.c.bf16 %v1174, %v1173
      %v1194 = vpack.c.bf16 %v1182, %v1181
      %s1195 = scalar_lea.vmem %s3, 384
      %v1196 = vld [vmem:[%s1195] sm:$0xf]
      %v1197 = vld [vmem:[%s1195 + $0x4] sm:$0xf]
      %v1198 = vld [vmem:[%s1195 + $0x8] sm:$0xf]
      %v1199 = vld [vmem:[%s1195 + $0xc] sm:$0xf]
      %v1200 = vld [vmem:[%s1195 + $0x10] sm:$0xf]
      %v1201 = vld [vmem:[%s1195 + $0x14] sm:$0xf]
      %v1202 = vld [vmem:[%s1195 + $0x18] sm:$0xf]
      %v1203 = vld [vmem:[%s1195 + $0x1c] sm:$0xf]
      %v1204 = vld [vmem:[%s1195 + $0x20] sm:$0xf]
      %v1205 = vld [vmem:[%s1195 + $0x24] sm:$0xf]
      %v1206 = vld [vmem:[%s1195 + $0x28] sm:$0xf]
      %v1207 = vld [vmem:[%s1195 + $0x2c] sm:$0xf]
      %v1208 = vld [vmem:[%s1195 + $0x30] sm:$0xf]
      %v1209 = vld [vmem:[%s1195 + $0x34] sm:$0xf]
      %v1210 = vld [vmem:[%s1195 + $0x38] sm:$0xf]
      %v1211 = vld [vmem:[%s1195 + $0x3c] sm:$0xf]
      %v1212 = vld [vmem:[%s1195 + $0x40] sm:$0xf]
      %v1213 = vld [vmem:[%s1195 + $0x44] sm:$0xf]
      %v1214 = vld [vmem:[%s1195 + $0x48] sm:$0xf]
      %v1215 = vld [vmem:[%s1195 + $0x4c] sm:$0xf]
      %v1216 = vld [vmem:[%s1195 + $0x50] sm:$0xf]
      %v1217 = vld [vmem:[%s1195 + $0x54] sm:$0xf]
      %v1218 = vld [vmem:[%s1195 + $0x58] sm:$0xf]
      %v1219 = vld [vmem:[%s1195 + $0x5c] sm:$0xf]
      %v1220 = vld [vmem:[%s1195 + $0x60] sm:$0xf]
      %v1221 = vld [vmem:[%s1195 + $0x64] sm:$0xf]
      %v1222 = vld [vmem:[%s1195 + $0x68] sm:$0xf]
      %v1223 = vld [vmem:[%s1195 + $0x6c] sm:$0xf]
      %v1224 = vld [vmem:[%s1195 + $0x70] sm:$0xf]
      %v1225 = vld [vmem:[%s1195 + $0x74] sm:$0xf]
      %v1226 = vld [vmem:[%s1195 + $0x78] sm:$0xf]
      %v1227 = vld [vmem:[%s1195 + $0x7c] sm:$0xf]
      %v1228 = vld [vmem:[%s1195 + $0x80] sm:$0xf]
      %v1229 = vld [vmem:[%s1195 + $0x84] sm:$0xf]
      %v1230 = vld [vmem:[%s1195 + $0x88] sm:$0xf]
      %v1231 = vld [vmem:[%s1195 + $0x8c] sm:$0xf]
      %v1232 = vld [vmem:[%s1195 + $0x90] sm:$0xf]
      %v1233 = vld [vmem:[%s1195 + $0x94] sm:$0xf]
      %v1234 = vld [vmem:[%s1195 + $0x98] sm:$0xf]
      %v1235 = vld [vmem:[%s1195 + $0x9c] sm:$0xf]
      %v1236 = vld [vmem:[%s1195 + $0xa0] sm:$0xf]
      %v1237 = vld [vmem:[%s1195 + $0xa4] sm:$0xf]
      %v1238 = vld [vmem:[%s1195 + $0xa8] sm:$0xf]
      %v1239 = vld [vmem:[%s1195 + $0xac] sm:$0xf]
      %v1240 = vld [vmem:[%s1195 + $0xb0] sm:$0xf]
      %v1241 = vld [vmem:[%s1195 + $0xb4] sm:$0xf]
      %v1242 = vld [vmem:[%s1195 + $0xb8] sm:$0xf]
      %v1243 = vld [vmem:[%s1195 + $0xbc] sm:$0xf]
      %v1292 = vunpack.c.l.b16 %v1196
      %v1293 = vunpack.c.l.b16 %v1197
      %v1294 = vunpack.c.l.b16 %v1198
      %v1295 = vunpack.c.l.b16 %v1199
      %v1296 = vunpack.c.l.b16 %v1200
      %v1297 = vunpack.c.l.b16 %v1201
      %v1298 = vunpack.c.l.b16 %v1202
      %v1299 = vunpack.c.l.b16 %v1203
      %v1300 = vunpack.c.l.b16 %v1204
      %v1301 = vunpack.c.l.b16 %v1205
      %v1302 = vunpack.c.l.b16 %v1206
      %v1303 = vunpack.c.l.b16 %v1207
      %v1304 = vunpack.c.l.b16 %v1208
      %v1305 = vunpack.c.l.b16 %v1209
      %v1306 = vunpack.c.l.b16 %v1210
      %v1307 = vunpack.c.l.b16 %v1211
      %v1308 = vunpack.c.l.b16 %v1212
      %v1309 = vunpack.c.l.b16 %v1213
      %v1310 = vunpack.c.l.b16 %v1214
      %v1311 = vunpack.c.l.b16 %v1215
      %v1312 = vunpack.c.l.b16 %v1216
      %v1313 = vunpack.c.l.b16 %v1217
      %v1314 = vunpack.c.l.b16 %v1218
      %v1315 = vunpack.c.l.b16 %v1219
      %v1316 = vunpack.c.l.b16 %v1220
      %v1317 = vunpack.c.l.b16 %v1221
      %v1318 = vunpack.c.l.b16 %v1222
      %v1319 = vunpack.c.l.b16 %v1223
      %v1320 = vunpack.c.l.b16 %v1224
      %v1321 = vunpack.c.l.b16 %v1225
      %v1322 = vunpack.c.l.b16 %v1226
      %v1323 = vunpack.c.l.b16 %v1227
      %v1324 = vunpack.c.l.b16 %v1228
      %v1325 = vunpack.c.l.b16 %v1229
      %v1326 = vunpack.c.l.b16 %v1230
      %v1327 = vunpack.c.l.b16 %v1231
      %v1328 = vunpack.c.l.b16 %v1232
      %v1329 = vunpack.c.l.b16 %v1233
      %v1330 = vunpack.c.l.b16 %v1234
      %v1331 = vunpack.c.l.b16 %v1235
      %v1332 = vunpack.c.l.b16 %v1236
      %v1333 = vunpack.c.l.b16 %v1237
      %v1334 = vunpack.c.l.b16 %v1238
      %v1335 = vunpack.c.l.b16 %v1239
      %v1336 = vunpack.c.l.b16 %v1240
      %v1337 = vunpack.c.l.b16 %v1241
      %v1338 = vunpack.c.l.b16 %v1242
      %v1339 = vunpack.c.l.b16 %v1243
      %v1340 = vpack.c.b16 %v1293, %v1292
      %v1341 = vpack.c.b16 %v1295, %v1294
      %v1342 = vpack.c.b16 %v1297, %v1296
      %v1343 = vpack.c.b16 %v1299, %v1298
      %v1344 = vpack.c.b16 %v1301, %v1300
      %v1345 = vpack.c.b16 %v1303, %v1302
      %v1346 = vpack.c.b16 %v1305, %v1304
      %v1347 = vpack.c.b16 %v1307, %v1306
      %v1348 = vpack.c.b16 %v1309, %v1308
      %v1349 = vpack.c.b16 %v1311, %v1310
      %v1350 = vpack.c.b16 %v1313, %v1312
      %v1351 = vpack.c.b16 %v1315, %v1314
      %v1352 = vpack.c.b16 %v1317, %v1316
      %v1353 = vpack.c.b16 %v1319, %v1318
      %v1354 = vpack.c.b16 %v1321, %v1320
      %v1355 = vpack.c.b16 %v1323, %v1322
      %v1356 = vpack.c.b16 %v1325, %v1324
      %v1357 = vpack.c.b16 %v1327, %v1326
      %v1358 = vpack.c.b16 %v1329, %v1328
      %v1359 = vpack.c.b16 %v1331, %v1330
      %v1360 = vpack.c.b16 %v1333, %v1332
      %v1361 = vpack.c.b16 %v1335, %v1334
      %v1362 = vpack.c.b16 %v1337, %v1336
      %v1363 = vpack.c.b16 %v1339, %v1338
      %1388 = vmatprep.subr.bf16.mxu0 0
      %1389 = vmatpush1.bf16.msra.mxu0 %v1347
      %1390 = vmatprep.subr.bf16.mxu0 0
      %1391 = vmatpush1.bf16.msra.mxu0 %v1346
      %1392 = vmatprep.subr.bf16.mxu0 0
      %1393 = vmatpush1.bf16.msra.mxu0 %v1345
      %1394 = vmatprep.subr.bf16.mxu0 0
      %1395 = vmatpush1.bf16.msra.mxu0 %v1344
      %1396 = vmatprep.subr.bf16.mxu0 0
      %1397 = vmatpush1.bf16.msra.mxu0 %v1343
      %1398 = vmatprep.subr.bf16.mxu0 0
      %1399 = vmatpush1.bf16.msra.mxu0 %v1342
      %1400 = vmatprep.subr.bf16.mxu0 0
      %1401 = vmatpush1.bf16.msra.mxu0 %v1341
      %1402 = vmatprep.subr.bf16.mxu0 0
      %1403 = vmatpush1.bf16.msra.mxu0 %v1340
      %1404 = vmatprep.subr.bf16.mxu0 0
      %1405 = vmatpush2.bf16.msra.mxu0 %v1355
      %1406 = vmatprep.subr.bf16.mxu0 0
      %1407 = vmatpush2.bf16.msra.mxu0 %v1354
      %1408 = vmatprep.subr.bf16.mxu0 0
      %1409 = vmatpush2.bf16.msra.mxu0 %v1353
      %1410 = vmatprep.subr.bf16.mxu0 0
      %1411 = vmatpush2.bf16.msra.mxu0 %v1352
      %1412 = vmatprep.subr.bf16.mxu0 0
      %1413 = vmatpush2.bf16.msra.mxu0 %v1351
      %1414 = vmatprep.subr.bf16.mxu0 0
      %1415 = vmatpush2.bf16.msra.mxu0 %v1350
      %1416 = vmatprep.subr.bf16.mxu0 0
      %1417 = vmatpush2.bf16.msra.mxu0 %v1349
      %1418 = vmatprep.subr.bf16.mxu0 0
      %1419 = vmatpush2.bf16.msra.mxu0 %v1348
      %1420 = vmatprep.mubr.bf16.mxu0 %v1184
      %1421 = vmatmul.mubr.bf16.gmra.mxu0 %v1183
      %v1422 = vpop.f32.mrf.mxu0
      %v1423 = vadd.f32 0.0, %v1422
      %v1424 = vpop.f32.mrf.mxu0
      %v1425 = vpop.f32.mrf.mxu0
      %v1426 = vadd.f32 0.0, %v1425
      %v1427 = vpop.f32.mrf.mxu0
      %1428 = vmatprep.mubr.bf16.mxu0 %v1187
      %1429 = vmatmul.mubr.bf16.gmra.mxu0 %v1186
      %v1430 = vpop.f32.mrf.mxu0
      %v1431 = vadd.f32 0.0, %v1430
      %v1432 = vpop.f32.mrf.mxu0
      %v1433 = vpop.f32.mrf.mxu0
      %v1434 = vadd.f32 0.0, %v1433
      %v1435 = vpop.f32.mrf.mxu0
      %1436 = vmatprep.mubr.bf16.mxu0 %v1190
      %1437 = vmatmul.mubr.bf16.gmra.mxu0 %v1189
      %v1438 = vpop.f32.mrf.mxu0
      %v1439 = vadd.f32 0.0, %v1438
      %v1440 = vpop.f32.mrf.mxu0
      %v1441 = vpop.f32.mrf.mxu0
      %v1442 = vadd.f32 0.0, %v1441
      %v1443 = vpop.f32.mrf.mxu0
      %1444 = vmatprep.mubr.bf16.mxu0 %v1193
      %1445 = vmatmul.mubr.bf16.gmra.mxu0 %v1192
      %v1446 = vpop.f32.mrf.mxu0
      %v1447 = vadd.f32 0.0, %v1446
      %v1448 = vpop.f32.mrf.mxu0
      %v1449 = vpop.f32.mrf.mxu0
      %v1450 = vadd.f32 0.0, %v1449
      %v1451 = vpop.f32.mrf.mxu0
      %1452 = vdwg.mxu0
      %1453 = vmatprep.subr.bf16.mxu0 0
      %1454 = vmatpush1.bf16.msra.mxu0 %v1363
      %1455 = vmatprep.subr.bf16.mxu0 0
      %1456 = vmatpush1.bf16.msra.mxu0 %v1362
      %1457 = vmatprep.subr.bf16.mxu0 0
      %1458 = vmatpush1.bf16.msra.mxu0 %v1361
      %1459 = vmatprep.subr.bf16.mxu0 0
      %1460 = vmatpush1.bf16.msra.mxu0 %v1360
      %1461 = vmatprep.subr.bf16.mxu0 0
      %1462 = vmatpush1.bf16.msra.mxu0 %v1359
      %1463 = vmatprep.subr.bf16.mxu0 0
      %1464 = vmatpush1.bf16.msra.mxu0 %v1358
      %1465 = vmatprep.subr.bf16.mxu0 0
      %1466 = vmatpush1.bf16.msra.mxu0 %v1357
      %1467 = vmatprep.subr.bf16.mxu0 0
      %1468 = vmatpush1.bf16.msra.mxu0 %v1356
      %1469 = vmatprep.subr.bf16.mxu0 0
      %1470 = vmatpush2.bf16.msra.mxu0 0
      %1471 = vmatprep.subr.bf16.mxu0 0
      %1472 = vmatpush2.bf16.msra.mxu0 0
      %1473 = vmatprep.subr.bf16.mxu0 0
      %1474 = vmatpush2.bf16.msra.mxu0 0
      %1475 = vmatprep.subr.bf16.mxu0 0
      %1476 = vmatpush2.bf16.msra.mxu0 0
      %1477 = vmatprep.subr.bf16.mxu0 0
      %1478 = vmatpush2.bf16.msra.mxu0 0
      %1479 = vmatprep.subr.bf16.mxu0 0
      %1480 = vmatpush2.bf16.msra.mxu0 0
      %1481 = vmatprep.subr.bf16.mxu0 0
      %1482 = vmatpush2.bf16.msra.mxu0 0
      %1483 = vmatprep.subr.bf16.mxu0 0
      %1484 = vmatpush2.bf16.msra.mxu0 0
      %1485 = vmatprep.mubr.bf16.mxu0 0
      %1486 = vmatmul.mubr.bf16.gmra.mxu0 %v1185
      %v1487 = vpop.f32.mrf.mxu0
      %v1488 = vadd.f32 %v1423, %v1487
      %v1489 = vpop.f32.mrf.mxu0
      %v1490 = vpop.f32.mrf.mxu0
      %v1491 = vadd.f32 %v1426, %v1490
      %v1492 = vpop.f32.mrf.mxu0
      %1493 = vmatprep.mubr.bf16.mxu0 0
      %1494 = vmatmul.mubr.bf16.gmra.mxu0 %v1188
      %v1495 = vpop.f32.mrf.mxu0
      %v1496 = vadd.f32 %v1431, %v1495
      %v1497 = vpop.f32.mrf.mxu0
      %v1498 = vpop.f32.mrf.mxu0
      %v1499 = vadd.f32 %v1434, %v1498
      %v1500 = vpop.f32.mrf.mxu0
      %1501 = vmatprep.mubr.bf16.mxu0 0
      %1502 = vmatmul.mubr.bf16.gmra.mxu0 %v1191
      %v1503 = vpop.f32.mrf.mxu0
      %v1504 = vadd.f32 %v1439, %v1503
      %v1505 = vpop.f32.mrf.mxu0
      %v1506 = vpop.f32.mrf.mxu0
      %v1507 = vadd.f32 %v1442, %v1506
      %v1508 = vpop.f32.mrf.mxu0
      %1509 = vmatprep.mubr.bf16.mxu0 0
      %1510 = vmatmul.mubr.bf16.gmra.mxu0 %v1194
      %v1511 = vpop.f32.mrf.mxu0
      %v1512 = vadd.f32 %v1447, %v1511
      %v1513 = vpop.f32.mrf.mxu0
      %v1514 = vpop.f32.mrf.mxu0
      %v1515 = vadd.f32 %v1450, %v1514
      %v1516 = vpop.f32.mrf.mxu0
      %1517 = vdwg.mxu0
      %v1518 = vadd.f32 %v1128, %v1488
      %v1519 = vadd.f32 %v1131, %v1491
      %v1520 = vadd.f32 %v1136, %v1496
      %v1521 = vadd.f32 %v1139, %v1499
      %v1522 = vadd.f32 %v1144, %v1504
      %v1523 = vadd.f32 %v1147, %v1507
      %v1524 = vadd.f32 %v1152, %v1512
      %v1525 = vadd.f32 %v1155, %v1515
      %v1526 = vld [vmem:[%s4] sm:$0x1]
      %v1528 = vlaneseq
      %v1529 = vshrl.u32 %v1528, 7
      %v1530 = vsub.s32 0, %v1529
      %v1531 = vrot.slane %v1526, %v1530
      %v1533 = vadd.f32 %v1518, %v1531
      %v1534 = vadd.f32 %v1519, %v1531
      %v1535 = vadd.f32 %v1520, %v1531
      %v1536 = vadd.f32 %v1521, %v1531
      %v1537 = vadd.f32 %v1522, %v1531
      %v1538 = vadd.f32 %v1523, %v1531
      %v1539 = vadd.f32 %v1524, %v1531
      %v1540 = vadd.f32 %v1525, %v1531
      %v1541 = vmax.f32 %v1533, 0.0
      %v1542 = vmax.f32 %v1534, 0.0
      %v1543 = vmax.f32 %v1535, 0.0
      %v1544 = vmax.f32 %v1536, 0.0
      %v1545 = vmax.f32 %v1537, 0.0
      %v1546 = vmax.f32 %v1538, 0.0
      %v1547 = vmax.f32 %v1539, 0.0
      %v1548 = vmax.f32 %v1540, 0.0
      %v1549 = vpack.c.bf16 %v1541, %v1541
      %v1550 = vpack.c.bf16 %v1542, %v1542
      %v1551 = vpack.c.bf16 %v1543, %v1543
      %v1552 = vpack.c.bf16 %v1544, %v1544
      %v1553 = vpack.c.bf16 %v1545, %v1545
      %v1554 = vpack.c.bf16 %v1546, %v1546
      %v1555 = vpack.c.bf16 %v1547, %v1547
      %v1556 = vpack.c.bf16 %v1548, %v1548
      %1557 = vst [vmem:[%s380] sm:$0xf] %v1549
      %1558 = vst [vmem:[%s380 + $0x4] sm:$0xf] %v1550
      %1559 = vst [vmem:[%s380 + $0x8] sm:$0xf] %v1551
      %1560 = vst [vmem:[%s380 + $0xc] sm:$0xf] %v1552
      %1561 = vst [vmem:[%s380 + $0x10] sm:$0xf] %v1553
      %1562 = vst [vmem:[%s380 + $0x14] sm:$0xf] %v1554
      %1563 = vst [vmem:[%s380 + $0x18] sm:$0xf] %v1555
      %1564 = vst [vmem:[%s380 + $0x1c] sm:$0xf] %v1556
      %s1565 = smul.u32 8, %s21
      %p1566 = scmp.lt.s32.totalorder %s20, 1
      %s1567 = scalar_select %p1566, %s20, 1
      %p1568 = scmp.lt.s32.totalorder %s1565, 7
      %s1569 = scalar_select %p1568, %s1565, 7
      %s1570 = smul.addr %s1567, 8
      %s1571 = sadd.s32 %s1569, %s1570
      %s1572 = smul.addr %s1571, 4
      %s1573 = scalar_lea.vmem %s5, %s1572
      // Predicated region
      $region41: #{fwd.10} parent=39 // pred_check
        %p1574 = pneg %p190
      $region42: #{fwd.10} parent=39 // pred_check_branch
        %1576 = sbr.rel (%p1574) target = $region44
      $region43: #{fwd.10} parent=39 // pred_region
        %s1577 = smul.u32 8, %s21
      $region44: #{fwd.10} parent=39 // pred_fallthru
        _
    $region40: #{fwd.10} parent=5 // pred_fallthru
      _
    %p1578 = scmp.le.s32.totalorder 2, %s11
    // Predicated region
    $region45: #{fwd.10} parent=5 // pred_check
      %p1579 = pneg %p1578
    $region46: #{fwd.10} parent=5 // pred_check_branch
      %1581 = sbr.rel (%p1579) target = $region48
    $region47: #{fwd.10} parent=5 // pred_region
      %s1582 = ssub.s32 %s11, 2
      // Predicated region
      $region49: #{fwd.10} parent=47 // pred_check
        %p1583 = pneg %p196
      $region50: #{fwd.10} parent=47 // pred_check_branch
        %1585 = sbr.rel (%p1583) target = $region52
      $region51: #{fwd.10} parent=47 // pred_region
        %s1586 = smul.u32 8, %s23
        %p1587 = scmp.lt.s32.totalorder %s22, 1
        %s1588 = scalar_select %p1587, %s22, 1
        %p1589 = scmp.lt.s32.totalorder %s1586, 7
        %s1590 = scalar_select %p1589, %s1586, 7
        %s1591 = smul.addr %s1588, 8
        %s1592 = sadd.s32 %s1590, %s1591
        %s1593 = smul.addr %s1592, 4
        %s1594 = scalar_lea.vmem %s5, %s1593
      $region52: #{fwd.10} parent=47 // pred_fallthru
        _
    $region48: #{fwd.10} parent=5 // pred_fallthru
      _
  $region6: #{fwd.10} parent=0 // loop_footer
    %s15 = sadd.s32 1, %s11
  $region7: #{fwd.10} parent=0 // loop_footer_branch
    %10 = sbr.rel target = $region3
  $region8: #{fwd.10} parent=0 // loop_exit
    _

</llo_original>
